<compile_context>
chip_gen: v5e
topology: v5e:2x2
jax: 0.10.0
libtpu: 0.0.40
codegen_flags: <defaults>
</compile_context>

<pallas_src>
import functools

import jax
import jax.numpy as jnp
from jax.experimental import pallas as pl
from jax.experimental.pallas import tpu as pltpu


def _round_up(x, m):
    return pl.cdiv(x, m) * m


# ----------------------------------------------------------------------------
# Pallas kernels
# ----------------------------------------------------------------------------
def gemm_bias_relu_kernel(x_ref, w_ref, b_ref, o_ref):
    """o = relu(x @ w + b); bf16 MXU inputs, f32 accumulate/epilogue, lane-dense output."""
    acc = jnp.dot(x_ref[...], w_ref[...], preferred_element_type=jnp.float32)
    o_ref[...] = jnp.maximum(acc + b_ref[...], 0.0).astype(o_ref.dtype)


def fc_stack_kernel(x_ref, w1_ref, b1_ref, w2_ref, b2_ref, shift_ref, w3_ref, b3_ref, o_ref):
    """Fused fc1 -> ReLU -> BN -> fc2 -> ReLU -> BN -> fc3 (eval mode).

    BN scale is pre-folded into the weights/bias (valid for scale > 0), so only "+ shift"
    remains.  All operands are whole-array VMEM resident; three back-to-back MXU dots with
    no HBM round trips of the (tiny-M, 128) activations between layers.
    """
    h = jnp.dot(x_ref[...], w1_ref[...], preferred_element_type=jnp.float32)
    h = jnp.maximum(h + b1_ref[...], 0.0) + shift_ref[...]
    h = jnp.dot(h.astype(w2_ref.dtype), w2_ref[...], preferred_element_type=jnp.float32)
    h = jnp.maximum(h + b2_ref[...], 0.0) + shift_ref[...]
    o = jnp.dot(h.astype(w3_ref.dtype), w3_ref[...], preferred_element_type=jnp.float32)
    o_ref[...] = (o + b3_ref[...]).astype(o_ref.dtype)


# ----------------------------------------------------------------------------
# pallas_call wrappers
# ----------------------------------------------------------------------------
def conv_gemm_relu(patches, w2d, bias):
    """patches: (M, K) f32; w2d: (Kp, Np) bf16; bias: (1, Np) f32.  Kp, Np multiples of 128."""
    M, K = patches.shape
    Kp, Np = w2d.shape
    assert Kp >= K and Kp % 128 == 0 and Np % 128 == 0
    tm = min(512, _round_up(M, 8))          # smallest grid that keeps blocks VMEM-friendly
    Mp = _round_up(M, tm)
    xp = patches.astype(jnp.bfloat16)
    if Mp != M or Kp != K:
        xp = jnp.pad(xp, ((0, Mp - M), (0, Kp - K)))
    out = pl.pallas_call(
        gemm_bias_relu_kernel,
        out_shape=jax.ShapeDtypeStruct((Mp, Np), jnp.float32),
        grid=(Mp // tm,),
        in_specs=[
            pl.BlockSpec((tm, Kp), lambda i: (i, 0)),
            pl.BlockSpec((Kp, Np), lambda i: (0, 0)),
            pl.BlockSpec((1, Np), lambda i: (0, 0)),
        ],
        out_specs=pl.BlockSpec((tm, Np), lambda i: (i, 0)),
        compiler_params=pltpu.CompilerParams(dimension_semantics=("parallel",)),
    )(xp, w2d, bias)
    return out[:M]


def im2col_3d_cl(x):
    """x: (B, D, H, W, C) channels-last -> (B*Do*Ho*Wo, 27*C), K-order (kd, kh, kw, c)."""
    B, D, H, W, C = x.shape
    Do, Ho, Wo = D - 2, H - 2, W - 2
    taps = [x[:, kd:kd + Do, kh:kh + Ho, kw:kw + Wo, :]
            for kd in range(3) for kh in range(3) for kw in range(3)]
    p = jnp.stack(taps, axis=4)                        # (B, Do, Ho, Wo, 27, C)
    return p.reshape(B * Do * Ho * Wo, 27 * C), (Do, Ho, Wo)


def conv3d_relu_cl(x, w2d, bias, out_c):
    """Conv3d(k=3, pad=0) + ReLU on a channels-last activation via an im2col GEMM."""
    # TODO(synk): for production-size volumes, move the 27-tap accumulation inside the
    # Pallas kernel (or use lax.conv) instead of materializing the im2col patches in HBM.
    B = x.shape[0]
    patches, (Do, Ho, Wo) = im2col_3d_cl(x)
    y = conv_gemm_relu(patches, w2d, bias)             # (M, Np) f32, lane-dense
    return y[:, :out_c].reshape(B, Do, Ho, Wo, out_c)


def maxpool_2x2x2_cl(x):
    """MaxPool3d((2,2,2)) on a channels-last activation via pairwise maxima (C on lanes)."""
    x = jnp.maximum(x[:, 0::2], x[:, 1::2])
    x = jnp.maximum(x[:, :, 0::2], x[:, :, 1::2])
    x = jnp.maximum(x[:, :, :, 0::2], x[:, :, :, 1::2])
    return x


# ----------------------------------------------------------------------------
# Parameters (PyTorch layouts) + one-time repacking into Pallas-friendly operands
# ----------------------------------------------------------------------------
def init_params(key, fc1_in, num_classes):
    ks = jax.random.split(key, 10)

    def w(k, shape, fan_in):
        return (jax.random.normal(k, shape, jnp.float32) / jnp.sqrt(fan_in)).astype(jnp.float32)

    return {
        "conv1_w": w(ks[0], (32, 4, 3, 3, 3), 4 * 27),
        "conv1_b": w(ks[1], (32,), 4 * 27),
        "conv2_w": w(ks[2], (64, 32, 3, 3, 3), 32 * 27),
        "conv2_b": w(ks[3], (64,), 32 * 27),
        "fc1_w": w(ks[4], (128, fc1_in), fc1_in),       # PyTorch Linear stores (out, in)
        "fc1_b": w(ks[5], (128,), fc1_in),
        "fc2_w": w(ks[6], (128, 128), 128),
        "fc2_b": w(ks[7], (128,), 128),
        "fc3_w": w(ks[8], (num_classes, 128), 128),
        "fc3_b": w(ks[9], (num_classes,), 128),
        # BatchNorm1d(128) default init / running stats (single module, shared by fc1/fc2)
        "bn_gamma": jnp.ones((128,), jnp.float32),
        "bn_beta": jnp.zeros((128,), jnp.float32),
        "bn_mean": jnp.zeros((128,), jnp.float32),
        "bn_var": jnp.ones((128,), jnp.float32),
    }


def pack_params(params, *, pooled_spatial, num_classes):
    """Repack PyTorch-layout params into padded / bf16 / BN-folded Pallas operands (once)."""
    Dq, Hq, Wq = pooled_spatial
    eps = 1e-5

    def pack_conv(w, b):
        out_c, in_c = w.shape[0], w.shape[1]
        K, N = 27 * in_c, out_c
        Kp, Np = _round_up(K, 128), _round_up(N, 128)
        w2d = jnp.transpose(w, (2, 3, 4, 1, 0)).reshape(K, N)   # rows ordered (kd,kh,kw,c)
        w2d = jnp.pad(w2d, ((0, Kp - K), (0, Np - N))).astype(jnp.bfloat16)
        bp = jnp.pad(b, (0, Np - N)).reshape(1, Np).astype(jnp.float32)
        return w2d, bp

    c1_w, c1_b = pack_conv(params["conv1_w"], params["conv1_b"])
    c2_w, c2_b = pack_conv(params["conv2_w"], params["conv2_b"])

    # BatchNorm1d eval-mode running stats folded to per-feature scale/shift.
    scale = params["bn_gamma"] / jnp.sqrt(params["bn_var"] + eps)
    shift = params["bn_beta"] - params["bn_mean"] * scale
    # relu(z)*scale == relu(z*scale) requires scale > 0 (true for default gamma=1, var>=0).
    # TODO(synk): fall back to post-ReLU scaling in the kernel if trained gamma can be <= 0.

    C = params["conv2_w"].shape[0]
    # fc1 columns: PyTorch flatten order is (c, d, h, w); channels-last flatten is (d, h, w, c).
    w1 = params["fc1_w"].reshape(128, C, Dq, Hq, Wq).transpose(0, 2, 3, 4, 1).reshape(128, -1).T
    K1 = w1.shape[0]
    K1p = _round_up(K1, 128)
    w1 = jnp.pad(w1 * scale[None, :], ((0, K1p - K1), (0, 0))).astype(jnp.bfloat16)
    b1 = (params["fc1_b"] * scale).reshape(1, 128).astype(jnp.float32)

    w2 = (params["fc2_w"].T * scale[None, :]).astype(jnp.bfloat16)
    b2 = (params["fc2_b"] * scale).reshape(1, 128).astype(jnp.float32)

    Nc = num_classes
    Ncp = _round_up(Nc, 128)
    w3 = jnp.pad(params["fc3_w"].T, ((0, 0), (0, Ncp - Nc))).astype(jnp.bfloat16)
    b3 = jnp.pad(params["fc3_b"], (0, Ncp - Nc)).reshape(1, Ncp).astype(jnp.float32)

    return {
        "c1_w": c1_w, "c1_b": c1_b, "c2_w": c2_w, "c2_b": c2_b,
        "w1": w1, "b1": b1, "w2": w2, "b2": b2,
        "shift": shift.reshape(1, 128).astype(jnp.float32),
        "w3": w3, "b3": b3,
    }


# ----------------------------------------------------------------------------
# Forward (Pallas path)
# ----------------------------------------------------------------------------
def cnn_model_2_forward(x, packed, *, num_classes):
    # NCDHW -> channels-last once; the whole conv stack stays channels-last.
    x = jnp.transpose(x, (0, 2, 3, 4, 1))
    h = conv3d_relu_cl(x, packed["c1_w"], packed["c1_b"], out_c=32)   # (B,8,8,8,32)
    h = conv3d_relu_cl(h, packed["c2_w"], packed["c2_b"], out_c=64)   # (B,6,6,6,64)
    h = maxpool_2x2x2_cl(h)                                           # (B,3,3,3,64)

    B = h.shape[0]
    flat = h.reshape(B, -1)                 # (B, 1728) ordered (d,h,w,c); fc1_w cols match
    K1 = flat.shape[1]
    K1p = packed["w1"].shape[0]
    Mp = _round_up(B, 8)                    # 8 sublanes is the hardware minimum (no 128 pad)
    xf = jnp.pad(flat.astype(jnp.bfloat16), ((0, Mp - B), (0, K1p - K1)))

    # TODO(synk): Dropout(p=0.5) is stochastic in train mode; eval-mode identity used here.
    # TODO(synk): for the full-size fc1_in=225792 model the fused FC kernel needs a K-tiled
    # accumulation grid (monolithic (Mp,K1p)/(K1p,128) operands would not fit VMEM).
    out = pl.pallas_call(
        fc_stack_kernel,
        out_shape=jax.ShapeDtypeStruct((Mp, packed["w3"].shape[1]), jnp.float32),
    )(xf, packed["w1"], packed["b1"], packed["w2"], packed["b2"],
      packed["shift"], packed["w3"], packed["b3"])
    return out[:B, :num_classes]


# ----------------------------------------------------------------------------
# Pure-JAX (f32) reference with exact PyTorch semantics, for validation
# ----------------------------------------------------------------------------
def reference_forward(x, params):
    def conv3d(x, w, b):
        y = jax.lax.conv_general_dilated(
            x, w, window_strides=(1, 1, 1), padding="VALID",
            dimension_numbers=("NCDHW", "OIDHW", "NCDHW"))
        return y + b[None, :, None, None, None]

    h = jax.nn.relu(conv3d(x, params["conv1_w"], params["conv1_b"]))
    h = jax.nn.relu(conv3d(h, params["conv2_w"], params["conv2_b"]))
    h = jax.lax.reduce_window(h, -jnp.inf, jax.lax.max,
                              (1, 1, 2, 2, 2), (1, 1, 2, 2, 2), "VALID")
    f = h.reshape(h.shape[0], -1)                       # PyTorch order (c, d, h, w)
    eps = 1e-5
    scale = params["bn_gamma"] / jnp.sqrt(params["bn_var"] + eps)
    shift = params["bn_beta"] - params["bn_mean"] * scale
    z = jax.nn.relu(f @ params["fc1_w"].T + params["fc1_b"]) * scale + shift
    z = jax.nn.relu(z @ params["fc2_w"].T + params["fc2_b"]) * scale + shift
    return z @ params["fc3_w"].T + params["fc3_b"]


if __name__ == "__main__":
    # Small input consistent with the module: NCDHW = (batch=2, channels=4, 10, 10, 10)
    B, C, D, H, W = 2, 4, 10, 10, 10
    num_classes = 10

    key = jax.random.PRNGKey(0)
    kx, kp = jax.random.split(key)
    x = jax.random.normal(kx, (B, C, D, H, W), jnp.float32)

    # conv1: 10->8, conv2: 8->6, pool: 6->3  =>  flattened features = 64*3*3*3 = 1728
    fc1_in = 64 * 3 * 3 * 3
    params = init_params(kp, fc1_in, num_classes)
    packed = pack_params(params, pooled_spatial=(3, 3, 3), num_classes=num_classes)

    fwd = jax.jit(functools.partial(cnn_model_2_forward, num_classes=num_classes))
    out = jax.block_until_ready(fwd(x, packed))
    assert out.shape == (B, num_classes), out.shape

    ref = reference_forward(x, params)
    err = float(jnp.max(jnp.abs(out - ref)))
    assert jnp.allclose(out, ref, atol=3e-2, rtol=3e-2), f"max abs err vs reference: {err}"
    print("KERNEL_OK")
</pallas_src>

<mosaic_0001>
module attributes {stable_mosaic.version = 11 : i64} {
  func.func @gemm_bias_relu_kernel(%arg0: i32, %arg1: memref<512x128xbf16, #tpu.memory_space<vmem>>, %arg2: memref<128x128xbf16, #tpu.memory_space<vmem>>, %arg3: memref<1x128xf32, #tpu.memory_space<vmem>>, %arg4: memref<512x128xf32, #tpu.memory_space<vmem>>) attributes {dimension_semantics = [#tpu.dimension_semantics<parallel>], iteration_bounds = array<i64: 2>, scalar_prefetch = 0 : i64, scratch_operands = 0 : i64, tpu.core_type = #tpu.core_type<tc>, window_params = [{transform_indices = @transform_0, window_bounds = array<i64: 512, 128>}, {pipeline_mode = #tpu.pipeline_mode<synchronous>, transform_indices = @transform_1, window_bounds = array<i64: 128, 128>}, {pipeline_mode = #tpu.pipeline_mode<synchronous>, transform_indices = @transform_2, window_bounds = array<i64: 1, 128>}, {transform_indices = @transform_3, window_bounds = array<i64: 512, 128>}]} {
    %c0 = arith.constant 0 : index
    %c0_0 = arith.constant 0 : index
    %0 = vector.load %arg1[%c0, %c0_0] : memref<512x128xbf16, #tpu.memory_space<vmem>>, vector<512x128xbf16>
    %c0_1 = arith.constant 0 : index
    %c0_2 = arith.constant 0 : index
    %1 = vector.load %arg2[%c0_1, %c0_2] : memref<128x128xbf16, #tpu.memory_space<vmem>>, vector<128x128xbf16>
    %cst = arith.constant dense<0.000000e+00> : vector<512x128xf32>
    %2 = tpu.matmul %0, %1, %cst {dimension_numbers = #tpu.dot_dimension_numbers<[1], [0], [0], [1], [0, 0, 1, 1], [], []>} : vector<512x128xbf16>, vector<128x128xbf16>, vector<512x128xf32> -> vector<512x128xf32>
    %c0_3 = arith.constant 0 : index
    %c0_4 = arith.constant 0 : index
    %3 = vector.load %arg3[%c0_3, %c0_4] : memref<1x128xf32, #tpu.memory_space<vmem>>, vector<1x128xf32>
    %4 = vector.broadcast %3 : vector<1x128xf32> to vector<512x128xf32>
    %5 = arith.addf %2, %4 : vector<512x128xf32>
    %cst_5 = arith.constant 0.000000e+00 : f32
    %6 = vector.broadcast %cst_5 : f32 to vector<512x128xf32>
    %7 = arith.maximumf %5, %6 : vector<512x128xf32>
    %c0_6 = arith.constant 0 : index
    %c0_7 = arith.constant 0 : index
    %8 = vector.load %arg4[%c0_6, %c0_7] : memref<512x128xf32, #tpu.memory_space<vmem>>, vector<512x128xf32>
    tpu.vector_store %arg4[%c0_6, %c0_7], %7 {strides = array<i32>} : memref<512x128xf32, #tpu.memory_space<vmem>>, vector<512x128xf32>,
    return
  }
  func.func @transform_0(%arg0: i32) -> (i32, i32) {
    %c0_i32 = arith.constant 0 : i32
    %c0_i32_0 = arith.constant 0 : i32
    return %arg0, %c0_i32 : i32, i32
  }
  func.func @transform_1(%arg0: i32) -> (i32, i32) {
    %c0_i32 = arith.constant 0 : i32
    %c0_i32_0 = arith.constant 0 : i32
    %c0_i32_1 = arith.constant 0 : i32
    return %c0_i32, %c0_i32_0 : i32, i32
  }
  func.func @transform_2(%arg0: i32) -> (i32, i32) {
    %c0_i32 = arith.constant 0 : i32
    %c0_i32_0 = arith.constant 0 : i32
    %c0_i32_1 = arith.constant 0 : i32
    return %c0_i32, %c0_i32_0 : i32, i32
  }
  func.func @transform_3(%arg0: i32) -> (i32, i32) {
    %c0_i32 = arith.constant 0 : i32
    %c0_i32_0 = arith.constant 0 : i32
    return %arg0, %c0_i32 : i32, i32
  }
}

module attributes {stable_mosaic.version = 11 : i64} {
  func.func @gemm_bias_relu_kernel(%arg0: i32, %arg1: memref<432x896xbf16, #tpu.memory_space<vmem>>, %arg2: memref<896x128xbf16, #tpu.memory_space<vmem>>, %arg3: memref<1x128xf32, #tpu.memory_space<vmem>>, %arg4: memref<432x128xf32, #tpu.memory_space<vmem>>) attributes {dimension_semantics = [#tpu.dimension_semantics<parallel>], iteration_bounds = array<i64: 1>, scalar_prefetch = 0 : i64, scratch_operands = 0 : i64, tpu.core_type = #tpu.core_type<tc>, window_params = [{transform_indices = @transform_0, window_bounds = array<i64: 432, 896>}, {pipeline_mode = #tpu.pipeline_mode<synchronous>, transform_indices = @transform_1, window_bounds = array<i64: 896, 128>}, {pipeline_mode = #tpu.pipeline_mode<synchronous>, transform_indices = @transform_2, window_bounds = array<i64: 1, 128>}, {transform_indices = @transform_3, window_bounds = array<i64: 432, 128>}]} {
    %c0 = arith.constant 0 : index
    %c0_0 = arith.constant 0 : index
    %0 = vector.load %arg1[%c0, %c0_0] : memref<432x896xbf16, #tpu.memory_space<vmem>>, vector<432x896xbf16>
    %c0_1 = arith.constant 0 : index
    %c0_2 = arith.constant 0 : index
    %1 = vector.load %arg2[%c0_1, %c0_2] : memref<896x128xbf16, #tpu.memory_space<vmem>>, vector<896x128xbf16>
    %cst = arith.constant dense<0.000000e+00> : vector<432x128xf32>
    %2 = tpu.matmul %0, %1, %cst {dimension_numbers = #tpu.dot_dimension_numbers<[1], [0], [0], [1], [0, 0, 1, 1], [], []>} : vector<432x896xbf16>, vector<896x128xbf16>, vector<432x128xf32> -> vector<432x128xf32>
    %c0_3 = arith.constant 0 : index
    %c0_4 = arith.constant 0 : index
    %3 = vector.load %arg3[%c0_3, %c0_4] : memref<1x128xf32, #tpu.memory_space<vmem>>, vector<1x128xf32>
    %4 = vector.broadcast %3 : vector<1x128xf32> to vector<432x128xf32>
    %5 = arith.addf %2, %4 : vector<432x128xf32>
    %cst_5 = arith.constant 0.000000e+00 : f32
    %6 = vector.broadcast %cst_5 : f32 to vector<432x128xf32>
    %7 = arith.maximumf %5, %6 : vector<432x128xf32>
    %c0_6 = arith.constant 0 : index
    %c0_7 = arith.constant 0 : index
    %8 = vector.load %arg4[%c0_6, %c0_7] : memref<432x128xf32, #tpu.memory_space<vmem>>, vector<432x128xf32>
    tpu.vector_store %arg4[%c0_6, %c0_7], %7 {strides = array<i32>} : memref<432x128xf32, #tpu.memory_space<vmem>>, vector<432x128xf32>,
    return
  }
  func.func @transform_0(%arg0: i32) -> (i32, i32) {
    %c0_i32 = arith.constant 0 : i32
    %c0_i32_0 = arith.constant 0 : i32
    return %arg0, %c0_i32 : i32, i32
  }
  func.func @transform_1(%arg0: i32) -> (i32, i32) {
    %c0_i32 = arith.constant 0 : i32
    %c0_i32_0 = arith.constant 0 : i32
    %c0_i32_1 = arith.constant 0 : i32
    return %c0_i32, %c0_i32_0 : i32, i32
  }
  func.func @transform_2(%arg0: i32) -> (i32, i32) {
    %c0_i32 = arith.constant 0 : i32
    %c0_i32_0 = arith.constant 0 : i32
    %c0_i32_1 = arith.constant 0 : i32
    return %c0_i32, %c0_i32_0 : i32, i32
  }
  func.func @transform_3(%arg0: i32) -> (i32, i32) {
    %c0_i32 = arith.constant 0 : i32
    %c0_i32_0 = arith.constant 0 : i32
    return %arg0, %c0_i32 : i32, i32
  }
}

module attributes {stable_mosaic.version = 11 : i64} {
  func.func @fc_stack_kernel(%arg0: memref<8x1792xbf16, #tpu.memory_space<vmem>>, %arg1: memref<1792x128xbf16, #tpu.memory_space<vmem>>, %arg2: memref<1x128xf32, #tpu.memory_space<vmem>>, %arg3: memref<128x128xbf16, #tpu.memory_space<vmem>>, %arg4: memref<1x128xf32, #tpu.memory_space<vmem>>, %arg5: memref<1x128xf32, #tpu.memory_space<vmem>>, %arg6: memref<128x128xbf16, #tpu.memory_space<vmem>>, %arg7: memref<1x128xf32, #tpu.memory_space<vmem>>, %arg8: memref<8x128xf32, #tpu.memory_space<vmem>>) attributes {dimension_semantics = [], scalar_prefetch = 0 : i64, scratch_operands = 0 : i64, tpu.core_type = #tpu.core_type<tc>} {
    %c0 = arith.constant 0 : index
    %c0_0 = arith.constant 0 : index
    %0 = vector.load %arg0[%c0, %c0_0] : memref<8x1792xbf16, #tpu.memory_space<vmem>>, vector<8x1792xbf16>
    %c0_1 = arith.constant 0 : index
    %c0_2 = arith.constant 0 : index
    %1 = vector.load %arg1[%c0_1, %c0_2] : memref<1792x128xbf16, #tpu.memory_space<vmem>>, vector<1792x128xbf16>
    %cst = arith.constant dense<0.000000e+00> : vector<8x128xf32>
    %2 = tpu.matmul %0, %1, %cst {dimension_numbers = #tpu.dot_dimension_numbers<[1], [0], [0], [1], [0, 0, 1, 1], [], []>} : vector<8x1792xbf16>, vector<1792x128xbf16>, vector<8x128xf32> -> vector<8x128xf32>
    %c0_3 = arith.constant 0 : index
    %c0_4 = arith.constant 0 : index
    %3 = vector.load %arg2[%c0_3, %c0_4] : memref<1x128xf32, #tpu.memory_space<vmem>>, vector<1x128xf32>
    %4 = vector.broadcast %3 : vector<1x128xf32> to vector<8x128xf32>
    %5 = arith.addf %2, %4 : vector<8x128xf32>
    %cst_5 = arith.constant 0.000000e+00 : f32
    %6 = vector.broadcast %cst_5 : f32 to vector<8x128xf32>
    %7 = arith.maximumf %5, %6 : vector<8x128xf32>
    %c0_6 = arith.constant 0 : index
    %c0_7 = arith.constant 0 : index
    %8 = vector.load %arg5[%c0_6, %c0_7] : memref<1x128xf32, #tpu.memory_space<vmem>>, vector<1x128xf32>
    %9 = vector.broadcast %8 : vector<1x128xf32> to vector<8x128xf32>
    %10 = arith.addf %7, %9 : vector<8x128xf32>
    %11 = arith.truncf %10 : vector<8x128xf32> to vector<8x128xbf16>
    %c0_8 = arith.constant 0 : index
    %c0_9 = arith.constant 0 : index
    %12 = vector.load %arg3[%c0_8, %c0_9] : memref<128x128xbf16, #tpu.memory_space<vmem>>, vector<128x128xbf16>
    %cst_10 = arith.constant dense<0.000000e+00> : vector<8x128xf32>
    %13 = tpu.matmul %11, %12, %cst_10 {dimension_numbers = #tpu.dot_dimension_numbers<[1], [0], [0], [1], [0, 0, 1, 1], [], []>} : vector<8x128xbf16>, vector<128x128xbf16>, vector<8x128xf32> -> vector<8x128xf32>
    %c0_11 = arith.constant 0 : index
    %c0_12 = arith.constant 0 : index
    %14 = vector.load %arg4[%c0_11, %c0_12] : memref<1x128xf32, #tpu.memory_space<vmem>>, vector<1x128xf32>
    %15 = vector.broadcast %14 : vector<1x128xf32> to vector<8x128xf32>
    %16 = arith.addf %13, %15 : vector<8x128xf32>
    %cst_13 = arith.constant 0.000000e+00 : f32
    %17 = vector.broadcast %cst_13 : f32 to vector<8x128xf32>
    %18 = arith.maximumf %16, %17 : vector<8x128xf32>
    %c0_14 = arith.constant 0 : index
    %c0_15 = arith.constant 0 : index
    %19 = vector.load %arg5[%c0_14, %c0_15] : memref<1x128xf32, #tpu.memory_space<vmem>>, vector<1x128xf32>
    %20 = vector.broadcast %19 : vector<1x128xf32> to vector<8x128xf32>
    %21 = arith.addf %18, %20 : vector<8x128xf32>
    %22 = arith.truncf %21 : vector<8x128xf32> to vector<8x128xbf16>
    %c0_16 = arith.constant 0 : index
    %c0_17 = arith.constant 0 : index
    %23 = vector.load %arg6[%c0_16, %c0_17] : memref<128x128xbf16, #tpu.memory_space<vmem>>, vector<128x128xbf16>
    %cst_18 = arith.constant dense<0.000000e+00> : vector<8x128xf32>
    %24 = tpu.matmul %22, %23, %cst_18 {dimension_numbers = #tpu.dot_dimension_numbers<[1], [0], [0], [1], [0, 0, 1, 1], [], []>} : vector<8x128xbf16>, vector<128x128xbf16>, vector<8x128xf32> -> vector<8x128xf32>
    %c0_19 = arith.constant 0 : index
    %c0_20 = arith.constant 0 : index
    %25 = vector.load %arg7[%c0_19, %c0_20] : memref<1x128xf32, #tpu.memory_space<vmem>>, vector<1x128xf32>
    %26 = vector.broadcast %25 : vector<1x128xf32> to vector<8x128xf32>
    %27 = arith.addf %24, %26 : vector<8x128xf32>
    %c0_21 = arith.constant 0 : index
    %c0_22 = arith.constant 0 : index
    %28 = vector.load %arg8[%c0_21, %c0_22] : memref<8x128xf32, #tpu.memory_space<vmem>>, vector<8x128xf32>
    tpu.vector_store %arg8[%c0_21, %c0_22], %27 {strides = array<i32>} : memref<8x128xf32, #tpu.memory_space<vmem>>, vector<8x128xf32>,
    return
  }
}

</mosaic_0001>

<llo_original>
// kernel: cnn_model_2_forward.3
$region0: #{cnn_model_2_forward.3}
  #allocation0 [shape = 'u32[]', space=smem, size = 0x4, offset = 0x4, fixed_abs, tag = 'smem constant byte address 0x4 - core index']
  #allocation1 [shape = 'u32[72,128]{1,0:T(1,128)}', space=vmem, size = 0x9000, scoped, tag = 'internal scratch']
  %s0 = inlined_call_operand.vmem [shape: bf16[1024,128], index: 0, kind: input, shape index: {}]
  %s1 = inlined_call_operand.vmem [shape: bf16[128,128], index: 1, kind: input, shape index: {}]
  %s2 = inlined_call_operand.vmem [shape: f32[1,128], index: 2, kind: input, shape index: {}]
  %s3 = inlined_call_operand.vmem [shape: f32[1024,128], index: 3, kind: output, shape index: {}]
  %s4 = sld [smem:[#allocation0]]
  $region45: #{cnn_model_2_forward.3} parent=0
    _
  %s6 = ssub.s32 1, %s4
  %s7 = scalar_select 0, %s6, %s4
  loop: start=0, step=1, limit=4
  $region2: #{cnn_model_2_forward.3} parent=0 // loop_pre_header
    _
  $region3: #{cnn_model_2_forward.3} parent=0 // loop_header
    %s9 = sphi 0, %s13
    %p10 = scmp.ge.s32.totalorder %s9, 4
    %s19 = sphi 0, %s21
    %s22 = sphi 0, %s19
    %s23 = sphi 0, %s22
    %s39 = sphi 0, %s23
    %s43 = sphi 0, %s43
    %s45 = sphi 0, %s43
    %s46 = sphi 0, %s45
    %s60 = sphi 0, %s46
    %s64 = sphi 0, %s64
    %s66 = sphi 0, %s64
    %s67 = sphi 0, %s66
    %s81 = sphi 0, %s67
    %s87 = sphi 0, %s89
    %s90 = sphi 0, %s87
    %s91 = sphi 0, %s90
    %s107 = sphi 0, %s91
  $region4: #{cnn_model_2_forward.3} parent=0 // loop_header_branch
    %12 = sbr.rel (%p10) target = $region8
  $region5: #{cnn_model_2_forward.3} parent=0 // loop_body
    %s14 = ssub.s32 %s9, 1
    %s15 = ssub.s32 %s9, 2
    %s16 = sadd.s32 %s9, 1
    %s17 = ssub.s32 %s9, %s16
    %p18 = scmp.eq.s32.totalorder %s17, 0
    %s20 = sadd.s32 %s19, 1
    %s21 = scalar_select %p18, %s19, %s20
    %p24 = pneg %p18
    %p25 = scmp.eq.s32.totalorder %s9, 1
    %p26 = por %p24, %p25
    %p27 = scmp.ne.s32.totalorder %s19, %s22
    %p28 = scmp.eq.s32.totalorder %s9, 0
    %p29 = por %p27, %p28
    %p30 = scmp.ne.s32.totalorder %s19, %s22
    %p31 = scmp.eq.s32.totalorder %s14, 1
    %p32 = por %p30, %p31
    %p33 = scmp.ne.s32.totalorder %s22, %s23
    %p34 = scmp.eq.s32.totalorder %s14, 0
    %p35 = por %p33, %p34
    %p36 = scmp.ne.s32.totalorder %s22, %s23
    %p37 = scmp.eq.s32.totalorder %s15, 1
    %p38 = por %p36, %p37
    %p40 = scmp.ne.s32.totalorder %s23, %s39
    %p41 = scmp.eq.s32.totalorder %s15, 0
    %p42 = por %p40, %p41
    %s44 = sadd.s32 %s43, 1
    %p47 = scmp.eq.s32.totalorder %s9, 1
    %p48 = scmp.ne.s32.totalorder %s43, %s45
    %p49 = scmp.eq.s32.totalorder %s9, 0
    %p50 = por %p48, %p49
    %p51 = scmp.ne.s32.totalorder %s43, %s45
    %p52 = scmp.eq.s32.totalorder %s14, 1
    %p53 = por %p51, %p52
    %p54 = scmp.ne.s32.totalorder %s45, %s46
    %p55 = scmp.eq.s32.totalorder %s14, 0
    %p56 = por %p54, %p55
    %p57 = scmp.ne.s32.totalorder %s45, %s46
    %p58 = scmp.eq.s32.totalorder %s15, 1
    %p59 = por %p57, %p58
    %p61 = scmp.ne.s32.totalorder %s46, %s60
    %p62 = scmp.eq.s32.totalorder %s15, 0
    %p63 = por %p61, %p62
    %s65 = sadd.s32 %s64, 1
    %p68 = scmp.eq.s32.totalorder %s9, 1
    %p69 = scmp.ne.s32.totalorder %s64, %s66
    %p70 = scmp.eq.s32.totalorder %s9, 0
    %p71 = por %p69, %p70
    %p72 = scmp.ne.s32.totalorder %s64, %s66
    %p73 = scmp.eq.s32.totalorder %s14, 1
    %p74 = por %p72, %p73
    %p75 = scmp.ne.s32.totalorder %s66, %s67
    %p76 = scmp.eq.s32.totalorder %s14, 0
    %p77 = por %p75, %p76
    %p78 = scmp.ne.s32.totalorder %s66, %s67
    %p79 = scmp.eq.s32.totalorder %s15, 1
    %p80 = por %p78, %p79
    %p82 = scmp.ne.s32.totalorder %s67, %s81
    %p83 = scmp.eq.s32.totalorder %s15, 0
    %p84 = por %p82, %p83
    %s85 = ssub.s32 %s9, %s16
    %p86 = scmp.eq.s32.totalorder %s85, 0
    %s88 = sadd.s32 %s87, 1
    %s89 = scalar_select %p86, %s87, %s88
    %p92 = pneg %p86
    %p93 = scmp.eq.s32.totalorder %s9, 1
    %p94 = por %p92, %p93
    %p95 = scmp.ne.s32.totalorder %s87, %s90
    %p96 = scmp.eq.s32.totalorder %s9, 0
    %p97 = por %p95, %p96
    %p98 = scmp.ne.s32.totalorder %s87, %s90
    %p99 = scmp.eq.s32.totalorder %s14, 1
    %p100 = por %p98, %p99
    %p101 = scmp.ne.s32.totalorder %s90, %s91
    %p102 = scmp.eq.s32.totalorder %s14, 0
    %p103 = por %p101, %p102
    %p104 = scmp.ne.s32.totalorder %s90, %s91
    %p105 = scmp.eq.s32.totalorder %s15, 1
    %p106 = por %p104, %p105
    %p108 = scmp.ne.s32.totalorder %s91, %s107
    %p109 = scmp.eq.s32.totalorder %s15, 0
    %p110 = por %p108, %p109
    %p111 = scmp.le.s32.totalorder 1, %s9
    %p112 = scmp.lt.s32.totalorder %s9, 3
    %p113 = pnand %p111, %p112
    %p114 = pneg %p113
    // Predicated region
    $region9: #{cnn_model_2_forward.3} parent=5 // pred_check
      _
    $region10: #{cnn_model_2_forward.3} parent=5 // pred_check_branch
      %116 = sbr.rel (%p113) target = $region12
    $region11: #{cnn_model_2_forward.3} parent=5 // pred_region
      %s117 = ssub.s32 %s9, 1
      // Predicated region
      $region13: #{cnn_model_2_forward.3} parent=11 // pred_check
        %p118 = pneg %p56
      $region14: #{cnn_model_2_forward.3} parent=11 // pred_check_branch
        %120 = sbr.rel (%p118) target = $region16
      $region15: #{cnn_model_2_forward.3} parent=11 // pred_region
        _
      $region16: #{cnn_model_2_forward.3} parent=11 // pred_fallthru
        _
      // Predicated region
      $region17: #{cnn_model_2_forward.3} parent=11 // pred_check
        %p121 = pneg %p77
      $region18: #{cnn_model_2_forward.3} parent=11 // pred_check_branch
        %123 = sbr.rel (%p121) target = $region20
      $region19: #{cnn_model_2_forward.3} parent=11 // pred_region
        _
      $region20: #{cnn_model_2_forward.3} parent=11 // pred_fallthru
        _
    $region12: #{cnn_model_2_forward.3} parent=5 // pred_fallthru
      _
    %p124 = scmp.lt.s32.totalorder %s9, 2
    // Predicated region
    $region21: #{cnn_model_2_forward.3} parent=5 // pred_check
      %p125 = pneg %p124
    $region22: #{cnn_model_2_forward.3} parent=5 // pred_check_branch
      %127 = sbr.rel (%p125) target = $region24
    $region23: #{cnn_model_2_forward.3} parent=5 // pred_region
      // Predicated region
      $region25: #{cnn_model_2_forward.3} parent=23 // pred_check
        %p128 = pneg %p29
      $region26: #{cnn_model_2_forward.3} parent=23 // pred_check_branch
        %130 = sbr.rel (%p128) target = $region28
      $region27: #{cnn_model_2_forward.3} parent=23 // pred_region
        %s131 = smul.u32 64, %s9
        %p132 = scmp.lt.s32.totalorder %s131, 127
        %s133 = scalar_select %p132, %s131, 127
        %s134 = smul.addr %s133, 4
        %s135 = scalar_lea.vmem %s0, %s134
        %s136 = smul.u32 64, %s9
      $region28: #{cnn_model_2_forward.3} parent=23 // pred_fallthru
        _
    $region24: #{cnn_model_2_forward.3} parent=5 // pred_fallthru
      _
    %p137 = scmp.le.s32.totalorder 1, %s9
    %p138 = scmp.lt.s32.totalorder %s9, 3
    %p139 = pnand %p137, %p138
    %p140 = pneg %p139
    // Predicated region
    $region29: #{cnn_model_2_forward.3} parent=5 // pred_check
      _
    $region30: #{cnn_model_2_forward.3} parent=5 // pred_check_branch
      %142 = sbr.rel (%p139) target = $region32
    $region31: #{cnn_model_2_forward.3} parent=5 // pred_region
      %s143 = ssub.s32 %s9, 1
      %s144 = smul.u32 64, %s14
      %p145 = scmp.lt.s32.totalorder %s144, 127
      %s146 = scalar_select %p145, %s144, 127
      %s147 = smul.addr %s146, 4
      %s148 = scalar_lea.vmem %s0, %s147
      %p149 = pneg %p35
      %p150 = pneg %p32
      %p151 = pneg %p56
      %p152 = pneg %p53
      %p153 = pneg %p77
      %p154 = pneg %p74
      %p155 = pneg %p103
      %p156 = pneg %p100
      %s157 = smul.u32 64, %s14
      %p158 = scmp.lt.s32.totalorder %s157, 127
      %s159 = scalar_select %p158, %s157, 127
      %s160 = smul.addr %s159, 8
      %s161 = scalar_lea.vmem %s3, %s160
      %s162 = smul.u32 64, %s14
      %p163 = scmp.lt.s32.totalorder %s162, 127
      %s164 = scalar_select %p163, %s162, 127
      %s165 = smul.addr %s164, 4
      %s166 = scalar_lea.vmem %s0, %s165
      %s167 = smul.u32 64, %s14
      %s168 = smul.u32 64, %s14
      %p169 = scmp.lt.s32.totalorder %s168, 127
      %s170 = scalar_select %p169, %s168, 127
      %s171 = smul.addr %s170, 8
      %s172 = scalar_lea.vmem %s3, %s171
      %s173 = smul.u32 64, %s14
      %v174 = vld [vmem:[%s166] sm:$0xf]
      %v175 = vld [vmem:[%s166 + $0x4] sm:$0xf]
      %v176 = vld [vmem:[%s166 + $0x8] sm:$0xf]
      %v177 = vld [vmem:[%s166 + $0xc] sm:$0xf]
      %v178 = vld [vmem:[%s166 + $0x10] sm:$0xf]
      %v179 = vld [vmem:[%s166 + $0x14] sm:$0xf]
      %v180 = vld [vmem:[%s166 + $0x18] sm:$0xf]
      %v181 = vld [vmem:[%s166 + $0x1c] sm:$0xf]
      %v182 = vld [vmem:[%s166 + $0x20] sm:$0xf]
      %v183 = vld [vmem:[%s166 + $0x24] sm:$0xf]
      %v184 = vld [vmem:[%s166 + $0x28] sm:$0xf]
      %v185 = vld [vmem:[%s166 + $0x2c] sm:$0xf]
      %v186 = vld [vmem:[%s166 + $0x30] sm:$0xf]
      %v187 = vld [vmem:[%s166 + $0x34] sm:$0xf]
      %v188 = vld [vmem:[%s166 + $0x38] sm:$0xf]
      %v189 = vld [vmem:[%s166 + $0x3c] sm:$0xf]
      %v190 = vld [vmem:[%s166 + $0x40] sm:$0xf]
      %v191 = vld [vmem:[%s166 + $0x44] sm:$0xf]
      %v192 = vld [vmem:[%s166 + $0x48] sm:$0xf]
      %v193 = vld [vmem:[%s166 + $0x4c] sm:$0xf]
      %v194 = vld [vmem:[%s166 + $0x50] sm:$0xf]
      %v195 = vld [vmem:[%s166 + $0x54] sm:$0xf]
      %v196 = vld [vmem:[%s166 + $0x58] sm:$0xf]
      %v197 = vld [vmem:[%s166 + $0x5c] sm:$0xf]
      %v198 = vld [vmem:[%s166 + $0x60] sm:$0xf]
      %v199 = vld [vmem:[%s166 + $0x64] sm:$0xf]
      %v200 = vld [vmem:[%s166 + $0x68] sm:$0xf]
      %v201 = vld [vmem:[%s166 + $0x6c] sm:$0xf]
      %v202 = vld [vmem:[%s166 + $0x70] sm:$0xf]
      %v203 = vld [vmem:[%s166 + $0x74] sm:$0xf]
      %v204 = vld [vmem:[%s166 + $0x78] sm:$0xf]
      %v205 = vld [vmem:[%s166 + $0x7c] sm:$0xf]
      %v206 = vld [vmem:[%s166 + $0x80] sm:$0xf]
      %v207 = vld [vmem:[%s166 + $0x84] sm:$0xf]
      %v208 = vld [vmem:[%s166 + $0x88] sm:$0xf]
      %v209 = vld [vmem:[%s166 + $0x8c] sm:$0xf]
      %v210 = vld [vmem:[%s166 + $0x90] sm:$0xf]
      %v211 = vld [vmem:[%s166 + $0x94] sm:$0xf]
      %v212 = vld [vmem:[%s166 + $0x98] sm:$0xf]
      %v213 = vld [vmem:[%s166 + $0x9c] sm:$0xf]
      %v214 = vld [vmem:[%s166 + $0xa0] sm:$0xf]
      %v215 = vld [vmem:[%s166 + $0xa4] sm:$0xf]
      %v216 = vld [vmem:[%s166 + $0xa8] sm:$0xf]
      %v217 = vld [vmem:[%s166 + $0xac] sm:$0xf]
      %v218 = vld [vmem:[%s166 + $0xb0] sm:$0xf]
      %v219 = vld [vmem:[%s166 + $0xb4] sm:$0xf]
      %v220 = vld [vmem:[%s166 + $0xb8] sm:$0xf]
      %v221 = vld [vmem:[%s166 + $0xbc] sm:$0xf]
      %v222 = vld [vmem:[%s166 + $0xc0] sm:$0xf]
      %v223 = vld [vmem:[%s166 + $0xc4] sm:$0xf]
      %v224 = vld [vmem:[%s166 + $0xc8] sm:$0xf]
      %v225 = vld [vmem:[%s166 + $0xcc] sm:$0xf]
      %v226 = vld [vmem:[%s166 + $0xd0] sm:$0xf]
      %v227 = vld [vmem:[%s166 + $0xd4] sm:$0xf]
      %v228 = vld [vmem:[%s166 + $0xd8] sm:$0xf]
      %v229 = vld [vmem:[%s166 + $0xdc] sm:$0xf]
      %v230 = vld [vmem:[%s166 + $0xe0] sm:$0xf]
      %v231 = vld [vmem:[%s166 + $0xe4] sm:$0xf]
      %v232 = vld [vmem:[%s166 + $0xe8] sm:$0xf]
      %v233 = vld [vmem:[%s166 + $0xec] sm:$0xf]
      %v234 = vld [vmem:[%s166 + $0xf0] sm:$0xf]
      %v235 = vld [vmem:[%s166 + $0xf4] sm:$0xf]
      %v236 = vld [vmem:[%s166 + $0xf8] sm:$0xf]
      %v237 = vld [vmem:[%s166 + $0xfc] sm:$0xf]
      %v238 = vld [vmem:[%s1] sm:$0xf]
      %v239 = vld [vmem:[%s1 + $0x4] sm:$0xf]
      %v240 = vld [vmem:[%s1 + $0x8] sm:$0xf]
      %v241 = vld [vmem:[%s1 + $0xc] sm:$0xf]
      %v242 = vld [vmem:[%s1 + $0x10] sm:$0xf]
      %v243 = vld [vmem:[%s1 + $0x14] sm:$0xf]
      %v244 = vld [vmem:[%s1 + $0x18] sm:$0xf]
      %v245 = vld [vmem:[%s1 + $0x1c] sm:$0xf]
      %v246 = vld [vmem:[%s1 + $0x20] sm:$0xf]
      %v247 = vld [vmem:[%s1 + $0x24] sm:$0xf]
      %v248 = vld [vmem:[%s1 + $0x28] sm:$0xf]
      %v249 = vld [vmem:[%s1 + $0x2c] sm:$0xf]
      %v250 = vld [vmem:[%s1 + $0x30] sm:$0xf]
      %v251 = vld [vmem:[%s1 + $0x34] sm:$0xf]
      %v252 = vld [vmem:[%s1 + $0x38] sm:$0xf]
      %v253 = vld [vmem:[%s1 + $0x3c] sm:$0xf]
      %v254 = vld [vmem:[%s2] sm:$0x1]
      %v256 = vperm.slane %v254, 0
      %v322 = vunpack.c.l.b16 %v174
      %v323 = vunpack.c.l.b16 %v175
      %v324 = vunpack.c.l.b16 %v176
      %v325 = vunpack.c.l.b16 %v177
      %v326 = vunpack.c.l.b16 %v178
      %v327 = vunpack.c.l.b16 %v179
      %v328 = vunpack.c.l.b16 %v180
      %v329 = vunpack.c.l.b16 %v181
      %v330 = vunpack.c.l.b16 %v182
      %v331 = vunpack.c.l.b16 %v183
      %v332 = vunpack.c.l.b16 %v184
      %v333 = vunpack.c.l.b16 %v185
      %v334 = vunpack.c.l.b16 %v186
      %v335 = vunpack.c.l.b16 %v187
      %v336 = vunpack.c.l.b16 %v188
      %v337 = vunpack.c.l.b16 %v189
      %v338 = vunpack.c.l.b16 %v190
      %v339 = vunpack.c.l.b16 %v191
      %v340 = vunpack.c.l.b16 %v192
      %v341 = vunpack.c.l.b16 %v193
      %v342 = vunpack.c.l.b16 %v194
      %v343 = vunpack.c.l.b16 %v195
      %v344 = vunpack.c.l.b16 %v196
      %v345 = vunpack.c.l.b16 %v197
      %v346 = vunpack.c.l.b16 %v198
      %v347 = vunpack.c.l.b16 %v199
      %v348 = vunpack.c.l.b16 %v200
      %v349 = vunpack.c.l.b16 %v201
      %v350 = vunpack.c.l.b16 %v202
      %v351 = vunpack.c.l.b16 %v203
      %v352 = vunpack.c.l.b16 %v204
      %v353 = vunpack.c.l.b16 %v205
      %v354 = vunpack.c.l.b16 %v206
      %v355 = vunpack.c.l.b16 %v207
      %v356 = vunpack.c.l.b16 %v208
      %v357 = vunpack.c.l.b16 %v209
      %v358 = vunpack.c.l.b16 %v210
      %v359 = vunpack.c.l.b16 %v211
      %v360 = vunpack.c.l.b16 %v212
      %v361 = vunpack.c.l.b16 %v213
      %v362 = vunpack.c.l.b16 %v214
      %v363 = vunpack.c.l.b16 %v215
      %v364 = vunpack.c.l.b16 %v216
      %v365 = vunpack.c.l.b16 %v217
      %v366 = vunpack.c.l.b16 %v218
      %v367 = vunpack.c.l.b16 %v219
      %v368 = vunpack.c.l.b16 %v220
      %v369 = vunpack.c.l.b16 %v221
      %v370 = vunpack.c.l.b16 %v222
      %v371 = vunpack.c.l.b16 %v223
      %v372 = vunpack.c.l.b16 %v224
      %v373 = vunpack.c.l.b16 %v225
      %v374 = vunpack.c.l.b16 %v226
      %v375 = vunpack.c.l.b16 %v227
      %v376 = vunpack.c.l.b16 %v228
      %v377 = vunpack.c.l.b16 %v229
      %v378 = vunpack.c.l.b16 %v230
      %v379 = vunpack.c.l.b16 %v231
      %v380 = vunpack.c.l.b16 %v232
      %v381 = vunpack.c.l.b16 %v233
      %v382 = vunpack.c.l.b16 %v234
      %v383 = vunpack.c.l.b16 %v235
      %v384 = vunpack.c.l.b16 %v236
      %v385 = vunpack.c.l.b16 %v237
      %v386 = vpack.c.b16 %v323, %v322
      %v387 = vpack.c.b16 %v325, %v324
      %v388 = vpack.c.b16 %v327, %v326
      %v389 = vpack.c.b16 %v329, %v328
      %v390 = vpack.c.b16 %v331, %v330
      %v391 = vpack.c.b16 %v333, %v332
      %v392 = vpack.c.b16 %v335, %v334
      %v393 = vpack.c.b16 %v337, %v336
      %v394 = vpack.c.b16 %v339, %v338
      %v395 = vpack.c.b16 %v341, %v340
      %v396 = vpack.c.b16 %v343, %v342
      %v397 = vpack.c.b16 %v345, %v344
      %v398 = vpack.c.b16 %v347, %v346
      %v399 = vpack.c.b16 %v349, %v348
      %v400 = vpack.c.b16 %v351, %v350
      %v401 = vpack.c.b16 %v353, %v352
      %v402 = vpack.c.b16 %v355, %v354
      %v403 = vpack.c.b16 %v357, %v356
      %v404 = vpack.c.b16 %v359, %v358
      %v405 = vpack.c.b16 %v361, %v360
      %v406 = vpack.c.b16 %v363, %v362
      %v407 = vpack.c.b16 %v365, %v364
      %v408 = vpack.c.b16 %v367, %v366
      %v409 = vpack.c.b16 %v369, %v368
      %v410 = vpack.c.b16 %v371, %v370
      %v411 = vpack.c.b16 %v373, %v372
      %v412 = vpack.c.b16 %v375, %v374
      %v413 = vpack.c.b16 %v377, %v376
      %v414 = vpack.c.b16 %v379, %v378
      %v415 = vpack.c.b16 %v381, %v380
      %v416 = vpack.c.b16 %v383, %v382
      %v417 = vpack.c.b16 %v385, %v384
      %v466 = vunpack.c.l.b16 %v238
      %v467 = vunpack.c.l.b16 %v239
      %v468 = vunpack.c.l.b16 %v240
      %v469 = vunpack.c.l.b16 %v241
      %v470 = vunpack.c.l.b16 %v242
      %v471 = vunpack.c.l.b16 %v243
      %v472 = vunpack.c.l.b16 %v244
      %v473 = vunpack.c.l.b16 %v245
      %v474 = vunpack.c.l.b16 %v246
      %v475 = vunpack.c.l.b16 %v247
      %v476 = vunpack.c.l.b16 %v248
      %v477 = vunpack.c.l.b16 %v249
      %v478 = vunpack.c.l.b16 %v250
      %v479 = vunpack.c.l.b16 %v251
      %v480 = vunpack.c.l.b16 %v252
      %v481 = vunpack.c.l.b16 %v253
      %v482 = vpack.c.b16 %v467, %v466
      %v483 = vpack.c.b16 %v469, %v468
      %v484 = vpack.c.b16 %v471, %v470
      %v485 = vpack.c.b16 %v473, %v472
      %v486 = vpack.c.b16 %v475, %v474
      %v487 = vpack.c.b16 %v477, %v476
      %v488 = vpack.c.b16 %v479, %v478
      %v489 = vpack.c.b16 %v481, %v480
      %498 = vmatpush.bf16.msra.mxu0 %v489
      %499 = vmatpush.bf16.msra.mxu0 %v488
      %500 = vmatpush.bf16.msra.mxu0 %v487
      %501 = vmatpush.bf16.msra.mxu0 %v486
      %502 = vmatpush.bf16.msra.mxu0 %v485
      %503 = vmatpush.bf16.msra.mxu0 %v484
      %504 = vmatpush.bf16.msra.mxu0 %v483
      %505 = vmatpush.bf16.msra.mxu0 %v482
      %506 = vmatmul.bf16.gmra.mxu0 %v386
      %v507 = vpop.f32.mrf.mxu0
      %v508 = vadd.f32 %v256, %v507
      %v509 = vpop.f32.mrf.mxu0
      %v510 = vadd.f32 %v256, %v509
      %511 = vmatmul.bf16.gmra.mxu0 %v387
      %v512 = vpop.f32.mrf.mxu0
      %v513 = vadd.f32 %v256, %v512
      %v514 = vpop.f32.mrf.mxu0
      %v515 = vadd.f32 %v256, %v514
      %516 = vmatmul.bf16.gmra.mxu0 %v388
      %v517 = vpop.f32.mrf.mxu0
      %v518 = vadd.f32 %v256, %v517
      %v519 = vpop.f32.mrf.mxu0
      %v520 = vadd.f32 %v256, %v519
      %521 = vmatmul.bf16.gmra.mxu0 %v389
      %v522 = vpop.f32.mrf.mxu0
      %v523 = vadd.f32 %v256, %v522
      %v524 = vpop.f32.mrf.mxu0
      %v525 = vadd.f32 %v256, %v524
      %526 = vmatmul.bf16.gmra.mxu0 %v390
      %v527 = vpop.f32.mrf.mxu0
      %v528 = vadd.f32 %v256, %v527
      %v529 = vpop.f32.mrf.mxu0
      %v530 = vadd.f32 %v256, %v529
      %531 = vmatmul.bf16.gmra.mxu0 %v391
      %v532 = vpop.f32.mrf.mxu0
      %v533 = vadd.f32 %v256, %v532
      %v534 = vpop.f32.mrf.mxu0
      %v535 = vadd.f32 %v256, %v534
      %536 = vmatmul.bf16.gmra.mxu0 %v392
      %v537 = vpop.f32.mrf.mxu0
      %v538 = vadd.f32 %v256, %v537
      %v539 = vpop.f32.mrf.mxu0
      %v540 = vadd.f32 %v256, %v539
      %541 = vmatmul.bf16.gmra.mxu0 %v393
      %v542 = vpop.f32.mrf.mxu0
      %v543 = vadd.f32 %v256, %v542
      %v544 = vpop.f32.mrf.mxu0
      %v545 = vadd.f32 %v256, %v544
      %546 = vmatmul.bf16.gmra.mxu0 %v394
      %v547 = vpop.f32.mrf.mxu0
      %v548 = vadd.f32 %v256, %v547
      %v549 = vpop.f32.mrf.mxu0
      %v550 = vadd.f32 %v256, %v549
      %551 = vmatmul.bf16.gmra.mxu0 %v395
      %v552 = vpop.f32.mrf.mxu0
      %v553 = vadd.f32 %v256, %v552
      %v554 = vpop.f32.mrf.mxu0
      %v555 = vadd.f32 %v256, %v554
      %556 = vmatmul.bf16.gmra.mxu0 %v396
      %v557 = vpop.f32.mrf.mxu0
      %v558 = vadd.f32 %v256, %v557
      %v559 = vpop.f32.mrf.mxu0
      %v560 = vadd.f32 %v256, %v559
      %561 = vmatmul.bf16.gmra.mxu0 %v397
      %v562 = vpop.f32.mrf.mxu0
      %v563 = vadd.f32 %v256, %v562
      %v564 = vpop.f32.mrf.mxu0
      %v565 = vadd.f32 %v256, %v564
      %566 = vmatmul.bf16.gmra.mxu0 %v398
      %v567 = vpop.f32.mrf.mxu0
      %v568 = vadd.f32 %v256, %v567
      %v569 = vpop.f32.mrf.mxu0
      %v570 = vadd.f32 %v256, %v569
      %571 = vmatmul.bf16.gmra.mxu0 %v399
      %v572 = vpop.f32.mrf.mxu0
      %v573 = vadd.f32 %v256, %v572
      %v574 = vpop.f32.mrf.mxu0
      %v575 = vadd.f32 %v256, %v574
      %576 = vmatmul.bf16.gmra.mxu0 %v400
      %v577 = vpop.f32.mrf.mxu0
      %v578 = vadd.f32 %v256, %v577
      %v579 = vpop.f32.mrf.mxu0
      %v580 = vadd.f32 %v256, %v579
      %581 = vmatmul.bf16.gmra.mxu0 %v401
      %v582 = vpop.f32.mrf.mxu0
      %v583 = vadd.f32 %v256, %v582
      %v584 = vpop.f32.mrf.mxu0
      %v585 = vadd.f32 %v256, %v584
      %586 = vmatmul.bf16.gmra.mxu0 %v402
      %v587 = vpop.f32.mrf.mxu0
      %v588 = vadd.f32 %v256, %v587
      %v589 = vpop.f32.mrf.mxu0
      %v590 = vadd.f32 %v256, %v589
      %591 = vmatmul.bf16.gmra.mxu0 %v403
      %v592 = vpop.f32.mrf.mxu0
      %v593 = vadd.f32 %v256, %v592
      %v594 = vpop.f32.mrf.mxu0
      %v595 = vadd.f32 %v256, %v594
      %596 = vmatmul.bf16.gmra.mxu0 %v404
      %v597 = vpop.f32.mrf.mxu0
      %v598 = vadd.f32 %v256, %v597
      %v599 = vpop.f32.mrf.mxu0
      %v600 = vadd.f32 %v256, %v599
      %601 = vmatmul.bf16.gmra.mxu0 %v405
      %v602 = vpop.f32.mrf.mxu0
      %v603 = vadd.f32 %v256, %v602
      %v604 = vpop.f32.mrf.mxu0
      %v605 = vadd.f32 %v256, %v604
      %606 = vmatmul.bf16.gmra.mxu0 %v406
      %v607 = vpop.f32.mrf.mxu0
      %v608 = vadd.f32 %v256, %v607
      %v609 = vpop.f32.mrf.mxu0
      %v610 = vadd.f32 %v256, %v609
      %611 = vmatmul.bf16.gmra.mxu0 %v407
      %v612 = vpop.f32.mrf.mxu0
      %v613 = vadd.f32 %v256, %v612
      %v614 = vpop.f32.mrf.mxu0
      %v615 = vadd.f32 %v256, %v614
      %616 = vmatmul.bf16.gmra.mxu0 %v408
      %v617 = vpop.f32.mrf.mxu0
      %v618 = vadd.f32 %v256, %v617
      %v619 = vpop.f32.mrf.mxu0
      %v620 = vadd.f32 %v256, %v619
      %621 = vmatmul.bf16.gmra.mxu0 %v409
      %v622 = vpop.f32.mrf.mxu0
      %v623 = vadd.f32 %v256, %v622
      %v624 = vpop.f32.mrf.mxu0
      %v625 = vadd.f32 %v256, %v624
      %626 = vmatmul.bf16.gmra.mxu0 %v410
      %v627 = vpop.f32.mrf.mxu0
      %v628 = vadd.f32 %v256, %v627
      %v629 = vpop.f32.mrf.mxu0
      %v630 = vadd.f32 %v256, %v629
      %631 = vmatmul.bf16.gmra.mxu0 %v411
      %v632 = vpop.f32.mrf.mxu0
      %v633 = vadd.f32 %v256, %v632
      %v634 = vpop.f32.mrf.mxu0
      %v635 = vadd.f32 %v256, %v634
      %636 = vmatmul.bf16.gmra.mxu0 %v412
      %v637 = vpop.f32.mrf.mxu0
      %v638 = vadd.f32 %v256, %v637
      %v639 = vpop.f32.mrf.mxu0
      %v640 = vadd.f32 %v256, %v639
      %641 = vmatmul.bf16.gmra.mxu0 %v413
      %v642 = vpop.f32.mrf.mxu0
      %v643 = vadd.f32 %v256, %v642
      %v644 = vpop.f32.mrf.mxu0
      %v645 = vadd.f32 %v256, %v644
      %646 = vmatmul.bf16.gmra.mxu0 %v414
      %v647 = vpop.f32.mrf.mxu0
      %v648 = vadd.f32 %v256, %v647
      %v649 = vpop.f32.mrf.mxu0
      %v650 = vadd.f32 %v256, %v649
      %651 = vmatmul.bf16.gmra.mxu0 %v415
      %v652 = vpop.f32.mrf.mxu0
      %v653 = vadd.f32 %v256, %v652
      %v654 = vpop.f32.mrf.mxu0
      %v655 = vadd.f32 %v256, %v654
      %656 = vmatmul.bf16.gmra.mxu0 %v416
      %v657 = vpop.f32.mrf.mxu0
      %v658 = vadd.f32 %v256, %v657
      %v659 = vpop.f32.mrf.mxu0
      %v660 = vadd.f32 %v256, %v659
      %661 = vmatmul.bf16.gmra.mxu0 %v417
      %v662 = vpop.f32.mrf.mxu0
      %v663 = vadd.f32 %v256, %v662
      %v664 = vpop.f32.mrf.mxu0
      %v665 = vadd.f32 %v256, %v664
      %666 = vdwg.mxu0
      %v667 = vmax.f32 %v508, 0.0
      %v668 = vmax.f32 %v510, 0.0
      %v669 = vmax.f32 %v513, 0.0
      %v670 = vmax.f32 %v515, 0.0
      %v671 = vmax.f32 %v518, 0.0
      %v672 = vmax.f32 %v520, 0.0
      %v673 = vmax.f32 %v523, 0.0
      %v674 = vmax.f32 %v525, 0.0
      %v675 = vmax.f32 %v528, 0.0
      %v676 = vmax.f32 %v530, 0.0
      %v677 = vmax.f32 %v533, 0.0
      %v678 = vmax.f32 %v535, 0.0
      %v679 = vmax.f32 %v538, 0.0
      %v680 = vmax.f32 %v540, 0.0
      %v681 = vmax.f32 %v543, 0.0
      %v682 = vmax.f32 %v545, 0.0
      %v683 = vmax.f32 %v548, 0.0
      %v684 = vmax.f32 %v550, 0.0
      %v685 = vmax.f32 %v553, 0.0
      %v686 = vmax.f32 %v555, 0.0
      %v687 = vmax.f32 %v558, 0.0
      %v688 = vmax.f32 %v560, 0.0
      %v689 = vmax.f32 %v563, 0.0
      %v690 = vmax.f32 %v565, 0.0
      %v691 = vmax.f32 %v568, 0.0
      %v692 = vmax.f32 %v570, 0.0
      %v693 = vmax.f32 %v573, 0.0
      %v694 = vmax.f32 %v575, 0.0
      %v695 = vmax.f32 %v578, 0.0
      %v696 = vmax.f32 %v580, 0.0
      %v697 = vmax.f32 %v583, 0.0
      %v698 = vmax.f32 %v585, 0.0
      %v699 = vmax.f32 %v588, 0.0
      %v700 = vmax.f32 %v590, 0.0
      %v701 = vmax.f32 %v593, 0.0
      %v702 = vmax.f32 %v595, 0.0
      %v703 = vmax.f32 %v598, 0.0
      %v704 = vmax.f32 %v600, 0.0
      %v705 = vmax.f32 %v603, 0.0
      %v706 = vmax.f32 %v605, 0.0
      %v707 = vmax.f32 %v608, 0.0
      %v708 = vmax.f32 %v610, 0.0
      %v709 = vmax.f32 %v613, 0.0
      %v710 = vmax.f32 %v615, 0.0
      %v711 = vmax.f32 %v618, 0.0
      %v712 = vmax.f32 %v620, 0.0
      %v713 = vmax.f32 %v623, 0.0
      %v714 = vmax.f32 %v625, 0.0
      %v715 = vmax.f32 %v628, 0.0
      %v716 = vmax.f32 %v630, 0.0
      %v717 = vmax.f32 %v633, 0.0
      %v718 = vmax.f32 %v635, 0.0
      %v719 = vmax.f32 %v638, 0.0
      %v720 = vmax.f32 %v640, 0.0
      %v721 = vmax.f32 %v643, 0.0
      %v722 = vmax.f32 %v645, 0.0
      %v723 = vmax.f32 %v648, 0.0
      %v724 = vmax.f32 %v650, 0.0
      %v725 = vmax.f32 %v653, 0.0
      %v726 = vmax.f32 %v655, 0.0
      %v727 = vmax.f32 %v658, 0.0
      %v728 = vmax.f32 %v660, 0.0
      %v729 = vmax.f32 %v663, 0.0
      %v730 = vmax.f32 %v665, 0.0
      %731 = vst [vmem:[%s172] sm:$0xff] %v667
      %732 = vst [vmem:[%s172 + $0x8] sm:$0xff] %v668
      %733 = vst [vmem:[%s172 + $0x10] sm:$0xff] %v669
      %734 = vst [vmem:[%s172 + $0x18] sm:$0xff] %v670
      %735 = vst [vmem:[%s172 + $0x20] sm:$0xff] %v671
      %736 = vst [vmem:[%s172 + $0x28] sm:$0xff] %v672
      %737 = vst [vmem:[%s172 + $0x30] sm:$0xff] %v673
      %738 = vst [vmem:[%s172 + $0x38] sm:$0xff] %v674
      %739 = vst [vmem:[%s172 + $0x40] sm:$0xff] %v675
      %740 = vst [vmem:[%s172 + $0x48] sm:$0xff] %v676
      %741 = vst [vmem:[%s172 + $0x50] sm:$0xff] %v677
      %742 = vst [vmem:[%s172 + $0x58] sm:$0xff] %v678
      %743 = vst [vmem:[%s172 + $0x60] sm:$0xff] %v679
      %744 = vst [vmem:[%s172 + $0x68] sm:$0xff] %v680
      %745 = vst [vmem:[%s172 + $0x70] sm:$0xff] %v681
      %746 = vst [vmem:[%s172 + $0x78] sm:$0xff] %v682
      %747 = vst [vmem:[%s172 + $0x80] sm:$0xff] %v683
      %748 = vst [vmem:[%s172 + $0x88] sm:$0xff] %v684
      %749 = vst [vmem:[%s172 + $0x90] sm:$0xff] %v685
      %750 = vst [vmem:[%s172 + $0x98] sm:$0xff] %v686
      %751 = vst [vmem:[%s172 + $0xa0] sm:$0xff] %v687
      %752 = vst [vmem:[%s172 + $0xa8] sm:$0xff] %v688
      %753 = vst [vmem:[%s172 + $0xb0] sm:$0xff] %v689
      %754 = vst [vmem:[%s172 + $0xb8] sm:$0xff] %v690
      %755 = vst [vmem:[%s172 + $0xc0] sm:$0xff] %v691
      %756 = vst [vmem:[%s172 + $0xc8] sm:$0xff] %v692
      %757 = vst [vmem:[%s172 + $0xd0] sm:$0xff] %v693
      %758 = vst [vmem:[%s172 + $0xd8] sm:$0xff] %v694
      %759 = vst [vmem:[%s172 + $0xe0] sm:$0xff] %v695
      %760 = vst [vmem:[%s172 + $0xe8] sm:$0xff] %v696
      %761 = vst [vmem:[%s172 + $0xf0] sm:$0xff] %v697
      %762 = vst [vmem:[%s172 + $0xf8] sm:$0xff] %v698
      %763 = vst [vmem:[%s172 + $0x100] sm:$0xff] %v699
      %764 = vst [vmem:[%s172 + $0x108] sm:$0xff] %v700
      %765 = vst [vmem:[%s172 + $0x110] sm:$0xff] %v701
      %766 = vst [vmem:[%s172 + $0x118] sm:$0xff] %v702
      %767 = vst [vmem:[%s172 + $0x120] sm:$0xff] %v703
      %768 = vst [vmem:[%s172 + $0x128] sm:$0xff] %v704
      %769 = vst [vmem:[%s172 + $0x130] sm:$0xff] %v705
      %770 = vst [vmem:[%s172 + $0x138] sm:$0xff] %v706
      %771 = vst [vmem:[%s172 + $0x140] sm:$0xff] %v707
      %772 = vst [vmem:[%s172 + $0x148] sm:$0xff] %v708
      %773 = vst [vmem:[%s172 + $0x150] sm:$0xff] %v709
      %774 = vst [vmem:[%s172 + $0x158] sm:$0xff] %v710
      %775 = vst [vmem:[%s172 + $0x160] sm:$0xff] %v711
      %776 = vst [vmem:[%s172 + $0x168] sm:$0xff] %v712
      %777 = vst [vmem:[%s172 + $0x170] sm:$0xff] %v713
      %778 = vst [vmem:[%s172 + $0x178] sm:$0xff] %v714
      %779 = vst [vmem:[%s172 + $0x180] sm:$0xff] %v715
      %780 = vst [vmem:[%s172 + $0x188] sm:$0xff] %v716
      %781 = vst [vmem:[%s172 + $0x190] sm:$0xff] %v717
      %782 = vst [vmem:[%s172 + $0x198] sm:$0xff] %v718
      %783 = vst [vmem:[%s172 + $0x1a0] sm:$0xff] %v719
      %784 = vst [vmem:[%s172 + $0x1a8] sm:$0xff] %v720
      %785 = vst [vmem:[%s172 + $0x1b0] sm:$0xff] %v721
      %786 = vst [vmem:[%s172 + $0x1b8] sm:$0xff] %v722
      %787 = vst [vmem:[%s172 + $0x1c0] sm:$0xff] %v723
      %788 = vst [vmem:[%s172 + $0x1c8] sm:$0xff] %v724
      %789 = vst [vmem:[%s172 + $0x1d0] sm:$0xff] %v725
      %790 = vst [vmem:[%s172 + $0x1d8] sm:$0xff] %v726
      %791 = vst [vmem:[%s172 + $0x1e0] sm:$0xff] %v727
      %792 = vst [vmem:[%s172 + $0x1e8] sm:$0xff] %v728
      %793 = vst [vmem:[%s172 + $0x1f0] sm:$0xff] %v729
      %794 = vst [vmem:[%s172 + $0x1f8] sm:$0xff] %v730
      %s795 = smul.u32 64, %s14
      %p796 = scmp.lt.s32.totalorder %s795, 127
      %s797 = scalar_select %p796, %s795, 127
      %s798 = smul.addr %s797, 8
      %s799 = scalar_lea.vmem %s3, %s798
      // Predicated region
      $region33: #{cnn_model_2_forward.3} parent=31 // pred_check
        %p800 = pneg %p100
      $region34: #{cnn_model_2_forward.3} parent=31 // pred_check_branch
        %802 = sbr.rel (%p800) target = $region36
      $region35: #{cnn_model_2_forward.3} parent=31 // pred_region
        %s803 = smul.u32 64, %s14
      $region36: #{cnn_model_2_forward.3} parent=31 // pred_fallthru
        _
    $region32: #{cnn_model_2_forward.3} parent=5 // pred_fallthru
      _
    %p804 = scmp.le.s32.totalorder 2, %s9
    // Predicated region
    $region37: #{cnn_model_2_forward.3} parent=5 // pred_check
      %p805 = pneg %p804
    $region38: #{cnn_model_2_forward.3} parent=5 // pred_check_branch
      %807 = sbr.rel (%p805) target = $region40
    $region39: #{cnn_model_2_forward.3} parent=5 // pred_region
      %s808 = ssub.s32 %s9, 2
      // Predicated region
      $region41: #{cnn_model_2_forward.3} parent=39 // pred_check
        %p809 = pneg %p106
      $region42: #{cnn_model_2_forward.3} parent=39 // pred_check_branch
        %811 = sbr.rel (%p809) target = $region44
      $region43: #{cnn_model_2_forward.3} parent=39 // pred_region
        %s812 = smul.u32 64, %s15
        %p813 = scmp.lt.s32.totalorder %s812, 127
        %s814 = scalar_select %p813, %s812, 127
        %s815 = smul.addr %s814, 8
        %s816 = scalar_lea.vmem %s3, %s815
      $region44: #{cnn_model_2_forward.3} parent=39 // pred_fallthru
        _
    $region40: #{cnn_model_2_forward.3} parent=5 // pred_fallthru
      _
  $region6: #{cnn_model_2_forward.3} parent=0 // loop_footer
    %s13 = sadd.s32 1, %s9
  $region7: #{cnn_model_2_forward.3} parent=0 // loop_footer_branch
    %8 = sbr.rel target = $region3
  $region8: #{cnn_model_2_forward.3} parent=0 // loop_exit
    _

// kernel: cnn_model_2_forward.4
$region0: #{cnn_model_2_forward.4}
  #allocation0 [shape = 'u32[]', space=smem, size = 0x4, offset = 0x4, fixed_abs, tag = 'smem constant byte address 0x4 - core index']
  #allocation1 [shape = 'u32[72,128]{1,0:T(1,128)}', space=vmem, size = 0x9000, scoped, tag = 'internal scratch']
  %s0 = inlined_call_operand.vmem [shape: bf16[432,896], index: 0, kind: input, shape index: {}]
  %s1 = inlined_call_operand.vmem [shape: bf16[896,128], index: 1, kind: input, shape index: {}]
  %s2 = inlined_call_operand.vmem [shape: f32[1,128], index: 2, kind: input, shape index: {}]
  %s3 = inlined_call_operand.vmem [shape: f32[432,128], index: 3, kind: output, shape index: {}]
  %s4 = sld [smem:[#allocation0]]
  $region22: #{cnn_model_2_forward.4} parent=0
    _
  %s6 = ssub.s32 1, %s4
  %s7 = scalar_select 0, %s6, %s4
  // Predicated region
  $region2: #{cnn_model_2_forward.4} parent=0 // pred_check
    _
  $region3: #{cnn_model_2_forward.4} parent=0 // pred_check_branch
    %9 = sbr.rel (0) target = $region5
  $region4: #{cnn_model_2_forward.4} parent=0 // pred_region
    _
  $region5: #{cnn_model_2_forward.4} parent=0 // pred_fallthru
    _
  // Predicated region
  $region6: #{cnn_model_2_forward.4} parent=0 // pred_check
    _
  $region7: #{cnn_model_2_forward.4} parent=0 // pred_check_branch
    %11 = sbr.rel (0) target = $region9
  $region8: #{cnn_model_2_forward.4} parent=0 // pred_region
    _
  $region9: #{cnn_model_2_forward.4} parent=0 // pred_fallthru
    _
  // Predicated region
  $region10: #{cnn_model_2_forward.4} parent=0 // pred_check
    _
  $region11: #{cnn_model_2_forward.4} parent=0 // pred_check_branch
    %13 = sbr.rel (0) target = $region13
  $region12: #{cnn_model_2_forward.4} parent=0 // pred_region
    _
  $region13: #{cnn_model_2_forward.4} parent=0 // pred_fallthru
    _
  %v14 = vld [vmem:[%s0] sm:$0xff]
  %v15 = vld [vmem:[%s0 + $0x8] sm:$0xff]
  %v16 = vld [vmem:[%s0 + $0x10] sm:$0xff]
  %v17 = vld [vmem:[%s0 + $0x18] sm:$0xf]
  %v18 = vld [vmem:[%s0 + $0x1c] sm:$0xff]
  %v19 = vld [vmem:[%s0 + $0x24] sm:$0xff]
  %v20 = vld [vmem:[%s0 + $0x2c] sm:$0xff]
  %v21 = vld [vmem:[%s0 + $0x34] sm:$0xf]
  %v22 = vld [vmem:[%s0 + $0x38] sm:$0xff]
  %v23 = vld [vmem:[%s0 + $0x40] sm:$0xff]
  %v24 = vld [vmem:[%s0 + $0x48] sm:$0xff]
  %v25 = vld [vmem:[%s0 + $0x50] sm:$0xf]
  %v26 = vld [vmem:[%s0 + $0x54] sm:$0xff]
  %v27 = vld [vmem:[%s0 + $0x5c] sm:$0xff]
  %v28 = vld [vmem:[%s0 + $0x64] sm:$0xff]
  %v29 = vld [vmem:[%s0 + $0x6c] sm:$0xf]
  %v30 = vld [vmem:[%s0 + $0x70] sm:$0xff]
  %v31 = vld [vmem:[%s0 + $0x78] sm:$0xff]
  %v32 = vld [vmem:[%s0 + $0x80] sm:$0xff]
  %v33 = vld [vmem:[%s0 + $0x88] sm:$0xf]
  %v34 = vld [vmem:[%s0 + $0x8c] sm:$0xff]
  %v35 = vld [vmem:[%s0 + $0x94] sm:$0xff]
  %v36 = vld [vmem:[%s0 + $0x9c] sm:$0xff]
  %v37 = vld [vmem:[%s0 + $0xa4] sm:$0xf]
  %v38 = vld [vmem:[%s0 + $0xa8] sm:$0xff]
  %v39 = vld [vmem:[%s0 + $0xb0] sm:$0xff]
  %v40 = vld [vmem:[%s0 + $0xb8] sm:$0xff]
  %v41 = vld [vmem:[%s0 + $0xc0] sm:$0xf]
  %v42 = vld [vmem:[%s0 + $0xc4] sm:$0xff]
  %v43 = vld [vmem:[%s0 + $0xcc] sm:$0xff]
  %v44 = vld [vmem:[%s0 + $0xd4] sm:$0xff]
  %v45 = vld [vmem:[%s0 + $0xdc] sm:$0xf]
  %v46 = vld [vmem:[%s0 + $0xe0] sm:$0xff]
  %v47 = vld [vmem:[%s0 + $0xe8] sm:$0xff]
  %v48 = vld [vmem:[%s0 + $0xf0] sm:$0xff]
  %v49 = vld [vmem:[%s0 + $0xf8] sm:$0xf]
  %v50 = vld [vmem:[%s0 + $0xfc] sm:$0xff]
  %v51 = vld [vmem:[%s0 + $0x104] sm:$0xff]
  %v52 = vld [vmem:[%s0 + $0x10c] sm:$0xff]
  %v53 = vld [vmem:[%s0 + $0x114] sm:$0xf]
  %v54 = vld [vmem:[%s0 + $0x118] sm:$0xff]
  %v55 = vld [vmem:[%s0 + $0x120] sm:$0xff]
  %v56 = vld [vmem:[%s0 + $0x128] sm:$0xff]
  %v57 = vld [vmem:[%s0 + $0x130] sm:$0xf]
  %v58 = vld [vmem:[%s0 + $0x134] sm:$0xff]
  %v59 = vld [vmem:[%s0 + $0x13c] sm:$0xff]
  %v60 = vld [vmem:[%s0 + $0x144] sm:$0xff]
  %v61 = vld [vmem:[%s0 + $0x14c] sm:$0xf]
  %v62 = vld [vmem:[%s0 + $0x150] sm:$0xff]
  %v63 = vld [vmem:[%s0 + $0x158] sm:$0xff]
  %v64 = vld [vmem:[%s0 + $0x160] sm:$0xff]
  %v65 = vld [vmem:[%s0 + $0x168] sm:$0xf]
  %v66 = vld [vmem:[%s0 + $0x16c] sm:$0xff]
  %v67 = vld [vmem:[%s0 + $0x174] sm:$0xff]
  %v68 = vld [vmem:[%s0 + $0x17c] sm:$0xff]
  %v69 = vld [vmem:[%s0 + $0x184] sm:$0xf]
  %v70 = vld [vmem:[%s0 + $0x188] sm:$0xff]
  %v71 = vld [vmem:[%s0 + $0x190] sm:$0xff]
  %v72 = vld [vmem:[%s0 + $0x198] sm:$0xff]
  %v73 = vld [vmem:[%s0 + $0x1a0] sm:$0xf]
  %v74 = vld [vmem:[%s0 + $0x1a4] sm:$0xff]
  %v75 = vld [vmem:[%s0 + $0x1ac] sm:$0xff]
  %v76 = vld [vmem:[%s0 + $0x1b4] sm:$0xff]
  %v77 = vld [vmem:[%s0 + $0x1bc] sm:$0xf]
  %v78 = vld [vmem:[%s0 + $0x1c0] sm:$0xff]
  %v79 = vld [vmem:[%s0 + $0x1c8] sm:$0xff]
  %v80 = vld [vmem:[%s0 + $0x1d0] sm:$0xff]
  %v81 = vld [vmem:[%s0 + $0x1d8] sm:$0xf]
  %v82 = vld [vmem:[%s0 + $0x1dc] sm:$0xff]
  %v83 = vld [vmem:[%s0 + $0x1e4] sm:$0xff]
  %v84 = vld [vmem:[%s0 + $0x1ec] sm:$0xff]
  %v85 = vld [vmem:[%s0 + $0x1f4] sm:$0xf]
  %v86 = vld [vmem:[%s0 + $0x1f8] sm:$0xff]
  %v87 = vld [vmem:[%s0 + $0x200] sm:$0xff]
  %v88 = vld [vmem:[%s0 + $0x208] sm:$0xff]
  %v89 = vld [vmem:[%s0 + $0x210] sm:$0xf]
  %v90 = vld [vmem:[%s0 + $0x214] sm:$0xff]
  %v91 = vld [vmem:[%s0 + $0x21c] sm:$0xff]
  %v92 = vld [vmem:[%s0 + $0x224] sm:$0xff]
  %v93 = vld [vmem:[%s0 + $0x22c] sm:$0xf]
  %v94 = vld [vmem:[%s0 + $0x230] sm:$0xff]
  %v95 = vld [vmem:[%s0 + $0x238] sm:$0xff]
  %v96 = vld [vmem:[%s0 + $0x240] sm:$0xff]
  %v97 = vld [vmem:[%s0 + $0x248] sm:$0xf]
  %v98 = vld [vmem:[%s0 + $0x24c] sm:$0xff]
  %v99 = vld [vmem:[%s0 + $0x254] sm:$0xff]
  %v100 = vld [vmem:[%s0 + $0x25c] sm:$0xff]
  %v101 = vld [vmem:[%s0 + $0x264] sm:$0xf]
  %v102 = vld [vmem:[%s0 + $0x268] sm:$0xff]
  %v103 = vld [vmem:[%s0 + $0x270] sm:$0xff]
  %v104 = vld [vmem:[%s0 + $0x278] sm:$0xff]
  %v105 = vld [vmem:[%s0 + $0x280] sm:$0xf]
  %v106 = vld [vmem:[%s0 + $0x284] sm:$0xff]
  %v107 = vld [vmem:[%s0 + $0x28c] sm:$0xff]
  %v108 = vld [vmem:[%s0 + $0x294] sm:$0xff]
  %v109 = vld [vmem:[%s0 + $0x29c] sm:$0xf]
  %v110 = vld [vmem:[%s0 + $0x2a0] sm:$0xff]
  %v111 = vld [vmem:[%s0 + $0x2a8] sm:$0xff]
  %v112 = vld [vmem:[%s0 + $0x2b0] sm:$0xff]
  %v113 = vld [vmem:[%s0 + $0x2b8] sm:$0xf]
  %v114 = vld [vmem:[%s0 + $0x2bc] sm:$0xff]
  %v115 = vld [vmem:[%s0 + $0x2c4] sm:$0xff]
  %v116 = vld [vmem:[%s0 + $0x2cc] sm:$0xff]
  %v117 = vld [vmem:[%s0 + $0x2d4] sm:$0xf]
  %v118 = vld [vmem:[%s0 + $0x2d8] sm:$0xff]
  %v119 = vld [vmem:[%s0 + $0x2e0] sm:$0xff]
  %v120 = vld [vmem:[%s0 + $0x2e8] sm:$0xff]
  %v121 = vld [vmem:[%s0 + $0x2f0] sm:$0xf]
  %v122 = vld [vmem:[%s0 + $0x2f4] sm:$0xff]
  %v123 = vld [vmem:[%s0 + $0x2fc] sm:$0xff]
  %v124 = vld [vmem:[%s0 + $0x304] sm:$0xff]
  %v125 = vld [vmem:[%s0 + $0x30c] sm:$0xf]
  %v126 = vld [vmem:[%s0 + $0x310] sm:$0xff]
  %v127 = vld [vmem:[%s0 + $0x318] sm:$0xff]
  %v128 = vld [vmem:[%s0 + $0x320] sm:$0xff]
  %v129 = vld [vmem:[%s0 + $0x328] sm:$0xf]
  %v130 = vld [vmem:[%s0 + $0x32c] sm:$0xff]
  %v131 = vld [vmem:[%s0 + $0x334] sm:$0xff]
  %v132 = vld [vmem:[%s0 + $0x33c] sm:$0xff]
  %v133 = vld [vmem:[%s0 + $0x344] sm:$0xf]
  %v134 = vld [vmem:[%s0 + $0x348] sm:$0xff]
  %v135 = vld [vmem:[%s0 + $0x350] sm:$0xff]
  %v136 = vld [vmem:[%s0 + $0x358] sm:$0xff]
  %v137 = vld [vmem:[%s0 + $0x360] sm:$0xf]
  %v138 = vld [vmem:[%s0 + $0x364] sm:$0xff]
  %v139 = vld [vmem:[%s0 + $0x36c] sm:$0xff]
  %v140 = vld [vmem:[%s0 + $0x374] sm:$0xff]
  %v141 = vld [vmem:[%s0 + $0x37c] sm:$0xf]
  %v142 = vld [vmem:[%s0 + $0x380] sm:$0xff]
  %v143 = vld [vmem:[%s0 + $0x388] sm:$0xff]
  %v144 = vld [vmem:[%s0 + $0x390] sm:$0xff]
  %v145 = vld [vmem:[%s0 + $0x398] sm:$0xf]
  %v146 = vld [vmem:[%s0 + $0x39c] sm:$0xff]
  %v147 = vld [vmem:[%s0 + $0x3a4] sm:$0xff]
  %v148 = vld [vmem:[%s0 + $0x3ac] sm:$0xff]
  %v149 = vld [vmem:[%s0 + $0x3b4] sm:$0xf]
  %v150 = vld [vmem:[%s0 + $0x3b8] sm:$0xff]
  %v151 = vld [vmem:[%s0 + $0x3c0] sm:$0xff]
  %v152 = vld [vmem:[%s0 + $0x3c8] sm:$0xff]
  %v153 = vld [vmem:[%s0 + $0x3d0] sm:$0xf]
  %v154 = vld [vmem:[%s0 + $0x3d4] sm:$0xff]
  %v155 = vld [vmem:[%s0 + $0x3dc] sm:$0xff]
  %v156 = vld [vmem:[%s0 + $0x3e4] sm:$0xff]
  %v157 = vld [vmem:[%s0 + $0x3ec] sm:$0xf]
  %v158 = vld [vmem:[%s0 + $0x3f0] sm:$0xff]
  %v159 = vld [vmem:[%s0 + $0x3f8] sm:$0xff]
  %v160 = vld [vmem:[%s0 + $0x400] sm:$0xff]
  %v161 = vld [vmem:[%s0 + $0x408] sm:$0xf]
  %v162 = vld [vmem:[%s0 + $0x40c] sm:$0xff]
  %v163 = vld [vmem:[%s0 + $0x414] sm:$0xff]
  %v164 = vld [vmem:[%s0 + $0x41c] sm:$0xff]
  %v165 = vld [vmem:[%s0 + $0x424] sm:$0xf]
  %v166 = vld [vmem:[%s0 + $0x428] sm:$0xff]
  %v167 = vld [vmem:[%s0 + $0x430] sm:$0xff]
  %v168 = vld [vmem:[%s0 + $0x438] sm:$0xff]
  %v169 = vld [vmem:[%s0 + $0x440] sm:$0xf]
  %v170 = vld [vmem:[%s0 + $0x444] sm:$0xff]
  %v171 = vld [vmem:[%s0 + $0x44c] sm:$0xff]
  %v172 = vld [vmem:[%s0 + $0x454] sm:$0xff]
  %v173 = vld [vmem:[%s0 + $0x45c] sm:$0xf]
  %v174 = vld [vmem:[%s0 + $0x460] sm:$0xff]
  %v175 = vld [vmem:[%s0 + $0x468] sm:$0xff]
  %v176 = vld [vmem:[%s0 + $0x470] sm:$0xff]
  %v177 = vld [vmem:[%s0 + $0x478] sm:$0xf]
  %v178 = vld [vmem:[%s0 + $0x47c] sm:$0xff]
  %v179 = vld [vmem:[%s0 + $0x484] sm:$0xff]
  %v180 = vld [vmem:[%s0 + $0x48c] sm:$0xff]
  %v181 = vld [vmem:[%s0 + $0x494] sm:$0xf]
  %v182 = vld [vmem:[%s0 + $0x498] sm:$0xff]
  %v183 = vld [vmem:[%s0 + $0x4a0] sm:$0xff]
  %v184 = vld [vmem:[%s0 + $0x4a8] sm:$0xff]
  %v185 = vld [vmem:[%s0 + $0x4b0] sm:$0xf]
  %v186 = vld [vmem:[%s0 + $0x4b4] sm:$0xff]
  %v187 = vld [vmem:[%s0 + $0x4bc] sm:$0xff]
  %v188 = vld [vmem:[%s0 + $0x4c4] sm:$0xff]
  %v189 = vld [vmem:[%s0 + $0x4cc] sm:$0xf]
  %v190 = vld [vmem:[%s0 + $0x4d0] sm:$0xff]
  %v191 = vld [vmem:[%s0 + $0x4d8] sm:$0xff]
  %v192 = vld [vmem:[%s0 + $0x4e0] sm:$0xff]
  %v193 = vld [vmem:[%s0 + $0x4e8] sm:$0xf]
  %v194 = vld [vmem:[%s0 + $0x4ec] sm:$0xff]
  %v195 = vld [vmem:[%s0 + $0x4f4] sm:$0xff]
  %v196 = vld [vmem:[%s0 + $0x4fc] sm:$0xff]
  %v197 = vld [vmem:[%s0 + $0x504] sm:$0xf]
  %v198 = vld [vmem:[%s0 + $0x508] sm:$0xff]
  %v199 = vld [vmem:[%s0 + $0x510] sm:$0xff]
  %v200 = vld [vmem:[%s0 + $0x518] sm:$0xff]
  %v201 = vld [vmem:[%s0 + $0x520] sm:$0xf]
  %v202 = vld [vmem:[%s0 + $0x524] sm:$0xff]
  %v203 = vld [vmem:[%s0 + $0x52c] sm:$0xff]
  %v204 = vld [vmem:[%s0 + $0x534] sm:$0xff]
  %v205 = vld [vmem:[%s0 + $0x53c] sm:$0xf]
  %v206 = vld [vmem:[%s0 + $0x540] sm:$0xff]
  %v207 = vld [vmem:[%s0 + $0x548] sm:$0xff]
  %v208 = vld [vmem:[%s0 + $0x550] sm:$0xff]
  %v209 = vld [vmem:[%s0 + $0x558] sm:$0xf]
  %v210 = vld [vmem:[%s0 + $0x55c] sm:$0xff]
  %v211 = vld [vmem:[%s0 + $0x564] sm:$0xff]
  %v212 = vld [vmem:[%s0 + $0x56c] sm:$0xff]
  %v213 = vld [vmem:[%s0 + $0x574] sm:$0xf]
  %v214 = vld [vmem:[%s0 + $0x578] sm:$0xff]
  %v215 = vld [vmem:[%s0 + $0x580] sm:$0xff]
  %v216 = vld [vmem:[%s0 + $0x588] sm:$0xff]
  %v217 = vld [vmem:[%s0 + $0x590] sm:$0xf]
  %v218 = vld [vmem:[%s0 + $0x594] sm:$0xff]
  %v219 = vld [vmem:[%s0 + $0x59c] sm:$0xff]
  %v220 = vld [vmem:[%s0 + $0x5a4] sm:$0xff]
  %v221 = vld [vmem:[%s0 + $0x5ac] sm:$0xf]
  %v222 = vld [vmem:[%s0 + $0x5b0] sm:$0xff]
  %v223 = vld [vmem:[%s0 + $0x5b8] sm:$0xff]
  %v224 = vld [vmem:[%s0 + $0x5c0] sm:$0xff]
  %v225 = vld [vmem:[%s0 + $0x5c8] sm:$0xf]
  %v226 = vld [vmem:[%s0 + $0x5cc] sm:$0xff]
  %v227 = vld [vmem:[%s0 + $0x5d4] sm:$0xff]
  %v228 = vld [vmem:[%s0 + $0x5dc] sm:$0xff]
  %v229 = vld [vmem:[%s0 + $0x5e4] sm:$0xf]
  %v230 = vld [vmem:[%s1] sm:$0xf]
  %v231 = vld [vmem:[%s1 + $0x4] sm:$0xf]
  %v232 = vld [vmem:[%s1 + $0x8] sm:$0xf]
  %v233 = vld [vmem:[%s1 + $0xc] sm:$0xf]
  %v234 = vld [vmem:[%s1 + $0x10] sm:$0xf]
  %v235 = vld [vmem:[%s1 + $0x14] sm:$0xf]
  %v236 = vld [vmem:[%s1 + $0x18] sm:$0xf]
  %v237 = vld [vmem:[%s1 + $0x1c] sm:$0xf]
  %v238 = vld [vmem:[%s1 + $0x20] sm:$0xf]
  %v239 = vld [vmem:[%s1 + $0x24] sm:$0xf]
  %v240 = vld [vmem:[%s1 + $0x28] sm:$0xf]
  %v241 = vld [vmem:[%s1 + $0x2c] sm:$0xf]
  %v242 = vld [vmem:[%s1 + $0x30] sm:$0xf]
  %v243 = vld [vmem:[%s1 + $0x34] sm:$0xf]
  %v244 = vld [vmem:[%s1 + $0x38] sm:$0xf]
  %v245 = vld [vmem:[%s1 + $0x3c] sm:$0xf]
  %v246 = vld [vmem:[%s1 + $0x40] sm:$0xf]
  %v247 = vld [vmem:[%s1 + $0x44] sm:$0xf]
  %v248 = vld [vmem:[%s1 + $0x48] sm:$0xf]
  %v249 = vld [vmem:[%s1 + $0x4c] sm:$0xf]
  %v250 = vld [vmem:[%s1 + $0x50] sm:$0xf]
  %v251 = vld [vmem:[%s1 + $0x54] sm:$0xf]
  %v252 = vld [vmem:[%s1 + $0x58] sm:$0xf]
  %v253 = vld [vmem:[%s1 + $0x5c] sm:$0xf]
  %v254 = vld [vmem:[%s1 + $0x60] sm:$0xf]
  %v255 = vld [vmem:[%s1 + $0x64] sm:$0xf]
  %v256 = vld [vmem:[%s1 + $0x68] sm:$0xf]
  %v257 = vld [vmem:[%s1 + $0x6c] sm:$0xf]
  %v258 = vld [vmem:[%s1 + $0x70] sm:$0xf]
  %v259 = vld [vmem:[%s1 + $0x74] sm:$0xf]
  %v260 = vld [vmem:[%s1 + $0x78] sm:$0xf]
  %v261 = vld [vmem:[%s1 + $0x7c] sm:$0xf]
  %v262 = vld [vmem:[%s1 + $0x80] sm:$0xf]
  %v263 = vld [vmem:[%s1 + $0x84] sm:$0xf]
  %v264 = vld [vmem:[%s1 + $0x88] sm:$0xf]
  %v265 = vld [vmem:[%s1 + $0x8c] sm:$0xf]
  %v266 = vld [vmem:[%s1 + $0x90] sm:$0xf]
  %v267 = vld [vmem:[%s1 + $0x94] sm:$0xf]
  %v268 = vld [vmem:[%s1 + $0x98] sm:$0xf]
  %v269 = vld [vmem:[%s1 + $0x9c] sm:$0xf]
  %v270 = vld [vmem:[%s1 + $0xa0] sm:$0xf]
  %v271 = vld [vmem:[%s1 + $0xa4] sm:$0xf]
  %v272 = vld [vmem:[%s1 + $0xa8] sm:$0xf]
  %v273 = vld [vmem:[%s1 + $0xac] sm:$0xf]
  %v274 = vld [vmem:[%s1 + $0xb0] sm:$0xf]
  %v275 = vld [vmem:[%s1 + $0xb4] sm:$0xf]
  %v276 = vld [vmem:[%s1 + $0xb8] sm:$0xf]
  %v277 = vld [vmem:[%s1 + $0xbc] sm:$0xf]
  %v278 = vld [vmem:[%s1 + $0xc0] sm:$0xf]
  %v279 = vld [vmem:[%s1 + $0xc4] sm:$0xf]
  %v280 = vld [vmem:[%s1 + $0xc8] sm:$0xf]
  %v281 = vld [vmem:[%s1 + $0xcc] sm:$0xf]
  %v282 = vld [vmem:[%s1 + $0xd0] sm:$0xf]
  %v283 = vld [vmem:[%s1 + $0xd4] sm:$0xf]
  %v284 = vld [vmem:[%s1 + $0xd8] sm:$0xf]
  %v285 = vld [vmem:[%s1 + $0xdc] sm:$0xf]
  %v286 = vld [vmem:[%s1 + $0xe0] sm:$0xf]
  %v287 = vld [vmem:[%s1 + $0xe4] sm:$0xf]
  %v288 = vld [vmem:[%s1 + $0xe8] sm:$0xf]
  %v289 = vld [vmem:[%s1 + $0xec] sm:$0xf]
  %v290 = vld [vmem:[%s1 + $0xf0] sm:$0xf]
  %v291 = vld [vmem:[%s1 + $0xf4] sm:$0xf]
  %v292 = vld [vmem:[%s1 + $0xf8] sm:$0xf]
  %v293 = vld [vmem:[%s1 + $0xfc] sm:$0xf]
  %v294 = vld [vmem:[%s1 + $0x100] sm:$0xf]
  %v295 = vld [vmem:[%s1 + $0x104] sm:$0xf]
  %v296 = vld [vmem:[%s1 + $0x108] sm:$0xf]
  %v297 = vld [vmem:[%s1 + $0x10c] sm:$0xf]
  %v298 = vld [vmem:[%s1 + $0x110] sm:$0xf]
  %v299 = vld [vmem:[%s1 + $0x114] sm:$0xf]
  %v300 = vld [vmem:[%s1 + $0x118] sm:$0xf]
  %v301 = vld [vmem:[%s1 + $0x11c] sm:$0xf]
  %v302 = vld [vmem:[%s1 + $0x120] sm:$0xf]
  %v303 = vld [vmem:[%s1 + $0x124] sm:$0xf]
  %v304 = vld [vmem:[%s1 + $0x128] sm:$0xf]
  %v305 = vld [vmem:[%s1 + $0x12c] sm:$0xf]
  %v306 = vld [vmem:[%s1 + $0x130] sm:$0xf]
  %v307 = vld [vmem:[%s1 + $0x134] sm:$0xf]
  %v308 = vld [vmem:[%s1 + $0x138] sm:$0xf]
  %v309 = vld [vmem:[%s1 + $0x13c] sm:$0xf]
  %v310 = vld [vmem:[%s1 + $0x140] sm:$0xf]
  %v311 = vld [vmem:[%s1 + $0x144] sm:$0xf]
  %v312 = vld [vmem:[%s1 + $0x148] sm:$0xf]
  %v313 = vld [vmem:[%s1 + $0x14c] sm:$0xf]
  %v314 = vld [vmem:[%s1 + $0x150] sm:$0xf]
  %v315 = vld [vmem:[%s1 + $0x154] sm:$0xf]
  %v316 = vld [vmem:[%s1 + $0x158] sm:$0xf]
  %v317 = vld [vmem:[%s1 + $0x15c] sm:$0xf]
  %v318 = vld [vmem:[%s1 + $0x160] sm:$0xf]
  %v319 = vld [vmem:[%s1 + $0x164] sm:$0xf]
  %v320 = vld [vmem:[%s1 + $0x168] sm:$0xf]
  %v321 = vld [vmem:[%s1 + $0x16c] sm:$0xf]
  %v322 = vld [vmem:[%s1 + $0x170] sm:$0xf]
  %v323 = vld [vmem:[%s1 + $0x174] sm:$0xf]
  %v324 = vld [vmem:[%s1 + $0x178] sm:$0xf]
  %v325 = vld [vmem:[%s1 + $0x17c] sm:$0xf]
  %v326 = vld [vmem:[%s1 + $0x180] sm:$0xf]
  %v327 = vld [vmem:[%s1 + $0x184] sm:$0xf]
  %v328 = vld [vmem:[%s1 + $0x188] sm:$0xf]
  %v329 = vld [vmem:[%s1 + $0x18c] sm:$0xf]
  %v330 = vld [vmem:[%s1 + $0x190] sm:$0xf]
  %v331 = vld [vmem:[%s1 + $0x194] sm:$0xf]
  %v332 = vld [vmem:[%s1 + $0x198] sm:$0xf]
  %v333 = vld [vmem:[%s1 + $0x19c] sm:$0xf]
  %v334 = vld [vmem:[%s1 + $0x1a0] sm:$0xf]
  %v335 = vld [vmem:[%s1 + $0x1a4] sm:$0xf]
  %v336 = vld [vmem:[%s1 + $0x1a8] sm:$0xf]
  %v337 = vld [vmem:[%s1 + $0x1ac] sm:$0xf]
  %v338 = vld [vmem:[%s1 + $0x1b0] sm:$0xf]
  %v339 = vld [vmem:[%s1 + $0x1b4] sm:$0xf]
  %v340 = vld [vmem:[%s1 + $0x1b8] sm:$0xf]
  %v341 = vld [vmem:[%s1 + $0x1bc] sm:$0xf]
  %v342 = vld [vmem:[%s2] sm:$0x1]
  %v344 = vperm.slane %v342, 0
  %v562 = vunpack.c.l.b16 %v14
  %v563 = vunpack.c.h.b16 %v14
  %v564 = vunpack.c.l.b16 %v15
  %v565 = vunpack.c.h.b16 %v15
  %v566 = vunpack.c.l.b16 %v16
  %v567 = vunpack.c.h.b16 %v16
  %v568 = vunpack.c.l.b16 %v17
  %v569 = vunpack.c.l.b16 %v18
  %v570 = vunpack.c.h.b16 %v18
  %v571 = vunpack.c.l.b16 %v19
  %v572 = vunpack.c.h.b16 %v19
  %v573 = vunpack.c.l.b16 %v20
  %v574 = vunpack.c.h.b16 %v20
  %v575 = vunpack.c.l.b16 %v21
  %v576 = vunpack.c.l.b16 %v22
  %v577 = vunpack.c.h.b16 %v22
  %v578 = vunpack.c.l.b16 %v23
  %v579 = vunpack.c.h.b16 %v23
  %v580 = vunpack.c.l.b16 %v24
  %v581 = vunpack.c.h.b16 %v24
  %v582 = vunpack.c.l.b16 %v25
  %v583 = vunpack.c.l.b16 %v26
  %v584 = vunpack.c.h.b16 %v26
  %v585 = vunpack.c.l.b16 %v27
  %v586 = vunpack.c.h.b16 %v27
  %v587 = vunpack.c.l.b16 %v28
  %v588 = vunpack.c.h.b16 %v28
  %v589 = vunpack.c.l.b16 %v29
  %v590 = vunpack.c.l.b16 %v30
  %v591 = vunpack.c.h.b16 %v30
  %v592 = vunpack.c.l.b16 %v31
  %v593 = vunpack.c.h.b16 %v31
  %v594 = vunpack.c.l.b16 %v32
  %v595 = vunpack.c.h.b16 %v32
  %v596 = vunpack.c.l.b16 %v33
  %v597 = vunpack.c.l.b16 %v34
  %v598 = vunpack.c.h.b16 %v34
  %v599 = vunpack.c.l.b16 %v35
  %v600 = vunpack.c.h.b16 %v35
  %v601 = vunpack.c.l.b16 %v36
  %v602 = vunpack.c.h.b16 %v36
  %v603 = vunpack.c.l.b16 %v37
  %v604 = vunpack.c.l.b16 %v38
  %v605 = vunpack.c.h.b16 %v38
  %v606 = vunpack.c.l.b16 %v39
  %v607 = vunpack.c.h.b16 %v39
  %v608 = vunpack.c.l.b16 %v40
  %v609 = vunpack.c.h.b16 %v40
  %v610 = vunpack.c.l.b16 %v41
  %v611 = vunpack.c.l.b16 %v42
  %v612 = vunpack.c.h.b16 %v42
  %v613 = vunpack.c.l.b16 %v43
  %v614 = vunpack.c.h.b16 %v43
  %v615 = vunpack.c.l.b16 %v44
  %v616 = vunpack.c.h.b16 %v44
  %v617 = vunpack.c.l.b16 %v45
  %v618 = vunpack.c.l.b16 %v46
  %v619 = vunpack.c.h.b16 %v46
  %v620 = vunpack.c.l.b16 %v47
  %v621 = vunpack.c.h.b16 %v47
  %v622 = vunpack.c.l.b16 %v48
  %v623 = vunpack.c.h.b16 %v48
  %v624 = vunpack.c.l.b16 %v49
  %v625 = vunpack.c.l.b16 %v50
  %v626 = vunpack.c.h.b16 %v50
  %v627 = vunpack.c.l.b16 %v51
  %v628 = vunpack.c.h.b16 %v51
  %v629 = vunpack.c.l.b16 %v52
  %v630 = vunpack.c.h.b16 %v52
  %v631 = vunpack.c.l.b16 %v53
  %v632 = vunpack.c.l.b16 %v54
  %v633 = vunpack.c.h.b16 %v54
  %v634 = vunpack.c.l.b16 %v55
  %v635 = vunpack.c.h.b16 %v55
  %v636 = vunpack.c.l.b16 %v56
  %v637 = vunpack.c.h.b16 %v56
  %v638 = vunpack.c.l.b16 %v57
  %v639 = vunpack.c.l.b16 %v58
  %v640 = vunpack.c.h.b16 %v58
  %v641 = vunpack.c.l.b16 %v59
  %v642 = vunpack.c.h.b16 %v59
  %v643 = vunpack.c.l.b16 %v60
  %v644 = vunpack.c.h.b16 %v60
  %v645 = vunpack.c.l.b16 %v61
  %v646 = vunpack.c.l.b16 %v62
  %v647 = vunpack.c.h.b16 %v62
  %v648 = vunpack.c.l.b16 %v63
  %v649 = vunpack.c.h.b16 %v63
  %v650 = vunpack.c.l.b16 %v64
  %v651 = vunpack.c.h.b16 %v64
  %v652 = vunpack.c.l.b16 %v65
  %v653 = vunpack.c.l.b16 %v66
  %v654 = vunpack.c.h.b16 %v66
  %v655 = vunpack.c.l.b16 %v67
  %v656 = vunpack.c.h.b16 %v67
  %v657 = vunpack.c.l.b16 %v68
  %v658 = vunpack.c.h.b16 %v68
  %v659 = vunpack.c.l.b16 %v69
  %v660 = vunpack.c.l.b16 %v70
  %v661 = vunpack.c.h.b16 %v70
  %v662 = vunpack.c.l.b16 %v71
  %v663 = vunpack.c.h.b16 %v71
  %v664 = vunpack.c.l.b16 %v72
  %v665 = vunpack.c.h.b16 %v72
  %v666 = vunpack.c.l.b16 %v73
  %v667 = vunpack.c.l.b16 %v74
  %v668 = vunpack.c.h.b16 %v74
  %v669 = vunpack.c.l.b16 %v75
  %v670 = vunpack.c.h.b16 %v75
  %v671 = vunpack.c.l.b16 %v76
  %v672 = vunpack.c.h.b16 %v76
  %v673 = vunpack.c.l.b16 %v77
  %v674 = vunpack.c.l.b16 %v78
  %v675 = vunpack.c.h.b16 %v78
  %v676 = vunpack.c.l.b16 %v79
  %v677 = vunpack.c.h.b16 %v79
  %v678 = vunpack.c.l.b16 %v80
  %v679 = vunpack.c.h.b16 %v80
  %v680 = vunpack.c.l.b16 %v81
  %v681 = vunpack.c.l.b16 %v82
  %v682 = vunpack.c.h.b16 %v82
  %v683 = vunpack.c.l.b16 %v83
  %v684 = vunpack.c.h.b16 %v83
  %v685 = vunpack.c.l.b16 %v84
  %v686 = vunpack.c.h.b16 %v84
  %v687 = vunpack.c.l.b16 %v85
  %v688 = vunpack.c.l.b16 %v86
  %v689 = vunpack.c.h.b16 %v86
  %v690 = vunpack.c.l.b16 %v87
  %v691 = vunpack.c.h.b16 %v87
  %v692 = vunpack.c.l.b16 %v88
  %v693 = vunpack.c.h.b16 %v88
  %v694 = vunpack.c.l.b16 %v89
  %v695 = vunpack.c.l.b16 %v90
  %v696 = vunpack.c.h.b16 %v90
  %v697 = vunpack.c.l.b16 %v91
  %v698 = vunpack.c.h.b16 %v91
  %v699 = vunpack.c.l.b16 %v92
  %v700 = vunpack.c.h.b16 %v92
  %v701 = vunpack.c.l.b16 %v93
  %v702 = vunpack.c.l.b16 %v94
  %v703 = vunpack.c.h.b16 %v94
  %v704 = vunpack.c.l.b16 %v95
  %v705 = vunpack.c.h.b16 %v95
  %v706 = vunpack.c.l.b16 %v96
  %v707 = vunpack.c.h.b16 %v96
  %v708 = vunpack.c.l.b16 %v97
  %v709 = vunpack.c.l.b16 %v98
  %v710 = vunpack.c.h.b16 %v98
  %v711 = vunpack.c.l.b16 %v99
  %v712 = vunpack.c.h.b16 %v99
  %v713 = vunpack.c.l.b16 %v100
  %v714 = vunpack.c.h.b16 %v100
  %v715 = vunpack.c.l.b16 %v101
  %v716 = vunpack.c.l.b16 %v102
  %v717 = vunpack.c.h.b16 %v102
  %v718 = vunpack.c.l.b16 %v103
  %v719 = vunpack.c.h.b16 %v103
  %v720 = vunpack.c.l.b16 %v104
  %v721 = vunpack.c.h.b16 %v104
  %v722 = vunpack.c.l.b16 %v105
  %v723 = vunpack.c.l.b16 %v106
  %v724 = vunpack.c.h.b16 %v106
  %v725 = vunpack.c.l.b16 %v107
  %v726 = vunpack.c.h.b16 %v107
  %v727 = vunpack.c.l.b16 %v108
  %v728 = vunpack.c.h.b16 %v108
  %v729 = vunpack.c.l.b16 %v109
  %v730 = vunpack.c.l.b16 %v110
  %v731 = vunpack.c.h.b16 %v110
  %v732 = vunpack.c.l.b16 %v111
  %v733 = vunpack.c.h.b16 %v111
  %v734 = vunpack.c.l.b16 %v112
  %v735 = vunpack.c.h.b16 %v112
  %v736 = vunpack.c.l.b16 %v113
  %v737 = vunpack.c.l.b16 %v114
  %v738 = vunpack.c.h.b16 %v114
  %v739 = vunpack.c.l.b16 %v115
  %v740 = vunpack.c.h.b16 %v115
  %v741 = vunpack.c.l.b16 %v116
  %v742 = vunpack.c.h.b16 %v116
  %v743 = vunpack.c.l.b16 %v117
  %v744 = vunpack.c.l.b16 %v118
  %v745 = vunpack.c.h.b16 %v118
  %v746 = vunpack.c.l.b16 %v119
  %v747 = vunpack.c.h.b16 %v119
  %v748 = vunpack.c.l.b16 %v120
  %v749 = vunpack.c.h.b16 %v120
  %v750 = vunpack.c.l.b16 %v121
  %v751 = vunpack.c.l.b16 %v122
  %v752 = vunpack.c.h.b16 %v122
  %v753 = vunpack.c.l.b16 %v123
  %v754 = vunpack.c.h.b16 %v123
  %v755 = vunpack.c.l.b16 %v124
  %v756 = vunpack.c.h.b16 %v124
  %v757 = vunpack.c.l.b16 %v125
  %v758 = vunpack.c.l.b16 %v126
  %v759 = vunpack.c.h.b16 %v126
  %v760 = vunpack.c.l.b16 %v127
  %v761 = vunpack.c.h.b16 %v127
  %v762 = vunpack.c.l.b16 %v128
  %v763 = vunpack.c.h.b16 %v128
  %v764 = vunpack.c.l.b16 %v129
  %v765 = vunpack.c.l.b16 %v130
  %v766 = vunpack.c.h.b16 %v130
  %v767 = vunpack.c.l.b16 %v131
  %v768 = vunpack.c.h.b16 %v131
  %v769 = vunpack.c.l.b16 %v132
  %v770 = vunpack.c.h.b16 %v132
  %v771 = vunpack.c.l.b16 %v133
  %v772 = vunpack.c.l.b16 %v134
  %v773 = vunpack.c.h.b16 %v134
  %v774 = vunpack.c.l.b16 %v135
  %v775 = vunpack.c.h.b16 %v135
  %v776 = vunpack.c.l.b16 %v136
  %v777 = vunpack.c.h.b16 %v136
  %v778 = vunpack.c.l.b16 %v137
  %v779 = vunpack.c.l.b16 %v138
  %v780 = vunpack.c.h.b16 %v138
  %v781 = vunpack.c.l.b16 %v139
  %v782 = vunpack.c.h.b16 %v139
  %v783 = vunpack.c.l.b16 %v140
  %v784 = vunpack.c.h.b16 %v140
  %v785 = vunpack.c.l.b16 %v141
  %v786 = vunpack.c.l.b16 %v142
  %v787 = vunpack.c.h.b16 %v142
  %v788 = vunpack.c.l.b16 %v143
  %v789 = vunpack.c.h.b16 %v143
  %v790 = vunpack.c.l.b16 %v144
  %v791 = vunpack.c.h.b16 %v144
  %v792 = vunpack.c.l.b16 %v145
  %v793 = vunpack.c.l.b16 %v146
  %v794 = vunpack.c.h.b16 %v146
  %v795 = vunpack.c.l.b16 %v147
  %v796 = vunpack.c.h.b16 %v147
  %v797 = vunpack.c.l.b16 %v148
  %v798 = vunpack.c.h.b16 %v148
  %v799 = vunpack.c.l.b16 %v149
  %v800 = vunpack.c.l.b16 %v150
  %v801 = vunpack.c.h.b16 %v150
  %v802 = vunpack.c.l.b16 %v151
  %v803 = vunpack.c.h.b16 %v151
  %v804 = vunpack.c.l.b16 %v152
  %v805 = vunpack.c.h.b16 %v152
  %v806 = vunpack.c.l.b16 %v153
  %v807 = vunpack.c.l.b16 %v154
  %v808 = vunpack.c.h.b16 %v154
  %v809 = vunpack.c.l.b16 %v155
  %v810 = vunpack.c.h.b16 %v155
  %v811 = vunpack.c.l.b16 %v156
  %v812 = vunpack.c.h.b16 %v156
  %v813 = vunpack.c.l.b16 %v157
  %v814 = vunpack.c.l.b16 %v158
  %v815 = vunpack.c.h.b16 %v158
  %v816 = vunpack.c.l.b16 %v159
  %v817 = vunpack.c.h.b16 %v159
  %v818 = vunpack.c.l.b16 %v160
  %v819 = vunpack.c.h.b16 %v160
  %v820 = vunpack.c.l.b16 %v161
  %v821 = vunpack.c.l.b16 %v162
  %v822 = vunpack.c.h.b16 %v162
  %v823 = vunpack.c.l.b16 %v163
  %v824 = vunpack.c.h.b16 %v163
  %v825 = vunpack.c.l.b16 %v164
  %v826 = vunpack.c.h.b16 %v164
  %v827 = vunpack.c.l.b16 %v165
  %v828 = vunpack.c.l.b16 %v166
  %v829 = vunpack.c.h.b16 %v166
  %v830 = vunpack.c.l.b16 %v167
  %v831 = vunpack.c.h.b16 %v167
  %v832 = vunpack.c.l.b16 %v168
  %v833 = vunpack.c.h.b16 %v168
  %v834 = vunpack.c.l.b16 %v169
  %v835 = vunpack.c.l.b16 %v170
  %v836 = vunpack.c.h.b16 %v170
  %v837 = vunpack.c.l.b16 %v171
  %v838 = vunpack.c.h.b16 %v171
  %v839 = vunpack.c.l.b16 %v172
  %v840 = vunpack.c.h.b16 %v172
  %v841 = vunpack.c.l.b16 %v173
  %v842 = vunpack.c.l.b16 %v174
  %v843 = vunpack.c.h.b16 %v174
  %v844 = vunpack.c.l.b16 %v175
  %v845 = vunpack.c.h.b16 %v175
  %v846 = vunpack.c.l.b16 %v176
  %v847 = vunpack.c.h.b16 %v176
  %v848 = vunpack.c.l.b16 %v177
  %v849 = vunpack.c.l.b16 %v178
  %v850 = vunpack.c.h.b16 %v178
  %v851 = vunpack.c.l.b16 %v179
  %v852 = vunpack.c.h.b16 %v179
  %v853 = vunpack.c.l.b16 %v180
  %v854 = vunpack.c.h.b16 %v180
  %v855 = vunpack.c.l.b16 %v181
  %v856 = vunpack.c.l.b16 %v182
  %v857 = vunpack.c.h.b16 %v182
  %v858 = vunpack.c.l.b16 %v183
  %v859 = vunpack.c.h.b16 %v183
  %v860 = vunpack.c.l.b16 %v184
  %v861 = vunpack.c.h.b16 %v184
  %v862 = vunpack.c.l.b16 %v185
  %v863 = vunpack.c.l.b16 %v186
  %v864 = vunpack.c.h.b16 %v186
  %v865 = vunpack.c.l.b16 %v187
  %v866 = vunpack.c.h.b16 %v187
  %v867 = vunpack.c.l.b16 %v188
  %v868 = vunpack.c.h.b16 %v188
  %v869 = vunpack.c.l.b16 %v189
  %v870 = vunpack.c.l.b16 %v190
  %v871 = vunpack.c.h.b16 %v190
  %v872 = vunpack.c.l.b16 %v191
  %v873 = vunpack.c.h.b16 %v191
  %v874 = vunpack.c.l.b16 %v192
  %v875 = vunpack.c.h.b16 %v192
  %v876 = vunpack.c.l.b16 %v193
  %v877 = vunpack.c.l.b16 %v194
  %v878 = vunpack.c.h.b16 %v194
  %v879 = vunpack.c.l.b16 %v195
  %v880 = vunpack.c.h.b16 %v195
  %v881 = vunpack.c.l.b16 %v196
  %v882 = vunpack.c.h.b16 %v196
  %v883 = vunpack.c.l.b16 %v197
  %v884 = vunpack.c.l.b16 %v198
  %v885 = vunpack.c.h.b16 %v198
  %v886 = vunpack.c.l.b16 %v199
  %v887 = vunpack.c.h.b16 %v199
  %v888 = vunpack.c.l.b16 %v200
  %v889 = vunpack.c.h.b16 %v200
  %v890 = vunpack.c.l.b16 %v201
  %v891 = vunpack.c.l.b16 %v202
  %v892 = vunpack.c.h.b16 %v202
  %v893 = vunpack.c.l.b16 %v203
  %v894 = vunpack.c.h.b16 %v203
  %v895 = vunpack.c.l.b16 %v204
  %v896 = vunpack.c.h.b16 %v204
  %v897 = vunpack.c.l.b16 %v205
  %v898 = vunpack.c.l.b16 %v206
  %v899 = vunpack.c.h.b16 %v206
  %v900 = vunpack.c.l.b16 %v207
  %v901 = vunpack.c.h.b16 %v207
  %v902 = vunpack.c.l.b16 %v208
  %v903 = vunpack.c.h.b16 %v208
  %v904 = vunpack.c.l.b16 %v209
  %v905 = vunpack.c.l.b16 %v210
  %v906 = vunpack.c.h.b16 %v210
  %v907 = vunpack.c.l.b16 %v211
  %v908 = vunpack.c.h.b16 %v211
  %v909 = vunpack.c.l.b16 %v212
  %v910 = vunpack.c.h.b16 %v212
  %v911 = vunpack.c.l.b16 %v213
  %v912 = vunpack.c.l.b16 %v214
  %v913 = vunpack.c.h.b16 %v214
  %v914 = vunpack.c.l.b16 %v215
  %v915 = vunpack.c.h.b16 %v215
  %v916 = vunpack.c.l.b16 %v216
  %v917 = vunpack.c.h.b16 %v216
  %v918 = vunpack.c.l.b16 %v217
  %v919 = vunpack.c.l.b16 %v218
  %v920 = vunpack.c.h.b16 %v218
  %v921 = vunpack.c.l.b16 %v219
  %v922 = vunpack.c.h.b16 %v219
  %v923 = vunpack.c.l.b16 %v220
  %v924 = vunpack.c.h.b16 %v220
  %v925 = vunpack.c.l.b16 %v221
  %v926 = vunpack.c.l.b16 %v222
  %v927 = vunpack.c.h.b16 %v222
  %v928 = vunpack.c.l.b16 %v223
  %v929 = vunpack.c.h.b16 %v223
  %v930 = vunpack.c.l.b16 %v224
  %v931 = vunpack.c.h.b16 %v224
  %v932 = vunpack.c.l.b16 %v225
  %v933 = vunpack.c.l.b16 %v226
  %v934 = vunpack.c.h.b16 %v226
  %v935 = vunpack.c.l.b16 %v227
  %v936 = vunpack.c.h.b16 %v227
  %v937 = vunpack.c.l.b16 %v228
  %v938 = vunpack.c.h.b16 %v228
  %v939 = vunpack.c.l.b16 %v229
  %v940 = vpack.c.b16 %v569, %v562
  %v941 = vpack.c.b16 %v570, %v563
  %v942 = vpack.c.b16 %v571, %v564
  %v943 = vpack.c.b16 %v572, %v565
  %v944 = vpack.c.b16 %v573, %v566
  %v945 = vpack.c.b16 %v574, %v567
  %v946 = vpack.c.b16 %v575, %v568
  %v947 = vpack.c.b16 %v583, %v576
  %v948 = vpack.c.b16 %v584, %v577
  %v949 = vpack.c.b16 %v585, %v578
  %v950 = vpack.c.b16 %v586, %v579
  %v951 = vpack.c.b16 %v587, %v580
  %v952 = vpack.c.b16 %v588, %v581
  %v953 = vpack.c.b16 %v589, %v582
  %v954 = vpack.c.b16 %v597, %v590
  %v955 = vpack.c.b16 %v598, %v591
  %v956 = vpack.c.b16 %v599, %v592
  %v957 = vpack.c.b16 %v600, %v593
  %v958 = vpack.c.b16 %v601, %v594
  %v959 = vpack.c.b16 %v602, %v595
  %v960 = vpack.c.b16 %v603, %v596
  %v961 = vpack.c.b16 %v611, %v604
  %v962 = vpack.c.b16 %v612, %v605
  %v963 = vpack.c.b16 %v613, %v606
  %v964 = vpack.c.b16 %v614, %v607
  %v965 = vpack.c.b16 %v615, %v608
  %v966 = vpack.c.b16 %v616, %v609
  %v967 = vpack.c.b16 %v617, %v610
  %v968 = vpack.c.b16 %v625, %v618
  %v969 = vpack.c.b16 %v626, %v619
  %v970 = vpack.c.b16 %v627, %v620
  %v971 = vpack.c.b16 %v628, %v621
  %v972 = vpack.c.b16 %v629, %v622
  %v973 = vpack.c.b16 %v630, %v623
  %v974 = vpack.c.b16 %v631, %v624
  %v975 = vpack.c.b16 %v639, %v632
  %v976 = vpack.c.b16 %v640, %v633
  %v977 = vpack.c.b16 %v641, %v634
  %v978 = vpack.c.b16 %v642, %v635
  %v979 = vpack.c.b16 %v643, %v636
  %v980 = vpack.c.b16 %v644, %v637
  %v981 = vpack.c.b16 %v645, %v638
  %v982 = vpack.c.b16 %v653, %v646
  %v983 = vpack.c.b16 %v654, %v647
  %v984 = vpack.c.b16 %v655, %v648
  %v985 = vpack.c.b16 %v656, %v649
  %v986 = vpack.c.b16 %v657, %v650
  %v987 = vpack.c.b16 %v658, %v651
  %v988 = vpack.c.b16 %v659, %v652
  %v989 = vpack.c.b16 %v667, %v660
  %v990 = vpack.c.b16 %v668, %v661
  %v991 = vpack.c.b16 %v669, %v662
  %v992 = vpack.c.b16 %v670, %v663
  %v993 = vpack.c.b16 %v671, %v664
  %v994 = vpack.c.b16 %v672, %v665
  %v995 = vpack.c.b16 %v673, %v666
  %v996 = vpack.c.b16 %v681, %v674
  %v997 = vpack.c.b16 %v682, %v675
  %v998 = vpack.c.b16 %v683, %v676
  %v999 = vpack.c.b16 %v684, %v677
  %v1000 = vpack.c.b16 %v685, %v678
  %v1001 = vpack.c.b16 %v686, %v679
  %v1002 = vpack.c.b16 %v687, %v680
  %v1003 = vpack.c.b16 %v695, %v688
  %v1004 = vpack.c.b16 %v696, %v689
  %v1005 = vpack.c.b16 %v697, %v690
  %v1006 = vpack.c.b16 %v698, %v691
  %v1007 = vpack.c.b16 %v699, %v692
  %v1008 = vpack.c.b16 %v700, %v693
  %v1009 = vpack.c.b16 %v701, %v694
  %v1010 = vpack.c.b16 %v709, %v702
  %v1011 = vpack.c.b16 %v710, %v703
  %v1012 = vpack.c.b16 %v711, %v704
  %v1013 = vpack.c.b16 %v712, %v705
  %v1014 = vpack.c.b16 %v713, %v706
  %v1015 = vpack.c.b16 %v714, %v707
  %v1016 = vpack.c.b16 %v715, %v708
  %v1017 = vpack.c.b16 %v723, %v716
  %v1018 = vpack.c.b16 %v724, %v717
  %v1019 = vpack.c.b16 %v725, %v718
  %v1020 = vpack.c.b16 %v726, %v719
  %v1021 = vpack.c.b16 %v727, %v720
  %v1022 = vpack.c.b16 %v728, %v721
  %v1023 = vpack.c.b16 %v729, %v722
  %v1024 = vpack.c.b16 %v737, %v730
  %v1025 = vpack.c.b16 %v738, %v731
  %v1026 = vpack.c.b16 %v739, %v732
  %v1027 = vpack.c.b16 %v740, %v733
  %v1028 = vpack.c.b16 %v741, %v734
  %v1029 = vpack.c.b16 %v742, %v735
  %v1030 = vpack.c.b16 %v743, %v736
  %v1031 = vpack.c.b16 %v751, %v744
  %v1032 = vpack.c.b16 %v752, %v745
  %v1033 = vpack.c.b16 %v753, %v746
  %v1034 = vpack.c.b16 %v754, %v747
  %v1035 = vpack.c.b16 %v755, %v748
  %v1036 = vpack.c.b16 %v756, %v749
  %v1037 = vpack.c.b16 %v757, %v750
  %v1038 = vpack.c.b16 %v765, %v758
  %v1039 = vpack.c.b16 %v766, %v759
  %v1040 = vpack.c.b16 %v767, %v760
  %v1041 = vpack.c.b16 %v768, %v761
  %v1042 = vpack.c.b16 %v769, %v762
  %v1043 = vpack.c.b16 %v770, %v763
  %v1044 = vpack.c.b16 %v771, %v764
  %v1045 = vpack.c.b16 %v779, %v772
  %v1046 = vpack.c.b16 %v780, %v773
  %v1047 = vpack.c.b16 %v781, %v774
  %v1048 = vpack.c.b16 %v782, %v775
  %v1049 = vpack.c.b16 %v783, %v776
  %v1050 = vpack.c.b16 %v784, %v777
  %v1051 = vpack.c.b16 %v785, %v778
  %v1052 = vpack.c.b16 %v793, %v786
  %v1053 = vpack.c.b16 %v794, %v787
  %v1054 = vpack.c.b16 %v795, %v788
  %v1055 = vpack.c.b16 %v796, %v789
  %v1056 = vpack.c.b16 %v797, %v790
  %v1057 = vpack.c.b16 %v798, %v791
  %v1058 = vpack.c.b16 %v799, %v792
  %v1059 = vpack.c.b16 %v807, %v800
  %v1060 = vpack.c.b16 %v808, %v801
  %v1061 = vpack.c.b16 %v809, %v802
  %v1062 = vpack.c.b16 %v810, %v803
  %v1063 = vpack.c.b16 %v811, %v804
  %v1064 = vpack.c.b16 %v812, %v805
  %v1065 = vpack.c.b16 %v813, %v806
  %v1066 = vpack.c.b16 %v821, %v814
  %v1067 = vpack.c.b16 %v822, %v815
  %v1068 = vpack.c.b16 %v823, %v816
  %v1069 = vpack.c.b16 %v824, %v817
  %v1070 = vpack.c.b16 %v825, %v818
  %v1071 = vpack.c.b16 %v826, %v819
  %v1072 = vpack.c.b16 %v827, %v820
  %v1073 = vpack.c.b16 %v835, %v828
  %v1074 = vpack.c.b16 %v836, %v829
  %v1075 = vpack.c.b16 %v837, %v830
  %v1076 = vpack.c.b16 %v838, %v831
  %v1077 = vpack.c.b16 %v839, %v832
  %v1078 = vpack.c.b16 %v840, %v833
  %v1079 = vpack.c.b16 %v841, %v834
  %v1080 = vpack.c.b16 %v849, %v842
  %v1081 = vpack.c.b16 %v850, %v843
  %v1082 = vpack.c.b16 %v851, %v844
  %v1083 = vpack.c.b16 %v852, %v845
  %v1084 = vpack.c.b16 %v853, %v846
  %v1085 = vpack.c.b16 %v854, %v847
  %v1086 = vpack.c.b16 %v855, %v848
  %v1087 = vpack.c.b16 %v863, %v856
  %v1088 = vpack.c.b16 %v864, %v857
  %v1089 = vpack.c.b16 %v865, %v858
  %v1090 = vpack.c.b16 %v866, %v859
  %v1091 = vpack.c.b16 %v867, %v860
  %v1092 = vpack.c.b16 %v868, %v861
  %v1093 = vpack.c.b16 %v869, %v862
  %v1094 = vpack.c.b16 %v877, %v870
  %v1095 = vpack.c.b16 %v878, %v871
  %v1096 = vpack.c.b16 %v879, %v872
  %v1097 = vpack.c.b16 %v880, %v873
  %v1098 = vpack.c.b16 %v881, %v874
  %v1099 = vpack.c.b16 %v882, %v875
  %v1100 = vpack.c.b16 %v883, %v876
  %v1101 = vpack.c.b16 %v891, %v884
  %v1102 = vpack.c.b16 %v892, %v885
  %v1103 = vpack.c.b16 %v893, %v886
  %v1104 = vpack.c.b16 %v894, %v887
  %v1105 = vpack.c.b16 %v895, %v888
  %v1106 = vpack.c.b16 %v896, %v889
  %v1107 = vpack.c.b16 %v897, %v890
  %v1108 = vpack.c.b16 %v905, %v898
  %v1109 = vpack.c.b16 %v906, %v899
  %v1110 = vpack.c.b16 %v907, %v900
  %v1111 = vpack.c.b16 %v908, %v901
  %v1112 = vpack.c.b16 %v909, %v902
  %v1113 = vpack.c.b16 %v910, %v903
  %v1114 = vpack.c.b16 %v911, %v904
  %v1115 = vpack.c.b16 %v919, %v912
  %v1116 = vpack.c.b16 %v920, %v913
  %v1117 = vpack.c.b16 %v921, %v914
  %v1118 = vpack.c.b16 %v922, %v915
  %v1119 = vpack.c.b16 %v923, %v916
  %v1120 = vpack.c.b16 %v924, %v917
  %v1121 = vpack.c.b16 %v925, %v918
  %v1122 = vpack.c.b16 %v933, %v926
  %v1123 = vpack.c.b16 %v934, %v927
  %v1124 = vpack.c.b16 %v935, %v928
  %v1125 = vpack.c.b16 %v936, %v929
  %v1126 = vpack.c.b16 %v937, %v930
  %v1127 = vpack.c.b16 %v938, %v931
  %v1128 = vpack.c.b16 %v939, %v932
  %v1430 = vunpack.c.l.b16 %v230
  %v1431 = vunpack.c.l.b16 %v231
  %v1432 = vunpack.c.l.b16 %v232
  %v1433 = vunpack.c.l.b16 %v233
  %v1434 = vunpack.c.l.b16 %v234
  %v1435 = vunpack.c.l.b16 %v235
  %v1436 = vunpack.c.l.b16 %v236
  %v1437 = vunpack.c.l.b16 %v237
  %v1438 = vunpack.c.l.b16 %v238
  %v1439 = vunpack.c.l.b16 %v239
  %v1440 = vunpack.c.l.b16 %v240
  %v1441 = vunpack.c.l.b16 %v241
  %v1442 = vunpack.c.l.b16 %v242
  %v1443 = vunpack.c.l.b16 %v243
  %v1444 = vunpack.c.l.b16 %v244
  %v1445 = vunpack.c.l.b16 %v245
  %v1446 = vunpack.c.l.b16 %v246
  %v1447 = vunpack.c.l.b16 %v247
  %v1448 = vunpack.c.l.b16 %v248
  %v1449 = vunpack.c.l.b16 %v249
  %v1450 = vunpack.c.l.b16 %v250
  %v1451 = vunpack.c.l.b16 %v251
  %v1452 = vunpack.c.l.b16 %v252
  %v1453 = vunpack.c.l.b16 %v253
  %v1454 = vunpack.c.l.b16 %v254
  %v1455 = vunpack.c.l.b16 %v255
  %v1456 = vunpack.c.l.b16 %v256
  %v1457 = vunpack.c.l.b16 %v257
  %v1458 = vunpack.c.l.b16 %v258
  %v1459 = vunpack.c.l.b16 %v259
  %v1460 = vunpack.c.l.b16 %v260
  %v1461 = vunpack.c.l.b16 %v261
  %v1462 = vunpack.c.l.b16 %v262
  %v1463 = vunpack.c.l.b16 %v263
  %v1464 = vunpack.c.l.b16 %v264
  %v1465 = vunpack.c.l.b16 %v265
  %v1466 = vunpack.c.l.b16 %v266
  %v1467 = vunpack.c.l.b16 %v267
  %v1468 = vunpack.c.l.b16 %v268
  %v1469 = vunpack.c.l.b16 %v269
  %v1470 = vunpack.c.l.b16 %v270
  %v1471 = vunpack.c.l.b16 %v271
  %v1472 = vunpack.c.l.b16 %v272
  %v1473 = vunpack.c.l.b16 %v273
  %v1474 = vunpack.c.l.b16 %v274
  %v1475 = vunpack.c.l.b16 %v275
  %v1476 = vunpack.c.l.b16 %v276
  %v1477 = vunpack.c.l.b16 %v277
  %v1478 = vunpack.c.l.b16 %v278
  %v1479 = vunpack.c.l.b16 %v279
  %v1480 = vunpack.c.l.b16 %v280
  %v1481 = vunpack.c.l.b16 %v281
  %v1482 = vunpack.c.l.b16 %v282
  %v1483 = vunpack.c.l.b16 %v283
  %v1484 = vunpack.c.l.b16 %v284
  %v1485 = vunpack.c.l.b16 %v285
  %v1486 = vunpack.c.l.b16 %v286
  %v1487 = vunpack.c.l.b16 %v287
  %v1488 = vunpack.c.l.b16 %v288
  %v1489 = vunpack.c.l.b16 %v289
  %v1490 = vunpack.c.l.b16 %v290
  %v1491 = vunpack.c.l.b16 %v291
  %v1492 = vunpack.c.l.b16 %v292
  %v1493 = vunpack.c.l.b16 %v293
  %v1494 = vunpack.c.l.b16 %v294
  %v1495 = vunpack.c.l.b16 %v295
  %v1496 = vunpack.c.l.b16 %v296
  %v1497 = vunpack.c.l.b16 %v297
  %v1498 = vunpack.c.l.b16 %v298
  %v1499 = vunpack.c.l.b16 %v299
  %v1500 = vunpack.c.l.b16 %v300
  %v1501 = vunpack.c.l.b16 %v301
  %v1502 = vunpack.c.l.b16 %v302
  %v1503 = vunpack.c.l.b16 %v303
  %v1504 = vunpack.c.l.b16 %v304
  %v1505 = vunpack.c.l.b16 %v305
  %v1506 = vunpack.c.l.b16 %v306
  %v1507 = vunpack.c.l.b16 %v307
  %v1508 = vunpack.c.l.b16 %v308
  %v1509 = vunpack.c.l.b16 %v309
  %v1510 = vunpack.c.l.b16 %v310
  %v1511 = vunpack.c.l.b16 %v311
  %v1512 = vunpack.c.l.b16 %v312
  %v1513 = vunpack.c.l.b16 %v313
  %v1514 = vunpack.c.l.b16 %v314
  %v1515 = vunpack.c.l.b16 %v315
  %v1516 = vunpack.c.l.b16 %v316
  %v1517 = vunpack.c.l.b16 %v317
  %v1518 = vunpack.c.l.b16 %v318
  %v1519 = vunpack.c.l.b16 %v319
  %v1520 = vunpack.c.l.b16 %v320
  %v1521 = vunpack.c.l.b16 %v321
  %v1522 = vunpack.c.l.b16 %v322
  %v1523 = vunpack.c.l.b16 %v323
  %v1524 = vunpack.c.l.b16 %v324
  %v1525 = vunpack.c.l.b16 %v325
  %v1526 = vunpack.c.l.b16 %v326
  %v1527 = vunpack.c.l.b16 %v327
  %v1528 = vunpack.c.l.b16 %v328
  %v1529 = vunpack.c.l.b16 %v329
  %v1530 = vunpack.c.l.b16 %v330
  %v1531 = vunpack.c.l.b16 %v331
  %v1532 = vunpack.c.l.b16 %v332
  %v1533 = vunpack.c.l.b16 %v333
  %v1534 = vunpack.c.l.b16 %v334
  %v1535 = vunpack.c.l.b16 %v335
  %v1536 = vunpack.c.l.b16 %v336
  %v1537 = vunpack.c.l.b16 %v337
  %v1538 = vunpack.c.l.b16 %v338
  %v1539 = vunpack.c.l.b16 %v339
  %v1540 = vunpack.c.l.b16 %v340
  %v1541 = vunpack.c.l.b16 %v341
  %v1542 = vpack.c.b16 %v1431, %v1430
  %v1543 = vpack.c.b16 %v1433, %v1432
  %v1544 = vpack.c.b16 %v1435, %v1434
  %v1545 = vpack.c.b16 %v1437, %v1436
  %v1546 = vpack.c.b16 %v1439, %v1438
  %v1547 = vpack.c.b16 %v1441, %v1440
  %v1548 = vpack.c.b16 %v1443, %v1442
  %v1549 = vpack.c.b16 %v1445, %v1444
  %v1550 = vpack.c.b16 %v1447, %v1446
  %v1551 = vpack.c.b16 %v1449, %v1448
  %v1552 = vpack.c.b16 %v1451, %v1450
  %v1553 = vpack.c.b16 %v1453, %v1452
  %v1554 = vpack.c.b16 %v1455, %v1454
  %v1555 = vpack.c.b16 %v1457, %v1456
  %v1556 = vpack.c.b16 %v1459, %v1458
  %v1557 = vpack.c.b16 %v1461, %v1460
  %v1558 = vpack.c.b16 %v1463, %v1462
  %v1559 = vpack.c.b16 %v1465, %v1464
  %v1560 = vpack.c.b16 %v1467, %v1466
  %v1561 = vpack.c.b16 %v1469, %v1468
  %v1562 = vpack.c.b16 %v1471, %v1470
  %v1563 = vpack.c.b16 %v1473, %v1472
  %v1564 = vpack.c.b16 %v1475, %v1474
  %v1565 = vpack.c.b16 %v1477, %v1476
  %v1566 = vpack.c.b16 %v1479, %v1478
  %v1567 = vpack.c.b16 %v1481, %v1480
  %v1568 = vpack.c.b16 %v1483, %v1482
  %v1569 = vpack.c.b16 %v1485, %v1484
  %v1570 = vpack.c.b16 %v1487, %v1486
  %v1571 = vpack.c.b16 %v1489, %v1488
  %v1572 = vpack.c.b16 %v1491, %v1490
  %v1573 = vpack.c.b16 %v1493, %v1492
  %v1574 = vpack.c.b16 %v1495, %v1494
  %v1575 = vpack.c.b16 %v1497, %v1496
  %v1576 = vpack.c.b16 %v1499, %v1498
  %v1577 = vpack.c.b16 %v1501, %v1500
  %v1578 = vpack.c.b16 %v1503, %v1502
  %v1579 = vpack.c.b16 %v1505, %v1504
  %v1580 = vpack.c.b16 %v1507, %v1506
  %v1581 = vpack.c.b16 %v1509, %v1508
  %v1582 = vpack.c.b16 %v1511, %v1510
  %v1583 = vpack.c.b16 %v1513, %v1512
  %v1584 = vpack.c.b16 %v1515, %v1514
  %v1585 = vpack.c.b16 %v1517, %v1516
  %v1586 = vpack.c.b16 %v1519, %v1518
  %v1587 = vpack.c.b16 %v1521, %v1520
  %v1588 = vpack.c.b16 %v1523, %v1522
  %v1589 = vpack.c.b16 %v1525, %v1524
  %v1590 = vpack.c.b16 %v1527, %v1526
  %v1591 = vpack.c.b16 %v1529, %v1528
  %v1592 = vpack.c.b16 %v1531, %v1530
  %v1593 = vpack.c.b16 %v1533, %v1532
  %v1594 = vpack.c.b16 %v1535, %v1534
  %v1595 = vpack.c.b16 %v1537, %v1536
  %v1596 = vpack.c.b16 %v1539, %v1538
  %v1597 = vpack.c.b16 %v1541, %v1540
  %1654 = vmatpush.bf16.msra.mxu0 %v1549
  %1655 = vmatpush.bf16.msra.mxu0 %v1548
  %1656 = vmatpush.bf16.msra.mxu0 %v1547
  %1657 = vmatpush.bf16.msra.mxu0 %v1546
  %1658 = vmatpush.bf16.msra.mxu0 %v1545
  %1659 = vmatpush.bf16.msra.mxu0 %v1544
  %1660 = vmatpush.bf16.msra.mxu0 %v1543
  %1661 = vmatpush.bf16.msra.mxu0 %v1542
  %1662 = vmatmul.bf16.gmra.mxu0 %v940
  %v1663 = vpop.f32.mrf.mxu0
  %v1664 = vadd.f32 %v344, %v1663
  %v1665 = vpop.f32.mrf.mxu0
  %v1666 = vadd.f32 %v344, %v1665
  %1667 = vmatmul.bf16.gmra.mxu0 %v947
  %v1668 = vpop.f32.mrf.mxu0
  %v1669 = vadd.f32 %v344, %v1668
  %v1670 = vpop.f32.mrf.mxu0
  %v1671 = vadd.f32 %v344, %v1670
  %1672 = vmatmul.bf16.gmra.mxu0 %v954
  %v1673 = vpop.f32.mrf.mxu0
  %v1674 = vadd.f32 %v344, %v1673
  %v1675 = vpop.f32.mrf.mxu0
  %v1676 = vadd.f32 %v344, %v1675
  %1677 = vmatmul.bf16.gmra.mxu0 %v961
  %v1678 = vpop.f32.mrf.mxu0
  %v1679 = vadd.f32 %v344, %v1678
  %v1680 = vpop.f32.mrf.mxu0
  %v1681 = vadd.f32 %v344, %v1680
  %1682 = vmatmul.bf16.gmra.mxu0 %v968
  %v1683 = vpop.f32.mrf.mxu0
  %v1684 = vadd.f32 %v344, %v1683
  %v1685 = vpop.f32.mrf.mxu0
  %v1686 = vadd.f32 %v344, %v1685
  %1687 = vmatmul.bf16.gmra.mxu0 %v975
  %v1688 = vpop.f32.mrf.mxu0
  %v1689 = vadd.f32 %v344, %v1688
  %v1690 = vpop.f32.mrf.mxu0
  %v1691 = vadd.f32 %v344, %v1690
  %1692 = vmatmul.bf16.gmra.mxu0 %v982
  %v1693 = vpop.f32.mrf.mxu0
  %v1694 = vadd.f32 %v344, %v1693
  %v1695 = vpop.f32.mrf.mxu0
  %v1696 = vadd.f32 %v344, %v1695
  %1697 = vmatmul.bf16.gmra.mxu0 %v989
  %v1698 = vpop.f32.mrf.mxu0
  %v1699 = vadd.f32 %v344, %v1698
  %v1700 = vpop.f32.mrf.mxu0
  %v1701 = vadd.f32 %v344, %v1700
  %1702 = vmatmul.bf16.gmra.mxu0 %v996
  %v1703 = vpop.f32.mrf.mxu0
  %v1704 = vadd.f32 %v344, %v1703
  %v1705 = vpop.f32.mrf.mxu0
  %v1706 = vadd.f32 %v344, %v1705
  %1707 = vmatmul.bf16.gmra.mxu0 %v1003
  %v1708 = vpop.f32.mrf.mxu0
  %v1709 = vadd.f32 %v344, %v1708
  %v1710 = vpop.f32.mrf.mxu0
  %v1711 = vadd.f32 %v344, %v1710
  %1712 = vmatmul.bf16.gmra.mxu0 %v1010
  %v1713 = vpop.f32.mrf.mxu0
  %v1714 = vadd.f32 %v344, %v1713
  %v1715 = vpop.f32.mrf.mxu0
  %v1716 = vadd.f32 %v344, %v1715
  %1717 = vmatmul.bf16.gmra.mxu0 %v1017
  %v1718 = vpop.f32.mrf.mxu0
  %v1719 = vadd.f32 %v344, %v1718
  %v1720 = vpop.f32.mrf.mxu0
  %v1721 = vadd.f32 %v344, %v1720
  %1722 = vmatmul.bf16.gmra.mxu0 %v1024
  %v1723 = vpop.f32.mrf.mxu0
  %v1724 = vadd.f32 %v344, %v1723
  %v1725 = vpop.f32.mrf.mxu0
  %v1726 = vadd.f32 %v344, %v1725
  %1727 = vmatmul.bf16.gmra.mxu0 %v1031
  %v1728 = vpop.f32.mrf.mxu0
  %v1729 = vadd.f32 %v344, %v1728
  %v1730 = vpop.f32.mrf.mxu0
  %v1731 = vadd.f32 %v344, %v1730
  %1732 = vmatmul.bf16.gmra.mxu0 %v1038
  %v1733 = vpop.f32.mrf.mxu0
  %v1734 = vadd.f32 %v344, %v1733
  %v1735 = vpop.f32.mrf.mxu0
  %v1736 = vadd.f32 %v344, %v1735
  %1737 = vmatmul.bf16.gmra.mxu0 %v1045
  %v1738 = vpop.f32.mrf.mxu0
  %v1739 = vadd.f32 %v344, %v1738
  %v1740 = vpop.f32.mrf.mxu0
  %v1741 = vadd.f32 %v344, %v1740
  %1742 = vmatmul.bf16.gmra.mxu0 %v1052
  %v1743 = vpop.f32.mrf.mxu0
  %v1744 = vadd.f32 %v344, %v1743
  %v1745 = vpop.f32.mrf.mxu0
  %v1746 = vadd.f32 %v344, %v1745
  %1747 = vmatmul.bf16.gmra.mxu0 %v1059
  %v1748 = vpop.f32.mrf.mxu0
  %v1749 = vadd.f32 %v344, %v1748
  %v1750 = vpop.f32.mrf.mxu0
  %v1751 = vadd.f32 %v344, %v1750
  %1752 = vmatmul.bf16.gmra.mxu0 %v1066
  %v1753 = vpop.f32.mrf.mxu0
  %v1754 = vadd.f32 %v344, %v1753
  %v1755 = vpop.f32.mrf.mxu0
  %v1756 = vadd.f32 %v344, %v1755
  %1757 = vmatmul.bf16.gmra.mxu0 %v1073
  %v1758 = vpop.f32.mrf.mxu0
  %v1759 = vadd.f32 %v344, %v1758
  %v1760 = vpop.f32.mrf.mxu0
  %v1761 = vadd.f32 %v344, %v1760
  %1762 = vmatmul.bf16.gmra.mxu0 %v1080
  %v1763 = vpop.f32.mrf.mxu0
  %v1764 = vadd.f32 %v344, %v1763
  %v1765 = vpop.f32.mrf.mxu0
  %v1766 = vadd.f32 %v344, %v1765
  %1767 = vmatmul.bf16.gmra.mxu0 %v1087
  %v1768 = vpop.f32.mrf.mxu0
  %v1769 = vadd.f32 %v344, %v1768
  %v1770 = vpop.f32.mrf.mxu0
  %v1771 = vadd.f32 %v344, %v1770
  %1772 = vmatmul.bf16.gmra.mxu0 %v1094
  %v1773 = vpop.f32.mrf.mxu0
  %v1774 = vadd.f32 %v344, %v1773
  %v1775 = vpop.f32.mrf.mxu0
  %v1776 = vadd.f32 %v344, %v1775
  %1777 = vmatmul.bf16.gmra.mxu0 %v1101
  %v1778 = vpop.f32.mrf.mxu0
  %v1779 = vadd.f32 %v344, %v1778
  %v1780 = vpop.f32.mrf.mxu0
  %v1781 = vadd.f32 %v344, %v1780
  %1782 = vmatmul.bf16.gmra.mxu0 %v1108
  %v1783 = vpop.f32.mrf.mxu0
  %v1784 = vadd.f32 %v344, %v1783
  %v1785 = vpop.f32.mrf.mxu0
  %v1786 = vadd.f32 %v344, %v1785
  %1787 = vmatmul.bf16.gmra.mxu0 %v1115
  %v1788 = vpop.f32.mrf.mxu0
  %v1789 = vadd.f32 %v344, %v1788
  %v1790 = vpop.f32.mrf.mxu0
  %v1791 = vadd.f32 %v344, %v1790
  %1792 = vmatmul.bf16.gmra.mxu0 %v1122
  %v1793 = vpop.f32.mrf.mxu0
  %v1794 = vadd.f32 %v344, %v1793
  %v1795 = vpop.f32.mrf.mxu0
  %v1796 = vadd.f32 %v344, %v1795
  %1797 = vdwg.mxu0
  %1798 = vmatpush.bf16.msra.mxu0 %v1557
  %1799 = vmatpush.bf16.msra.mxu0 %v1556
  %1800 = vmatpush.bf16.msra.mxu0 %v1555
  %1801 = vmatpush.bf16.msra.mxu0 %v1554
  %1802 = vmatpush.bf16.msra.mxu0 %v1553
  %1803 = vmatpush.bf16.msra.mxu0 %v1552
  %1804 = vmatpush.bf16.msra.mxu0 %v1551
  %1805 = vmatpush.bf16.msra.mxu0 %v1550
  %1806 = vmatmul.bf16.gmra.mxu0 %v941
  %v1807 = vpop.f32.mrf.mxu0
  %v1808 = vadd.f32 %v1664, %v1807
  %v1809 = vpop.f32.mrf.mxu0
  %v1810 = vadd.f32 %v1666, %v1809
  %1811 = vmatmul.bf16.gmra.mxu0 %v948
  %v1812 = vpop.f32.mrf.mxu0
  %v1813 = vadd.f32 %v1669, %v1812
  %v1814 = vpop.f32.mrf.mxu0
  %v1815 = vadd.f32 %v1671, %v1814
  %1816 = vmatmul.bf16.gmra.mxu0 %v955
  %v1817 = vpop.f32.mrf.mxu0
  %v1818 = vadd.f32 %v1674, %v1817
  %v1819 = vpop.f32.mrf.mxu0
  %v1820 = vadd.f32 %v1676, %v1819
  %1821 = vmatmul.bf16.gmra.mxu0 %v962
  %v1822 = vpop.f32.mrf.mxu0
  %v1823 = vadd.f32 %v1679, %v1822
  %v1824 = vpop.f32.mrf.mxu0
  %v1825 = vadd.f32 %v1681, %v1824
  %1826 = vmatmul.bf16.gmra.mxu0 %v969
  %v1827 = vpop.f32.mrf.mxu0
  %v1828 = vadd.f32 %v1684, %v1827
  %v1829 = vpop.f32.mrf.mxu0
  %v1830 = vadd.f32 %v1686, %v1829
  %1831 = vmatmul.bf16.gmra.mxu0 %v976
  %v1832 = vpop.f32.mrf.mxu0
  %v1833 = vadd.f32 %v1689, %v1832
  %v1834 = vpop.f32.mrf.mxu0
  %v1835 = vadd.f32 %v1691, %v1834
  %1836 = vmatmul.bf16.gmra.mxu0 %v983
  %v1837 = vpop.f32.mrf.mxu0
  %v1838 = vadd.f32 %v1694, %v1837
  %v1839 = vpop.f32.mrf.mxu0
  %v1840 = vadd.f32 %v1696, %v1839
  %1841 = vmatmul.bf16.gmra.mxu0 %v990
  %v1842 = vpop.f32.mrf.mxu0
  %v1843 = vadd.f32 %v1699, %v1842
  %v1844 = vpop.f32.mrf.mxu0
  %v1845 = vadd.f32 %v1701, %v1844
  %1846 = vmatmul.bf16.gmra.mxu0 %v997
  %v1847 = vpop.f32.mrf.mxu0
  %v1848 = vadd.f32 %v1704, %v1847
  %v1849 = vpop.f32.mrf.mxu0
  %v1850 = vadd.f32 %v1706, %v1849
  %1851 = vmatmul.bf16.gmra.mxu0 %v1004
  %v1852 = vpop.f32.mrf.mxu0
  %v1853 = vadd.f32 %v1709, %v1852
  %v1854 = vpop.f32.mrf.mxu0
  %v1855 = vadd.f32 %v1711, %v1854
  %1856 = vmatmul.bf16.gmra.mxu0 %v1011
  %v1857 = vpop.f32.mrf.mxu0
  %v1858 = vadd.f32 %v1714, %v1857
  %v1859 = vpop.f32.mrf.mxu0
  %v1860 = vadd.f32 %v1716, %v1859
  %1861 = vmatmul.bf16.gmra.mxu0 %v1018
  %v1862 = vpop.f32.mrf.mxu0
  %v1863 = vadd.f32 %v1719, %v1862
  %v1864 = vpop.f32.mrf.mxu0
  %v1865 = vadd.f32 %v1721, %v1864
  %1866 = vmatmul.bf16.gmra.mxu0 %v1025
  %v1867 = vpop.f32.mrf.mxu0
  %v1868 = vadd.f32 %v1724, %v1867
  %v1869 = vpop.f32.mrf.mxu0
  %v1870 = vadd.f32 %v1726, %v1869
  %1871 = vmatmul.bf16.gmra.mxu0 %v1032
  %v1872 = vpop.f32.mrf.mxu0
  %v1873 = vadd.f32 %v1729, %v1872
  %v1874 = vpop.f32.mrf.mxu0
  %v1875 = vadd.f32 %v1731, %v1874
  %1876 = vmatmul.bf16.gmra.mxu0 %v1039
  %v1877 = vpop.f32.mrf.mxu0
  %v1878 = vadd.f32 %v1734, %v1877
  %v1879 = vpop.f32.mrf.mxu0
  %v1880 = vadd.f32 %v1736, %v1879
  %1881 = vmatmul.bf16.gmra.mxu0 %v1046
  %v1882 = vpop.f32.mrf.mxu0
  %v1883 = vadd.f32 %v1739, %v1882
  %v1884 = vpop.f32.mrf.mxu0
  %v1885 = vadd.f32 %v1741, %v1884
  %1886 = vmatmul.bf16.gmra.mxu0 %v1053
  %v1887 = vpop.f32.mrf.mxu0
  %v1888 = vadd.f32 %v1744, %v1887
  %v1889 = vpop.f32.mrf.mxu0
  %v1890 = vadd.f32 %v1746, %v1889
  %1891 = vmatmul.bf16.gmra.mxu0 %v1060
  %v1892 = vpop.f32.mrf.mxu0
  %v1893 = vadd.f32 %v1749, %v1892
  %v1894 = vpop.f32.mrf.mxu0
  %v1895 = vadd.f32 %v1751, %v1894
  %1896 = vmatmul.bf16.gmra.mxu0 %v1067
  %v1897 = vpop.f32.mrf.mxu0
  %v1898 = vadd.f32 %v1754, %v1897
  %v1899 = vpop.f32.mrf.mxu0
  %v1900 = vadd.f32 %v1756, %v1899
  %1901 = vmatmul.bf16.gmra.mxu0 %v1074
  %v1902 = vpop.f32.mrf.mxu0
  %v1903 = vadd.f32 %v1759, %v1902
  %v1904 = vpop.f32.mrf.mxu0
  %v1905 = vadd.f32 %v1761, %v1904
  %1906 = vmatmul.bf16.gmra.mxu0 %v1081
  %v1907 = vpop.f32.mrf.mxu0
  %v1908 = vadd.f32 %v1764, %v1907
  %v1909 = vpop.f32.mrf.mxu0
  %v1910 = vadd.f32 %v1766, %v1909
  %1911 = vmatmul.bf16.gmra.mxu0 %v1088
  %v1912 = vpop.f32.mrf.mxu0
  %v1913 = vadd.f32 %v1769, %v1912
  %v1914 = vpop.f32.mrf.mxu0
  %v1915 = vadd.f32 %v1771, %v1914
  %1916 = vmatmul.bf16.gmra.mxu0 %v1095
  %v1917 = vpop.f32.mrf.mxu0
  %v1918 = vadd.f32 %v1774, %v1917
  %v1919 = vpop.f32.mrf.mxu0
  %v1920 = vadd.f32 %v1776, %v1919
  %1921 = vmatmul.bf16.gmra.mxu0 %v1102
  %v1922 = vpop.f32.mrf.mxu0
  %v1923 = vadd.f32 %v1779, %v1922
  %v1924 = vpop.f32.mrf.mxu0
  %v1925 = vadd.f32 %v1781, %v1924
  %1926 = vmatmul.bf16.gmra.mxu0 %v1109
  %v1927 = vpop.f32.mrf.mxu0
  %v1928 = vadd.f32 %v1784, %v1927
  %v1929 = vpop.f32.mrf.mxu0
  %v1930 = vadd.f32 %v1786, %v1929
  %1931 = vmatmul.bf16.gmra.mxu0 %v1116
  %v1932 = vpop.f32.mrf.mxu0
  %v1933 = vadd.f32 %v1789, %v1932
  %v1934 = vpop.f32.mrf.mxu0
  %v1935 = vadd.f32 %v1791, %v1934
  %1936 = vmatmul.bf16.gmra.mxu0 %v1123
  %v1937 = vpop.f32.mrf.mxu0
  %v1938 = vadd.f32 %v1794, %v1937
  %v1939 = vpop.f32.mrf.mxu0
  %v1940 = vadd.f32 %v1796, %v1939
  %1941 = vdwg.mxu0
  %1942 = vmatpush.bf16.msra.mxu0 %v1565
  %1943 = vmatpush.bf16.msra.mxu0 %v1564
  %1944 = vmatpush.bf16.msra.mxu0 %v1563
  %1945 = vmatpush.bf16.msra.mxu0 %v1562
  %1946 = vmatpush.bf16.msra.mxu0 %v1561
  %1947 = vmatpush.bf16.msra.mxu0 %v1560
  %1948 = vmatpush.bf16.msra.mxu0 %v1559
  %1949 = vmatpush.bf16.msra.mxu0 %v1558
  %1950 = vmatmul.bf16.gmra.mxu0 %v942
  %v1951 = vpop.f32.mrf.mxu0
  %v1952 = vadd.f32 %v1808, %v1951
  %v1953 = vpop.f32.mrf.mxu0
  %v1954 = vadd.f32 %v1810, %v1953
  %1955 = vmatmul.bf16.gmra.mxu0 %v949
  %v1956 = vpop.f32.mrf.mxu0
  %v1957 = vadd.f32 %v1813, %v1956
  %v1958 = vpop.f32.mrf.mxu0
  %v1959 = vadd.f32 %v1815, %v1958
  %1960 = vmatmul.bf16.gmra.mxu0 %v956
  %v1961 = vpop.f32.mrf.mxu0
  %v1962 = vadd.f32 %v1818, %v1961
  %v1963 = vpop.f32.mrf.mxu0
  %v1964 = vadd.f32 %v1820, %v1963
  %1965 = vmatmul.bf16.gmra.mxu0 %v963
  %v1966 = vpop.f32.mrf.mxu0
  %v1967 = vadd.f32 %v1823, %v1966
  %v1968 = vpop.f32.mrf.mxu0
  %v1969 = vadd.f32 %v1825, %v1968
  %1970 = vmatmul.bf16.gmra.mxu0 %v970
  %v1971 = vpop.f32.mrf.mxu0
  %v1972 = vadd.f32 %v1828, %v1971
  %v1973 = vpop.f32.mrf.mxu0
  %v1974 = vadd.f32 %v1830, %v1973
  %1975 = vmatmul.bf16.gmra.mxu0 %v977
  %v1976 = vpop.f32.mrf.mxu0
  %v1977 = vadd.f32 %v1833, %v1976
  %v1978 = vpop.f32.mrf.mxu0
  %v1979 = vadd.f32 %v1835, %v1978
  %1980 = vmatmul.bf16.gmra.mxu0 %v984
  %v1981 = vpop.f32.mrf.mxu0
  %v1982 = vadd.f32 %v1838, %v1981
  %v1983 = vpop.f32.mrf.mxu0
  %v1984 = vadd.f32 %v1840, %v1983
  %1985 = vmatmul.bf16.gmra.mxu0 %v991
  %v1986 = vpop.f32.mrf.mxu0
  %v1987 = vadd.f32 %v1843, %v1986
  %v1988 = vpop.f32.mrf.mxu0
  %v1989 = vadd.f32 %v1845, %v1988
  %1990 = vmatmul.bf16.gmra.mxu0 %v998
  %v1991 = vpop.f32.mrf.mxu0
  %v1992 = vadd.f32 %v1848, %v1991
  %v1993 = vpop.f32.mrf.mxu0
  %v1994 = vadd.f32 %v1850, %v1993
  %1995 = vmatmul.bf16.gmra.mxu0 %v1005
  %v1996 = vpop.f32.mrf.mxu0
  %v1997 = vadd.f32 %v1853, %v1996
  %v1998 = vpop.f32.mrf.mxu0
  %v1999 = vadd.f32 %v1855, %v1998
  %2000 = vmatmul.bf16.gmra.mxu0 %v1012
  %v2001 = vpop.f32.mrf.mxu0
  %v2002 = vadd.f32 %v1858, %v2001
  %v2003 = vpop.f32.mrf.mxu0
  %v2004 = vadd.f32 %v1860, %v2003
  %2005 = vmatmul.bf16.gmra.mxu0 %v1019
  %v2006 = vpop.f32.mrf.mxu0
  %v2007 = vadd.f32 %v1863, %v2006
  %v2008 = vpop.f32.mrf.mxu0
  %v2009 = vadd.f32 %v1865, %v2008
  %2010 = vmatmul.bf16.gmra.mxu0 %v1026
  %v2011 = vpop.f32.mrf.mxu0
  %v2012 = vadd.f32 %v1868, %v2011
  %v2013 = vpop.f32.mrf.mxu0
  %v2014 = vadd.f32 %v1870, %v2013
  %2015 = vmatmul.bf16.gmra.mxu0 %v1033
  %v2016 = vpop.f32.mrf.mxu0
  %v2017 = vadd.f32 %v1873, %v2016
  %v2018 = vpop.f32.mrf.mxu0
  %v2019 = vadd.f32 %v1875, %v2018
  %2020 = vmatmul.bf16.gmra.mxu0 %v1040
  %v2021 = vpop.f32.mrf.mxu0
  %v2022 = vadd.f32 %v1878, %v2021
  %v2023 = vpop.f32.mrf.mxu0
  %v2024 = vadd.f32 %v1880, %v2023
  %2025 = vmatmul.bf16.gmra.mxu0 %v1047
  %v2026 = vpop.f32.mrf.mxu0
  %v2027 = vadd.f32 %v1883, %v2026
  %v2028 = vpop.f32.mrf.mxu0
  %v2029 = vadd.f32 %v1885, %v2028
  %2030 = vmatmul.bf16.gmra.mxu0 %v1054
  %v2031 = vpop.f32.mrf.mxu0
  %v2032 = vadd.f32 %v1888, %v2031
  %v2033 = vpop.f32.mrf.mxu0
  %v2034 = vadd.f32 %v1890, %v2033
  %2035 = vmatmul.bf16.gmra.mxu0 %v1061
  %v2036 = vpop.f32.mrf.mxu0
  %v2037 = vadd.f32 %v1893, %v2036
  %v2038 = vpop.f32.mrf.mxu0
  %v2039 = vadd.f32 %v1895, %v2038
  %2040 = vmatmul.bf16.gmra.mxu0 %v1068
  %v2041 = vpop.f32.mrf.mxu0
  %v2042 = vadd.f32 %v1898, %v2041
  %v2043 = vpop.f32.mrf.mxu0
  %v2044 = vadd.f32 %v1900, %v2043
  %2045 = vmatmul.bf16.gmra.mxu0 %v1075
  %v2046 = vpop.f32.mrf.mxu0
  %v2047 = vadd.f32 %v1903, %v2046
  %v2048 = vpop.f32.mrf.mxu0
  %v2049 = vadd.f32 %v1905, %v2048
  %2050 = vmatmul.bf16.gmra.mxu0 %v1082
  %v2051 = vpop.f32.mrf.mxu0
  %v2052 = vadd.f32 %v1908, %v2051
  %v2053 = vpop.f32.mrf.mxu0
  %v2054 = vadd.f32 %v1910, %v2053
  %2055 = vmatmul.bf16.gmra.mxu0 %v1089
  %v2056 = vpop.f32.mrf.mxu0
  %v2057 = vadd.f32 %v1913, %v2056
  %v2058 = vpop.f32.mrf.mxu0
  %v2059 = vadd.f32 %v1915, %v2058
  %2060 = vmatmul.bf16.gmra.mxu0 %v1096
  %v2061 = vpop.f32.mrf.mxu0
  %v2062 = vadd.f32 %v1918, %v2061
  %v2063 = vpop.f32.mrf.mxu0
  %v2064 = vadd.f32 %v1920, %v2063
  %2065 = vmatmul.bf16.gmra.mxu0 %v1103
  %v2066 = vpop.f32.mrf.mxu0
  %v2067 = vadd.f32 %v1923, %v2066
  %v2068 = vpop.f32.mrf.mxu0
  %v2069 = vadd.f32 %v1925, %v2068
  %2070 = vmatmul.bf16.gmra.mxu0 %v1110
  %v2071 = vpop.f32.mrf.mxu0
  %v2072 = vadd.f32 %v1928, %v2071
  %v2073 = vpop.f32.mrf.mxu0
  %v2074 = vadd.f32 %v1930, %v2073
  %2075 = vmatmul.bf16.gmra.mxu0 %v1117
  %v2076 = vpop.f32.mrf.mxu0
  %v2077 = vadd.f32 %v1933, %v2076
  %v2078 = vpop.f32.mrf.mxu0
  %v2079 = vadd.f32 %v1935, %v2078
  %2080 = vmatmul.bf16.gmra.mxu0 %v1124
  %v2081 = vpop.f32.mrf.mxu0
  %v2082 = vadd.f32 %v1938, %v2081
  %v2083 = vpop.f32.mrf.mxu0
  %v2084 = vadd.f32 %v1940, %v2083
  %2085 = vdwg.mxu0
  %2086 = vmatpush.bf16.msra.mxu0 %v1573
  %2087 = vmatpush.bf16.msra.mxu0 %v1572
  %2088 = vmatpush.bf16.msra.mxu0 %v1571
  %2089 = vmatpush.bf16.msra.mxu0 %v1570
  %2090 = vmatpush.bf16.msra.mxu0 %v1569
  %2091 = vmatpush.bf16.msra.mxu0 %v1568
  %2092 = vmatpush.bf16.msra.mxu0 %v1567
  %2093 = vmatpush.bf16.msra.mxu0 %v1566
  %2094 = vmatmul.bf16.gmra.mxu0 %v943
  %v2095 = vpop.f32.mrf.mxu0
  %v2096 = vadd.f32 %v1952, %v2095
  %v2097 = vpop.f32.mrf.mxu0
  %v2098 = vadd.f32 %v1954, %v2097
  %2099 = vmatmul.bf16.gmra.mxu0 %v950
  %v2100 = vpop.f32.mrf.mxu0
  %v2101 = vadd.f32 %v1957, %v2100
  %v2102 = vpop.f32.mrf.mxu0
  %v2103 = vadd.f32 %v1959, %v2102
  %2104 = vmatmul.bf16.gmra.mxu0 %v957
  %v2105 = vpop.f32.mrf.mxu0
  %v2106 = vadd.f32 %v1962, %v2105
  %v2107 = vpop.f32.mrf.mxu0
  %v2108 = vadd.f32 %v1964, %v2107
  %2109 = vmatmul.bf16.gmra.mxu0 %v964
  %v2110 = vpop.f32.mrf.mxu0
  %v2111 = vadd.f32 %v1967, %v2110
  %v2112 = vpop.f32.mrf.mxu0
  %v2113 = vadd.f32 %v1969, %v2112
  %2114 = vmatmul.bf16.gmra.mxu0 %v971
  %v2115 = vpop.f32.mrf.mxu0
  %v2116 = vadd.f32 %v1972, %v2115
  %v2117 = vpop.f32.mrf.mxu0
  %v2118 = vadd.f32 %v1974, %v2117
  %2119 = vmatmul.bf16.gmra.mxu0 %v978
  %v2120 = vpop.f32.mrf.mxu0
  %v2121 = vadd.f32 %v1977, %v2120
  %v2122 = vpop.f32.mrf.mxu0
  %v2123 = vadd.f32 %v1979, %v2122
  %2124 = vmatmul.bf16.gmra.mxu0 %v985
  %v2125 = vpop.f32.mrf.mxu0
  %v2126 = vadd.f32 %v1982, %v2125
  %v2127 = vpop.f32.mrf.mxu0
  %v2128 = vadd.f32 %v1984, %v2127
  %2129 = vmatmul.bf16.gmra.mxu0 %v992
  %v2130 = vpop.f32.mrf.mxu0
  %v2131 = vadd.f32 %v1987, %v2130
  %v2132 = vpop.f32.mrf.mxu0
  %v2133 = vadd.f32 %v1989, %v2132
  %2134 = vmatmul.bf16.gmra.mxu0 %v999
  %v2135 = vpop.f32.mrf.mxu0
  %v2136 = vadd.f32 %v1992, %v2135
  %v2137 = vpop.f32.mrf.mxu0
  %v2138 = vadd.f32 %v1994, %v2137
  %2139 = vmatmul.bf16.gmra.mxu0 %v1006
  %v2140 = vpop.f32.mrf.mxu0
  %v2141 = vadd.f32 %v1997, %v2140
  %v2142 = vpop.f32.mrf.mxu0
  %v2143 = vadd.f32 %v1999, %v2142
  %2144 = vmatmul.bf16.gmra.mxu0 %v1013
  %v2145 = vpop.f32.mrf.mxu0
  %v2146 = vadd.f32 %v2002, %v2145
  %v2147 = vpop.f32.mrf.mxu0
  %v2148 = vadd.f32 %v2004, %v2147
  %2149 = vmatmul.bf16.gmra.mxu0 %v1020
  %v2150 = vpop.f32.mrf.mxu0
  %v2151 = vadd.f32 %v2007, %v2150
  %v2152 = vpop.f32.mrf.mxu0
  %v2153 = vadd.f32 %v2009, %v2152
  %2154 = vmatmul.bf16.gmra.mxu0 %v1027
  %v2155 = vpop.f32.mrf.mxu0
  %v2156 = vadd.f32 %v2012, %v2155
  %v2157 = vpop.f32.mrf.mxu0
  %v2158 = vadd.f32 %v2014, %v2157
  %2159 = vmatmul.bf16.gmra.mxu0 %v1034
  %v2160 = vpop.f32.mrf.mxu0
  %v2161 = vadd.f32 %v2017, %v2160
  %v2162 = vpop.f32.mrf.mxu0
  %v2163 = vadd.f32 %v2019, %v2162
  %2164 = vmatmul.bf16.gmra.mxu0 %v1041
  %v2165 = vpop.f32.mrf.mxu0
  %v2166 = vadd.f32 %v2022, %v2165
  %v2167 = vpop.f32.mrf.mxu0
  %v2168 = vadd.f32 %v2024, %v2167
  %2169 = vmatmul.bf16.gmra.mxu0 %v1048
  %v2170 = vpop.f32.mrf.mxu0
  %v2171 = vadd.f32 %v2027, %v2170
  %v2172 = vpop.f32.mrf.mxu0
  %v2173 = vadd.f32 %v2029, %v2172
  %2174 = vmatmul.bf16.gmra.mxu0 %v1055
  %v2175 = vpop.f32.mrf.mxu0
  %v2176 = vadd.f32 %v2032, %v2175
  %v2177 = vpop.f32.mrf.mxu0
  %v2178 = vadd.f32 %v2034, %v2177
  %2179 = vmatmul.bf16.gmra.mxu0 %v1062
  %v2180 = vpop.f32.mrf.mxu0
  %v2181 = vadd.f32 %v2037, %v2180
  %v2182 = vpop.f32.mrf.mxu0
  %v2183 = vadd.f32 %v2039, %v2182
  %2184 = vmatmul.bf16.gmra.mxu0 %v1069
  %v2185 = vpop.f32.mrf.mxu0
  %v2186 = vadd.f32 %v2042, %v2185
  %v2187 = vpop.f32.mrf.mxu0
  %v2188 = vadd.f32 %v2044, %v2187
  %2189 = vmatmul.bf16.gmra.mxu0 %v1076
  %v2190 = vpop.f32.mrf.mxu0
  %v2191 = vadd.f32 %v2047, %v2190
  %v2192 = vpop.f32.mrf.mxu0
  %v2193 = vadd.f32 %v2049, %v2192
  %2194 = vmatmul.bf16.gmra.mxu0 %v1083
  %v2195 = vpop.f32.mrf.mxu0
  %v2196 = vadd.f32 %v2052, %v2195
  %v2197 = vpop.f32.mrf.mxu0
  %v2198 = vadd.f32 %v2054, %v2197
  %2199 = vmatmul.bf16.gmra.mxu0 %v1090
  %v2200 = vpop.f32.mrf.mxu0
  %v2201 = vadd.f32 %v2057, %v2200
  %v2202 = vpop.f32.mrf.mxu0
  %v2203 = vadd.f32 %v2059, %v2202
  %2204 = vmatmul.bf16.gmra.mxu0 %v1097
  %v2205 = vpop.f32.mrf.mxu0
  %v2206 = vadd.f32 %v2062, %v2205
  %v2207 = vpop.f32.mrf.mxu0
  %v2208 = vadd.f32 %v2064, %v2207
  %2209 = vmatmul.bf16.gmra.mxu0 %v1104
  %v2210 = vpop.f32.mrf.mxu0
  %v2211 = vadd.f32 %v2067, %v2210
  %v2212 = vpop.f32.mrf.mxu0
  %v2213 = vadd.f32 %v2069, %v2212
  %2214 = vmatmul.bf16.gmra.mxu0 %v1111
  %v2215 = vpop.f32.mrf.mxu0
  %v2216 = vadd.f32 %v2072, %v2215
  %v2217 = vpop.f32.mrf.mxu0
  %v2218 = vadd.f32 %v2074, %v2217
  %2219 = vmatmul.bf16.gmra.mxu0 %v1118
  %v2220 = vpop.f32.mrf.mxu0
  %v2221 = vadd.f32 %v2077, %v2220
  %v2222 = vpop.f32.mrf.mxu0
  %v2223 = vadd.f32 %v2079, %v2222
  %2224 = vmatmul.bf16.gmra.mxu0 %v1125
  %v2225 = vpop.f32.mrf.mxu0
  %v2226 = vadd.f32 %v2082, %v2225
  %v2227 = vpop.f32.mrf.mxu0
  %v2228 = vadd.f32 %v2084, %v2227
  %2229 = vdwg.mxu0
  %2230 = vmatpush.bf16.msra.mxu0 %v1581
  %2231 = vmatpush.bf16.msra.mxu0 %v1580
  %2232 = vmatpush.bf16.msra.mxu0 %v1579
  %2233 = vmatpush.bf16.msra.mxu0 %v1578
  %2234 = vmatpush.bf16.msra.mxu0 %v1577
  %2235 = vmatpush.bf16.msra.mxu0 %v1576
  %2236 = vmatpush.bf16.msra.mxu0 %v1575
  %2237 = vmatpush.bf16.msra.mxu0 %v1574
  %2238 = vmatmul.bf16.gmra.mxu0 %v944
  %v2239 = vpop.f32.mrf.mxu0
  %v2240 = vadd.f32 %v2096, %v2239
  %v2241 = vpop.f32.mrf.mxu0
  %v2242 = vadd.f32 %v2098, %v2241
  %2243 = vmatmul.bf16.gmra.mxu0 %v951
  %v2244 = vpop.f32.mrf.mxu0
  %v2245 = vadd.f32 %v2101, %v2244
  %v2246 = vpop.f32.mrf.mxu0
  %v2247 = vadd.f32 %v2103, %v2246
  %2248 = vmatmul.bf16.gmra.mxu0 %v958
  %v2249 = vpop.f32.mrf.mxu0
  %v2250 = vadd.f32 %v2106, %v2249
  %v2251 = vpop.f32.mrf.mxu0
  %v2252 = vadd.f32 %v2108, %v2251
  %2253 = vmatmul.bf16.gmra.mxu0 %v965
  %v2254 = vpop.f32.mrf.mxu0
  %v2255 = vadd.f32 %v2111, %v2254
  %v2256 = vpop.f32.mrf.mxu0
  %v2257 = vadd.f32 %v2113, %v2256
  %2258 = vmatmul.bf16.gmra.mxu0 %v972
  %v2259 = vpop.f32.mrf.mxu0
  %v2260 = vadd.f32 %v2116, %v2259
  %v2261 = vpop.f32.mrf.mxu0
  %v2262 = vadd.f32 %v2118, %v2261
  %2263 = vmatmul.bf16.gmra.mxu0 %v979
  %v2264 = vpop.f32.mrf.mxu0
  %v2265 = vadd.f32 %v2121, %v2264
  %v2266 = vpop.f32.mrf.mxu0
  %v2267 = vadd.f32 %v2123, %v2266
  %2268 = vmatmul.bf16.gmra.mxu0 %v986
  %v2269 = vpop.f32.mrf.mxu0
  %v2270 = vadd.f32 %v2126, %v2269
  %v2271 = vpop.f32.mrf.mxu0
  %v2272 = vadd.f32 %v2128, %v2271
  %2273 = vmatmul.bf16.gmra.mxu0 %v993
  %v2274 = vpop.f32.mrf.mxu0
  %v2275 = vadd.f32 %v2131, %v2274
  %v2276 = vpop.f32.mrf.mxu0
  %v2277 = vadd.f32 %v2133, %v2276
  %2278 = vmatmul.bf16.gmra.mxu0 %v1000
  %v2279 = vpop.f32.mrf.mxu0
  %v2280 = vadd.f32 %v2136, %v2279
  %v2281 = vpop.f32.mrf.mxu0
  %v2282 = vadd.f32 %v2138, %v2281
  %2283 = vmatmul.bf16.gmra.mxu0 %v1007
  %v2284 = vpop.f32.mrf.mxu0
  %v2285 = vadd.f32 %v2141, %v2284
  %v2286 = vpop.f32.mrf.mxu0
  %v2287 = vadd.f32 %v2143, %v2286
  %2288 = vmatmul.bf16.gmra.mxu0 %v1014
  %v2289 = vpop.f32.mrf.mxu0
  %v2290 = vadd.f32 %v2146, %v2289
  %v2291 = vpop.f32.mrf.mxu0
  %v2292 = vadd.f32 %v2148, %v2291
  %2293 = vmatmul.bf16.gmra.mxu0 %v1021
  %v2294 = vpop.f32.mrf.mxu0
  %v2295 = vadd.f32 %v2151, %v2294
  %v2296 = vpop.f32.mrf.mxu0
  %v2297 = vadd.f32 %v2153, %v2296
  %2298 = vmatmul.bf16.gmra.mxu0 %v1028
  %v2299 = vpop.f32.mrf.mxu0
  %v2300 = vadd.f32 %v2156, %v2299
  %v2301 = vpop.f32.mrf.mxu0
  %v2302 = vadd.f32 %v2158, %v2301
  %2303 = vmatmul.bf16.gmra.mxu0 %v1035
  %v2304 = vpop.f32.mrf.mxu0
  %v2305 = vadd.f32 %v2161, %v2304
  %v2306 = vpop.f32.mrf.mxu0
  %v2307 = vadd.f32 %v2163, %v2306
  %2308 = vmatmul.bf16.gmra.mxu0 %v1042
  %v2309 = vpop.f32.mrf.mxu0
  %v2310 = vadd.f32 %v2166, %v2309
  %v2311 = vpop.f32.mrf.mxu0
  %v2312 = vadd.f32 %v2168, %v2311
  %2313 = vmatmul.bf16.gmra.mxu0 %v1049
  %v2314 = vpop.f32.mrf.mxu0
  %v2315 = vadd.f32 %v2171, %v2314
  %v2316 = vpop.f32.mrf.mxu0
  %v2317 = vadd.f32 %v2173, %v2316
  %2318 = vmatmul.bf16.gmra.mxu0 %v1056
  %v2319 = vpop.f32.mrf.mxu0
  %v2320 = vadd.f32 %v2176, %v2319
  %v2321 = vpop.f32.mrf.mxu0
  %v2322 = vadd.f32 %v2178, %v2321
  %2323 = vmatmul.bf16.gmra.mxu0 %v1063
  %v2324 = vpop.f32.mrf.mxu0
  %v2325 = vadd.f32 %v2181, %v2324
  %v2326 = vpop.f32.mrf.mxu0
  %v2327 = vadd.f32 %v2183, %v2326
  %2328 = vmatmul.bf16.gmra.mxu0 %v1070
  %v2329 = vpop.f32.mrf.mxu0
  %v2330 = vadd.f32 %v2186, %v2329
  %v2331 = vpop.f32.mrf.mxu0
  %v2332 = vadd.f32 %v2188, %v2331
  %2333 = vmatmul.bf16.gmra.mxu0 %v1077
  %v2334 = vpop.f32.mrf.mxu0
  %v2335 = vadd.f32 %v2191, %v2334
  %v2336 = vpop.f32.mrf.mxu0
  %v2337 = vadd.f32 %v2193, %v2336
  %2338 = vmatmul.bf16.gmra.mxu0 %v1084
  %v2339 = vpop.f32.mrf.mxu0
  %v2340 = vadd.f32 %v2196, %v2339
  %v2341 = vpop.f32.mrf.mxu0
  %v2342 = vadd.f32 %v2198, %v2341
  %2343 = vmatmul.bf16.gmra.mxu0 %v1091
  %v2344 = vpop.f32.mrf.mxu0
  %v2345 = vadd.f32 %v2201, %v2344
  %v2346 = vpop.f32.mrf.mxu0
  %v2347 = vadd.f32 %v2203, %v2346
  %2348 = vmatmul.bf16.gmra.mxu0 %v1098
  %v2349 = vpop.f32.mrf.mxu0
  %v2350 = vadd.f32 %v2206, %v2349
  %v2351 = vpop.f32.mrf.mxu0
  %v2352 = vadd.f32 %v2208, %v2351
  %2353 = vmatmul.bf16.gmra.mxu0 %v1105
  %v2354 = vpop.f32.mrf.mxu0
  %v2355 = vadd.f32 %v2211, %v2354
  %v2356 = vpop.f32.mrf.mxu0
  %v2357 = vadd.f32 %v2213, %v2356
  %2358 = vmatmul.bf16.gmra.mxu0 %v1112
  %v2359 = vpop.f32.mrf.mxu0
  %v2360 = vadd.f32 %v2216, %v2359
  %v2361 = vpop.f32.mrf.mxu0
  %v2362 = vadd.f32 %v2218, %v2361
  %2363 = vmatmul.bf16.gmra.mxu0 %v1119
  %v2364 = vpop.f32.mrf.mxu0
  %v2365 = vadd.f32 %v2221, %v2364
  %v2366 = vpop.f32.mrf.mxu0
  %v2367 = vadd.f32 %v2223, %v2366
  %2368 = vmatmul.bf16.gmra.mxu0 %v1126
  %v2369 = vpop.f32.mrf.mxu0
  %v2370 = vadd.f32 %v2226, %v2369
  %v2371 = vpop.f32.mrf.mxu0
  %v2372 = vadd.f32 %v2228, %v2371
  %2373 = vdwg.mxu0
  %2374 = vmatpush.bf16.msra.mxu0 %v1589
  %2375 = vmatpush.bf16.msra.mxu0 %v1588
  %2376 = vmatpush.bf16.msra.mxu0 %v1587
  %2377 = vmatpush.bf16.msra.mxu0 %v1586
  %2378 = vmatpush.bf16.msra.mxu0 %v1585
  %2379 = vmatpush.bf16.msra.mxu0 %v1584
  %2380 = vmatpush.bf16.msra.mxu0 %v1583
  %2381 = vmatpush.bf16.msra.mxu0 %v1582
  %2382 = vmatmul.bf16.gmra.mxu0 %v945
  %v2383 = vpop.f32.mrf.mxu0
  %v2384 = vadd.f32 %v2240, %v2383
  %v2385 = vpop.f32.mrf.mxu0
  %v2386 = vadd.f32 %v2242, %v2385
  %2387 = vmatmul.bf16.gmra.mxu0 %v952
  %v2388 = vpop.f32.mrf.mxu0
  %v2389 = vadd.f32 %v2245, %v2388
  %v2390 = vpop.f32.mrf.mxu0
  %v2391 = vadd.f32 %v2247, %v2390
  %2392 = vmatmul.bf16.gmra.mxu0 %v959
  %v2393 = vpop.f32.mrf.mxu0
  %v2394 = vadd.f32 %v2250, %v2393
  %v2395 = vpop.f32.mrf.mxu0
  %v2396 = vadd.f32 %v2252, %v2395
  %2397 = vmatmul.bf16.gmra.mxu0 %v966
  %v2398 = vpop.f32.mrf.mxu0
  %v2399 = vadd.f32 %v2255, %v2398
  %v2400 = vpop.f32.mrf.mxu0
  %v2401 = vadd.f32 %v2257, %v2400
  %2402 = vmatmul.bf16.gmra.mxu0 %v973
  %v2403 = vpop.f32.mrf.mxu0
  %v2404 = vadd.f32 %v2260, %v2403
  %v2405 = vpop.f32.mrf.mxu0
  %v2406 = vadd.f32 %v2262, %v2405
  %2407 = vmatmul.bf16.gmra.mxu0 %v980
  %v2408 = vpop.f32.mrf.mxu0
  %v2409 = vadd.f32 %v2265, %v2408
  %v2410 = vpop.f32.mrf.mxu0
  %v2411 = vadd.f32 %v2267, %v2410
  %2412 = vmatmul.bf16.gmra.mxu0 %v987
  %v2413 = vpop.f32.mrf.mxu0
  %v2414 = vadd.f32 %v2270, %v2413
  %v2415 = vpop.f32.mrf.mxu0
  %v2416 = vadd.f32 %v2272, %v2415
  %2417 = vmatmul.bf16.gmra.mxu0 %v994
  %v2418 = vpop.f32.mrf.mxu0
  %v2419 = vadd.f32 %v2275, %v2418
  %v2420 = vpop.f32.mrf.mxu0
  %v2421 = vadd.f32 %v2277, %v2420
  %2422 = vmatmul.bf16.gmra.mxu0 %v1001
  %v2423 = vpop.f32.mrf.mxu0
  %v2424 = vadd.f32 %v2280, %v2423
  %v2425 = vpop.f32.mrf.mxu0
  %v2426 = vadd.f32 %v2282, %v2425
  %2427 = vmatmul.bf16.gmra.mxu0 %v1008
  %v2428 = vpop.f32.mrf.mxu0
  %v2429 = vadd.f32 %v2285, %v2428
  %v2430 = vpop.f32.mrf.mxu0
  %v2431 = vadd.f32 %v2287, %v2430
  %2432 = vmatmul.bf16.gmra.mxu0 %v1015
  %v2433 = vpop.f32.mrf.mxu0
  %v2434 = vadd.f32 %v2290, %v2433
  %v2435 = vpop.f32.mrf.mxu0
  %v2436 = vadd.f32 %v2292, %v2435
  %2437 = vmatmul.bf16.gmra.mxu0 %v1022
  %v2438 = vpop.f32.mrf.mxu0
  %v2439 = vadd.f32 %v2295, %v2438
  %v2440 = vpop.f32.mrf.mxu0
  %v2441 = vadd.f32 %v2297, %v2440
  %2442 = vmatmul.bf16.gmra.mxu0 %v1029
  %v2443 = vpop.f32.mrf.mxu0
  %v2444 = vadd.f32 %v2300, %v2443
  %v2445 = vpop.f32.mrf.mxu0
  %v2446 = vadd.f32 %v2302, %v2445
  %2447 = vmatmul.bf16.gmra.mxu0 %v1036
  %v2448 = vpop.f32.mrf.mxu0
  %v2449 = vadd.f32 %v2305, %v2448
  %v2450 = vpop.f32.mrf.mxu0
  %v2451 = vadd.f32 %v2307, %v2450
  %2452 = vmatmul.bf16.gmra.mxu0 %v1043
  %v2453 = vpop.f32.mrf.mxu0
  %v2454 = vadd.f32 %v2310, %v2453
  %v2455 = vpop.f32.mrf.mxu0
  %v2456 = vadd.f32 %v2312, %v2455
  %2457 = vmatmul.bf16.gmra.mxu0 %v1050
  %v2458 = vpop.f32.mrf.mxu0
  %v2459 = vadd.f32 %v2315, %v2458
  %v2460 = vpop.f32.mrf.mxu0
  %v2461 = vadd.f32 %v2317, %v2460
  %2462 = vmatmul.bf16.gmra.mxu0 %v1057
  %v2463 = vpop.f32.mrf.mxu0
  %v2464 = vadd.f32 %v2320, %v2463
  %v2465 = vpop.f32.mrf.mxu0
  %v2466 = vadd.f32 %v2322, %v2465
  %2467 = vmatmul.bf16.gmra.mxu0 %v1064
  %v2468 = vpop.f32.mrf.mxu0
  %v2469 = vadd.f32 %v2325, %v2468
  %v2470 = vpop.f32.mrf.mxu0
  %v2471 = vadd.f32 %v2327, %v2470
  %2472 = vmatmul.bf16.gmra.mxu0 %v1071
  %v2473 = vpop.f32.mrf.mxu0
  %v2474 = vadd.f32 %v2330, %v2473
  %v2475 = vpop.f32.mrf.mxu0
  %v2476 = vadd.f32 %v2332, %v2475
  %2477 = vmatmul.bf16.gmra.mxu0 %v1078
  %v2478 = vpop.f32.mrf.mxu0
  %v2479 = vadd.f32 %v2335, %v2478
  %v2480 = vpop.f32.mrf.mxu0
  %v2481 = vadd.f32 %v2337, %v2480
  %2482 = vmatmul.bf16.gmra.mxu0 %v1085
  %v2483 = vpop.f32.mrf.mxu0
  %v2484 = vadd.f32 %v2340, %v2483
  %v2485 = vpop.f32.mrf.mxu0
  %v2486 = vadd.f32 %v2342, %v2485
  %2487 = vmatmul.bf16.gmra.mxu0 %v1092
  %v2488 = vpop.f32.mrf.mxu0
  %v2489 = vadd.f32 %v2345, %v2488
  %v2490 = vpop.f32.mrf.mxu0
  %v2491 = vadd.f32 %v2347, %v2490
  %2492 = vmatmul.bf16.gmra.mxu0 %v1099
  %v2493 = vpop.f32.mrf.mxu0
  %v2494 = vadd.f32 %v2350, %v2493
  %v2495 = vpop.f32.mrf.mxu0
  %v2496 = vadd.f32 %v2352, %v2495
  %2497 = vmatmul.bf16.gmra.mxu0 %v1106
  %v2498 = vpop.f32.mrf.mxu0
  %v2499 = vadd.f32 %v2355, %v2498
  %v2500 = vpop.f32.mrf.mxu0
  %v2501 = vadd.f32 %v2357, %v2500
  %2502 = vmatmul.bf16.gmra.mxu0 %v1113
  %v2503 = vpop.f32.mrf.mxu0
  %v2504 = vadd.f32 %v2360, %v2503
  %v2505 = vpop.f32.mrf.mxu0
  %v2506 = vadd.f32 %v2362, %v2505
  %2507 = vmatmul.bf16.gmra.mxu0 %v1120
  %v2508 = vpop.f32.mrf.mxu0
  %v2509 = vadd.f32 %v2365, %v2508
  %v2510 = vpop.f32.mrf.mxu0
  %v2511 = vadd.f32 %v2367, %v2510
  %2512 = vmatmul.bf16.gmra.mxu0 %v1127
  %v2513 = vpop.f32.mrf.mxu0
  %v2514 = vadd.f32 %v2370, %v2513
  %v2515 = vpop.f32.mrf.mxu0
  %v2516 = vadd.f32 %v2372, %v2515
  %2517 = vdwg.mxu0
  %2518 = vmatpush.bf16.msra.mxu0 %v1597
  %2519 = vmatpush.bf16.msra.mxu0 %v1596
  %2520 = vmatpush.bf16.msra.mxu0 %v1595
  %2521 = vmatpush.bf16.msra.mxu0 %v1594
  %2522 = vmatpush.bf16.msra.mxu0 %v1593
  %2523 = vmatpush.bf16.msra.mxu0 %v1592
  %2524 = vmatpush.bf16.msra.mxu0 %v1591
  %2525 = vmatpush.bf16.msra.mxu0 %v1590
  %2526 = vmatmul.bf16.gmra.mxu0 %v946
  %v2527 = vpop.f32.mrf.mxu0
  %v2528 = vadd.f32 %v2384, %v2527
  %v2529 = vpop.f32.mrf.mxu0
  %v2530 = vadd.f32 %v2386, %v2529
  %2531 = vmatmul.bf16.gmra.mxu0 %v953
  %v2532 = vpop.f32.mrf.mxu0
  %v2533 = vadd.f32 %v2389, %v2532
  %v2534 = vpop.f32.mrf.mxu0
  %v2535 = vadd.f32 %v2391, %v2534
  %2536 = vmatmul.bf16.gmra.mxu0 %v960
  %v2537 = vpop.f32.mrf.mxu0
  %v2538 = vadd.f32 %v2394, %v2537
  %v2539 = vpop.f32.mrf.mxu0
  %v2540 = vadd.f32 %v2396, %v2539
  %2541 = vmatmul.bf16.gmra.mxu0 %v967
  %v2542 = vpop.f32.mrf.mxu0
  %v2543 = vadd.f32 %v2399, %v2542
  %v2544 = vpop.f32.mrf.mxu0
  %v2545 = vadd.f32 %v2401, %v2544
  %2546 = vmatmul.bf16.gmra.mxu0 %v974
  %v2547 = vpop.f32.mrf.mxu0
  %v2548 = vadd.f32 %v2404, %v2547
  %v2549 = vpop.f32.mrf.mxu0
  %v2550 = vadd.f32 %v2406, %v2549
  %2551 = vmatmul.bf16.gmra.mxu0 %v981
  %v2552 = vpop.f32.mrf.mxu0
  %v2553 = vadd.f32 %v2409, %v2552
  %v2554 = vpop.f32.mrf.mxu0
  %v2555 = vadd.f32 %v2411, %v2554
  %2556 = vmatmul.bf16.gmra.mxu0 %v988
  %v2557 = vpop.f32.mrf.mxu0
  %v2558 = vadd.f32 %v2414, %v2557
  %v2559 = vpop.f32.mrf.mxu0
  %v2560 = vadd.f32 %v2416, %v2559
  %2561 = vmatmul.bf16.gmra.mxu0 %v995
  %v2562 = vpop.f32.mrf.mxu0
  %v2563 = vadd.f32 %v2419, %v2562
  %v2564 = vpop.f32.mrf.mxu0
  %v2565 = vadd.f32 %v2421, %v2564
  %2566 = vmatmul.bf16.gmra.mxu0 %v1002
  %v2567 = vpop.f32.mrf.mxu0
  %v2568 = vadd.f32 %v2424, %v2567
  %v2569 = vpop.f32.mrf.mxu0
  %v2570 = vadd.f32 %v2426, %v2569
  %2571 = vmatmul.bf16.gmra.mxu0 %v1009
  %v2572 = vpop.f32.mrf.mxu0
  %v2573 = vadd.f32 %v2429, %v2572
  %v2574 = vpop.f32.mrf.mxu0
  %v2575 = vadd.f32 %v2431, %v2574
  %2576 = vmatmul.bf16.gmra.mxu0 %v1016
  %v2577 = vpop.f32.mrf.mxu0
  %v2578 = vadd.f32 %v2434, %v2577
  %v2579 = vpop.f32.mrf.mxu0
  %v2580 = vadd.f32 %v2436, %v2579
  %2581 = vmatmul.bf16.gmra.mxu0 %v1023
  %v2582 = vpop.f32.mrf.mxu0
  %v2583 = vadd.f32 %v2439, %v2582
  %v2584 = vpop.f32.mrf.mxu0
  %v2585 = vadd.f32 %v2441, %v2584
  %2586 = vmatmul.bf16.gmra.mxu0 %v1030
  %v2587 = vpop.f32.mrf.mxu0
  %v2588 = vadd.f32 %v2444, %v2587
  %v2589 = vpop.f32.mrf.mxu0
  %v2590 = vadd.f32 %v2446, %v2589
  %2591 = vmatmul.bf16.gmra.mxu0 %v1037
  %v2592 = vpop.f32.mrf.mxu0
  %v2593 = vadd.f32 %v2449, %v2592
  %v2594 = vpop.f32.mrf.mxu0
  %v2595 = vadd.f32 %v2451, %v2594
  %2596 = vmatmul.bf16.gmra.mxu0 %v1044
  %v2597 = vpop.f32.mrf.mxu0
  %v2598 = vadd.f32 %v2454, %v2597
  %v2599 = vpop.f32.mrf.mxu0
  %v2600 = vadd.f32 %v2456, %v2599
  %2601 = vmatmul.bf16.gmra.mxu0 %v1051
  %v2602 = vpop.f32.mrf.mxu0
  %v2603 = vadd.f32 %v2459, %v2602
  %v2604 = vpop.f32.mrf.mxu0
  %v2605 = vadd.f32 %v2461, %v2604
  %2606 = vmatmul.bf16.gmra.mxu0 %v1058
  %v2607 = vpop.f32.mrf.mxu0
  %v2608 = vadd.f32 %v2464, %v2607
  %v2609 = vpop.f32.mrf.mxu0
  %v2610 = vadd.f32 %v2466, %v2609
  %2611 = vmatmul.bf16.gmra.mxu0 %v1065
  %v2612 = vpop.f32.mrf.mxu0
  %v2613 = vadd.f32 %v2469, %v2612
  %v2614 = vpop.f32.mrf.mxu0
  %v2615 = vadd.f32 %v2471, %v2614
  %2616 = vmatmul.bf16.gmra.mxu0 %v1072
  %v2617 = vpop.f32.mrf.mxu0
  %v2618 = vadd.f32 %v2474, %v2617
  %v2619 = vpop.f32.mrf.mxu0
  %v2620 = vadd.f32 %v2476, %v2619
  %2621 = vmatmul.bf16.gmra.mxu0 %v1079
  %v2622 = vpop.f32.mrf.mxu0
  %v2623 = vadd.f32 %v2479, %v2622
  %v2624 = vpop.f32.mrf.mxu0
  %v2625 = vadd.f32 %v2481, %v2624
  %2626 = vmatmul.bf16.gmra.mxu0 %v1086
  %v2627 = vpop.f32.mrf.mxu0
  %v2628 = vadd.f32 %v2484, %v2627
  %v2629 = vpop.f32.mrf.mxu0
  %v2630 = vadd.f32 %v2486, %v2629
  %2631 = vmatmul.bf16.gmra.mxu0 %v1093
  %v2632 = vpop.f32.mrf.mxu0
  %v2633 = vadd.f32 %v2489, %v2632
  %v2634 = vpop.f32.mrf.mxu0
  %v2635 = vadd.f32 %v2491, %v2634
  %2636 = vmatmul.bf16.gmra.mxu0 %v1100
  %v2637 = vpop.f32.mrf.mxu0
  %v2638 = vadd.f32 %v2494, %v2637
  %v2639 = vpop.f32.mrf.mxu0
  %v2640 = vadd.f32 %v2496, %v2639
  %2641 = vmatmul.bf16.gmra.mxu0 %v1107
  %v2642 = vpop.f32.mrf.mxu0
  %v2643 = vadd.f32 %v2499, %v2642
  %v2644 = vpop.f32.mrf.mxu0
  %v2645 = vadd.f32 %v2501, %v2644
  %2646 = vmatmul.bf16.gmra.mxu0 %v1114
  %v2647 = vpop.f32.mrf.mxu0
  %v2648 = vadd.f32 %v2504, %v2647
  %v2649 = vpop.f32.mrf.mxu0
  %v2650 = vadd.f32 %v2506, %v2649
  %2651 = vmatmul.bf16.gmra.mxu0 %v1121
  %v2652 = vpop.f32.mrf.mxu0
  %v2653 = vadd.f32 %v2509, %v2652
  %v2654 = vpop.f32.mrf.mxu0
  %v2655 = vadd.f32 %v2511, %v2654
  %2656 = vmatmul.bf16.gmra.mxu0 %v1128
  %v2657 = vpop.f32.mrf.mxu0
  %v2658 = vadd.f32 %v2514, %v2657
  %v2659 = vpop.f32.mrf.mxu0
  %v2660 = vadd.f32 %v2516, %v2659
  %2661 = vdwg.mxu0
  %v2662 = vmax.f32 %v2528, 0.0
  %v2663 = vmax.f32 %v2530, 0.0
  %v2664 = vmax.f32 %v2533, 0.0
  %v2665 = vmax.f32 %v2535, 0.0
  %v2666 = vmax.f32 %v2538, 0.0
  %v2667 = vmax.f32 %v2540, 0.0
  %v2668 = vmax.f32 %v2543, 0.0
  %v2669 = vmax.f32 %v2545, 0.0
  %v2670 = vmax.f32 %v2548, 0.0
  %v2671 = vmax.f32 %v2550, 0.0
  %v2672 = vmax.f32 %v2553, 0.0
  %v2673 = vmax.f32 %v2555, 0.0
  %v2674 = vmax.f32 %v2558, 0.0
  %v2675 = vmax.f32 %v2560, 0.0
  %v2676 = vmax.f32 %v2563, 0.0
  %v2677 = vmax.f32 %v2565, 0.0
  %v2678 = vmax.f32 %v2568, 0.0
  %v2679 = vmax.f32 %v2570, 0.0
  %v2680 = vmax.f32 %v2573, 0.0
  %v2681 = vmax.f32 %v2575, 0.0
  %v2682 = vmax.f32 %v2578, 0.0
  %v2683 = vmax.f32 %v2580, 0.0
  %v2684 = vmax.f32 %v2583, 0.0
  %v2685 = vmax.f32 %v2585, 0.0
  %v2686 = vmax.f32 %v2588, 0.0
  %v2687 = vmax.f32 %v2590, 0.0
  %v2688 = vmax.f32 %v2593, 0.0
  %v2689 = vmax.f32 %v2595, 0.0
  %v2690 = vmax.f32 %v2598, 0.0
  %v2691 = vmax.f32 %v2600, 0.0
  %v2692 = vmax.f32 %v2603, 0.0
  %v2693 = vmax.f32 %v2605, 0.0
  %v2694 = vmax.f32 %v2608, 0.0
  %v2695 = vmax.f32 %v2610, 0.0
  %v2696 = vmax.f32 %v2613, 0.0
  %v2697 = vmax.f32 %v2615, 0.0
  %v2698 = vmax.f32 %v2618, 0.0
  %v2699 = vmax.f32 %v2620, 0.0
  %v2700 = vmax.f32 %v2623, 0.0
  %v2701 = vmax.f32 %v2625, 0.0
  %v2702 = vmax.f32 %v2628, 0.0
  %v2703 = vmax.f32 %v2630, 0.0
  %v2704 = vmax.f32 %v2633, 0.0
  %v2705 = vmax.f32 %v2635, 0.0
  %v2706 = vmax.f32 %v2638, 0.0
  %v2707 = vmax.f32 %v2640, 0.0
  %v2708 = vmax.f32 %v2643, 0.0
  %v2709 = vmax.f32 %v2645, 0.0
  %v2710 = vmax.f32 %v2648, 0.0
  %v2711 = vmax.f32 %v2650, 0.0
  %v2712 = vmax.f32 %v2653, 0.0
  %v2713 = vmax.f32 %v2655, 0.0
  %v2714 = vmax.f32 %v2658, 0.0
  %v2715 = vmax.f32 %v2660, 0.0
  %2716 = vst [vmem:[%s3] sm:$0xff] %v2662
  %2717 = vst [vmem:[%s3 + $0x8] sm:$0xff] %v2663
  %2718 = vst [vmem:[%s3 + $0x10] sm:$0xff] %v2664
  %2719 = vst [vmem:[%s3 + $0x18] sm:$0xff] %v2665
  %2720 = vst [vmem:[%s3 + $0x20] sm:$0xff] %v2666
  %2721 = vst [vmem:[%s3 + $0x28] sm:$0xff] %v2667
  %2722 = vst [vmem:[%s3 + $0x30] sm:$0xff] %v2668
  %2723 = vst [vmem:[%s3 + $0x38] sm:$0xff] %v2669
  %2724 = vst [vmem:[%s3 + $0x40] sm:$0xff] %v2670
  %2725 = vst [vmem:[%s3 + $0x48] sm:$0xff] %v2671
  %2726 = vst [vmem:[%s3 + $0x50] sm:$0xff] %v2672
  %2727 = vst [vmem:[%s3 + $0x58] sm:$0xff] %v2673
  %2728 = vst [vmem:[%s3 + $0x60] sm:$0xff] %v2674
  %2729 = vst [vmem:[%s3 + $0x68] sm:$0xff] %v2675
  %2730 = vst [vmem:[%s3 + $0x70] sm:$0xff] %v2676
  %2731 = vst [vmem:[%s3 + $0x78] sm:$0xff] %v2677
  %2732 = vst [vmem:[%s3 + $0x80] sm:$0xff] %v2678
  %2733 = vst [vmem:[%s3 + $0x88] sm:$0xff] %v2679
  %2734 = vst [vmem:[%s3 + $0x90] sm:$0xff] %v2680
  %2735 = vst [vmem:[%s3 + $0x98] sm:$0xff] %v2681
  %2736 = vst [vmem:[%s3 + $0xa0] sm:$0xff] %v2682
  %2737 = vst [vmem:[%s3 + $0xa8] sm:$0xff] %v2683
  %2738 = vst [vmem:[%s3 + $0xb0] sm:$0xff] %v2684
  %2739 = vst [vmem:[%s3 + $0xb8] sm:$0xff] %v2685
  %2740 = vst [vmem:[%s3 + $0xc0] sm:$0xff] %v2686
  %2741 = vst [vmem:[%s3 + $0xc8] sm:$0xff] %v2687
  %2742 = vst [vmem:[%s3 + $0xd0] sm:$0xff] %v2688
  %2743 = vst [vmem:[%s3 + $0xd8] sm:$0xff] %v2689
  %2744 = vst [vmem:[%s3 + $0xe0] sm:$0xff] %v2690
  %2745 = vst [vmem:[%s3 + $0xe8] sm:$0xff] %v2691
  %2746 = vst [vmem:[%s3 + $0xf0] sm:$0xff] %v2692
  %2747 = vst [vmem:[%s3 + $0xf8] sm:$0xff] %v2693
  %2748 = vst [vmem:[%s3 + $0x100] sm:$0xff] %v2694
  %2749 = vst [vmem:[%s3 + $0x108] sm:$0xff] %v2695
  %2750 = vst [vmem:[%s3 + $0x110] sm:$0xff] %v2696
  %2751 = vst [vmem:[%s3 + $0x118] sm:$0xff] %v2697
  %2752 = vst [vmem:[%s3 + $0x120] sm:$0xff] %v2698
  %2753 = vst [vmem:[%s3 + $0x128] sm:$0xff] %v2699
  %2754 = vst [vmem:[%s3 + $0x130] sm:$0xff] %v2700
  %2755 = vst [vmem:[%s3 + $0x138] sm:$0xff] %v2701
  %2756 = vst [vmem:[%s3 + $0x140] sm:$0xff] %v2702
  %2757 = vst [vmem:[%s3 + $0x148] sm:$0xff] %v2703
  %2758 = vst [vmem:[%s3 + $0x150] sm:$0xff] %v2704
  %2759 = vst [vmem:[%s3 + $0x158] sm:$0xff] %v2705
  %2760 = vst [vmem:[%s3 + $0x160] sm:$0xff] %v2706
  %2761 = vst [vmem:[%s3 + $0x168] sm:$0xff] %v2707
  %2762 = vst [vmem:[%s3 + $0x170] sm:$0xff] %v2708
  %2763 = vst [vmem:[%s3 + $0x178] sm:$0xff] %v2709
  %2764 = vst [vmem:[%s3 + $0x180] sm:$0xff] %v2710
  %2765 = vst [vmem:[%s3 + $0x188] sm:$0xff] %v2711
  %2766 = vst [vmem:[%s3 + $0x190] sm:$0xff] %v2712
  %2767 = vst [vmem:[%s3 + $0x198] sm:$0xff] %v2713
  %2768 = vst [vmem:[%s3 + $0x1a0] sm:$0xff] %v2714
  %2769 = vst [vmem:[%s3 + $0x1a8] sm:$0xff] %v2715
  // Predicated region
  $region14: #{cnn_model_2_forward.4} parent=0 // pred_check
    _
  $region15: #{cnn_model_2_forward.4} parent=0 // pred_check_branch
    %2771 = sbr.rel (0) target = $region17
  $region16: #{cnn_model_2_forward.4} parent=0 // pred_region
    _
  $region17: #{cnn_model_2_forward.4} parent=0 // pred_fallthru
    _
  // Predicated region
  $region18: #{cnn_model_2_forward.4} parent=0 // pred_check
    _
  $region19: #{cnn_model_2_forward.4} parent=0 // pred_check_branch
    %2773 = sbr.rel (0) target = $region21
  $region20: #{cnn_model_2_forward.4} parent=0 // pred_region
    _
  $region21: #{cnn_model_2_forward.4} parent=0 // pred_fallthru
    _

// kernel: cnn_model_2_forward.5
$region0: #{cnn_model_2_forward.5}
  #allocation0 [shape = 'u32[]', space=smem, size = 0x4, offset = 0x4, fixed_abs, tag = 'smem constant byte address 0x4 - core index']
  #allocation1 [shape = 'u32[72,128]{1,0:T(1,128)}', space=vmem, size = 0x9000, scoped, tag = 'internal scratch']
  %s0 = inlined_call_operand.vmem [shape: bf16[8,1792], index: 0, kind: input, shape index: {}]
  %s1 = inlined_call_operand.vmem [shape: bf16[1792,128], index: 1, kind: input, shape index: {}]
  %s2 = inlined_call_operand.vmem [shape: f32[1,128], index: 2, kind: input, shape index: {}]
  %s3 = inlined_call_operand.vmem [shape: bf16[128,128], index: 3, kind: input, shape index: {}]
  %s4 = inlined_call_operand.vmem [shape: f32[1,128], index: 4, kind: input, shape index: {}]
  %s5 = inlined_call_operand.vmem [shape: f32[1,128], index: 5, kind: input, shape index: {}]
  %s6 = inlined_call_operand.vmem [shape: bf16[128,128], index: 6, kind: input, shape index: {}]
  %s7 = inlined_call_operand.vmem [shape: f32[1,128], index: 7, kind: input, shape index: {}]
  %s8 = inlined_call_operand.vmem [shape: f32[8,128], index: 8, kind: output, shape index: {}]
  %s9 = sld [smem:[#allocation0]]
  $region42: #{cnn_model_2_forward.5} parent=0
    _
  %s11 = ssub.s32 1, %s9
  %s12 = scalar_select 0, %s11, %s9
  // Predicated region
  $region2: #{cnn_model_2_forward.5} parent=0 // pred_check
    _
  $region3: #{cnn_model_2_forward.5} parent=0 // pred_check_branch
    %14 = sbr.rel (0) target = $region5
  $region4: #{cnn_model_2_forward.5} parent=0 // pred_region
    _
  $region5: #{cnn_model_2_forward.5} parent=0 // pred_fallthru
    _
  // Predicated region
  $region6: #{cnn_model_2_forward.5} parent=0 // pred_check
    _
  $region7: #{cnn_model_2_forward.5} parent=0 // pred_check_branch
    %16 = sbr.rel (0) target = $region9
  $region8: #{cnn_model_2_forward.5} parent=0 // pred_region
    _
  $region9: #{cnn_model_2_forward.5} parent=0 // pred_fallthru
    _
  // Predicated region
  $region10: #{cnn_model_2_forward.5} parent=0 // pred_check
    _
  $region11: #{cnn_model_2_forward.5} parent=0 // pred_check_branch
    %18 = sbr.rel (0) target = $region13
  $region12: #{cnn_model_2_forward.5} parent=0 // pred_region
    _
  $region13: #{cnn_model_2_forward.5} parent=0 // pred_fallthru
    _
  // Predicated region
  $region14: #{cnn_model_2_forward.5} parent=0 // pred_check
    _
  $region15: #{cnn_model_2_forward.5} parent=0 // pred_check_branch
    %20 = sbr.rel (0) target = $region17
  $region16: #{cnn_model_2_forward.5} parent=0 // pred_region
    _
  $region17: #{cnn_model_2_forward.5} parent=0 // pred_fallthru
    _
  // Predicated region
  $region18: #{cnn_model_2_forward.5} parent=0 // pred_check
    _
  $region19: #{cnn_model_2_forward.5} parent=0 // pred_check_branch
    %22 = sbr.rel (0) target = $region21
  $region20: #{cnn_model_2_forward.5} parent=0 // pred_region
    _
  $region21: #{cnn_model_2_forward.5} parent=0 // pred_fallthru
    _
  // Predicated region
  $region22: #{cnn_model_2_forward.5} parent=0 // pred_check
    _
  $region23: #{cnn_model_2_forward.5} parent=0 // pred_check_branch
    %24 = sbr.rel (0) target = $region25
  $region24: #{cnn_model_2_forward.5} parent=0 // pred_region
    _
  $region25: #{cnn_model_2_forward.5} parent=0 // pred_fallthru
    _
  // Predicated region
  $region26: #{cnn_model_2_forward.5} parent=0 // pred_check
    _
  $region27: #{cnn_model_2_forward.5} parent=0 // pred_check_branch
    %26 = sbr.rel (0) target = $region29
  $region28: #{cnn_model_2_forward.5} parent=0 // pred_region
    _
  $region29: #{cnn_model_2_forward.5} parent=0 // pred_fallthru
    _
  // Predicated region
  $region30: #{cnn_model_2_forward.5} parent=0 // pred_check
    _
  $region31: #{cnn_model_2_forward.5} parent=0 // pred_check_branch
    %28 = sbr.rel (0) target = $region33
  $region32: #{cnn_model_2_forward.5} parent=0 // pred_region
    _
  $region33: #{cnn_model_2_forward.5} parent=0 // pred_fallthru
    _
  %v29 = vld [vmem:[%s0] sm:$0xff]
  %v30 = vld [vmem:[%s0 + $0x8] sm:$0xff]
  %v31 = vld [vmem:[%s0 + $0x10] sm:$0xff]
  %v32 = vld [vmem:[%s0 + $0x18] sm:$0xff]
  %v33 = vld [vmem:[%s0 + $0x20] sm:$0xff]
  %v34 = vld [vmem:[%s0 + $0x28] sm:$0xff]
  %v35 = vld [vmem:[%s0 + $0x30] sm:$0xff]
  %v36 = vld [vmem:[%s1] sm:$0xf]
  %v37 = vld [vmem:[%s1 + $0x4] sm:$0xf]
  %v38 = vld [vmem:[%s1 + $0x8] sm:$0xf]
  %v39 = vld [vmem:[%s1 + $0xc] sm:$0xf]
  %v40 = vld [vmem:[%s1 + $0x10] sm:$0xf]
  %v41 = vld [vmem:[%s1 + $0x14] sm:$0xf]
  %v42 = vld [vmem:[%s1 + $0x18] sm:$0xf]
  %v43 = vld [vmem:[%s1 + $0x1c] sm:$0xf]
  %v44 = vld [vmem:[%s1 + $0x20] sm:$0xf]
  %v45 = vld [vmem:[%s1 + $0x24] sm:$0xf]
  %v46 = vld [vmem:[%s1 + $0x28] sm:$0xf]
  %v47 = vld [vmem:[%s1 + $0x2c] sm:$0xf]
  %v48 = vld [vmem:[%s1 + $0x30] sm:$0xf]
  %v49 = vld [vmem:[%s1 + $0x34] sm:$0xf]
  %v50 = vld [vmem:[%s1 + $0x38] sm:$0xf]
  %v51 = vld [vmem:[%s1 + $0x3c] sm:$0xf]
  %v52 = vld [vmem:[%s1 + $0x40] sm:$0xf]
  %v53 = vld [vmem:[%s1 + $0x44] sm:$0xf]
  %v54 = vld [vmem:[%s1 + $0x48] sm:$0xf]
  %v55 = vld [vmem:[%s1 + $0x4c] sm:$0xf]
  %v56 = vld [vmem:[%s1 + $0x50] sm:$0xf]
  %v57 = vld [vmem:[%s1 + $0x54] sm:$0xf]
  %v58 = vld [vmem:[%s1 + $0x58] sm:$0xf]
  %v59 = vld [vmem:[%s1 + $0x5c] sm:$0xf]
  %v60 = vld [vmem:[%s1 + $0x60] sm:$0xf]
  %v61 = vld [vmem:[%s1 + $0x64] sm:$0xf]
  %v62 = vld [vmem:[%s1 + $0x68] sm:$0xf]
  %v63 = vld [vmem:[%s1 + $0x6c] sm:$0xf]
  %v64 = vld [vmem:[%s1 + $0x70] sm:$0xf]
  %v65 = vld [vmem:[%s1 + $0x74] sm:$0xf]
  %v66 = vld [vmem:[%s1 + $0x78] sm:$0xf]
  %v67 = vld [vmem:[%s1 + $0x7c] sm:$0xf]
  %v68 = vld [vmem:[%s1 + $0x80] sm:$0xf]
  %v69 = vld [vmem:[%s1 + $0x84] sm:$0xf]
  %v70 = vld [vmem:[%s1 + $0x88] sm:$0xf]
  %v71 = vld [vmem:[%s1 + $0x8c] sm:$0xf]
  %v72 = vld [vmem:[%s1 + $0x90] sm:$0xf]
  %v73 = vld [vmem:[%s1 + $0x94] sm:$0xf]
  %v74 = vld [vmem:[%s1 + $0x98] sm:$0xf]
  %v75 = vld [vmem:[%s1 + $0x9c] sm:$0xf]
  %v76 = vld [vmem:[%s1 + $0xa0] sm:$0xf]
  %v77 = vld [vmem:[%s1 + $0xa4] sm:$0xf]
  %v78 = vld [vmem:[%s1 + $0xa8] sm:$0xf]
  %v79 = vld [vmem:[%s1 + $0xac] sm:$0xf]
  %v80 = vld [vmem:[%s1 + $0xb0] sm:$0xf]
  %v81 = vld [vmem:[%s1 + $0xb4] sm:$0xf]
  %v82 = vld [vmem:[%s1 + $0xb8] sm:$0xf]
  %v83 = vld [vmem:[%s1 + $0xbc] sm:$0xf]
  %v84 = vld [vmem:[%s1 + $0xc0] sm:$0xf]
  %v85 = vld [vmem:[%s1 + $0xc4] sm:$0xf]
  %v86 = vld [vmem:[%s1 + $0xc8] sm:$0xf]
  %v87 = vld [vmem:[%s1 + $0xcc] sm:$0xf]
  %v88 = vld [vmem:[%s1 + $0xd0] sm:$0xf]
  %v89 = vld [vmem:[%s1 + $0xd4] sm:$0xf]
  %v90 = vld [vmem:[%s1 + $0xd8] sm:$0xf]
  %v91 = vld [vmem:[%s1 + $0xdc] sm:$0xf]
  %v92 = vld [vmem:[%s1 + $0xe0] sm:$0xf]
  %v93 = vld [vmem:[%s1 + $0xe4] sm:$0xf]
  %v94 = vld [vmem:[%s1 + $0xe8] sm:$0xf]
  %v95 = vld [vmem:[%s1 + $0xec] sm:$0xf]
  %v96 = vld [vmem:[%s1 + $0xf0] sm:$0xf]
  %v97 = vld [vmem:[%s1 + $0xf4] sm:$0xf]
  %v98 = vld [vmem:[%s1 + $0xf8] sm:$0xf]
  %v99 = vld [vmem:[%s1 + $0xfc] sm:$0xf]
  %v100 = vld [vmem:[%s1 + $0x100] sm:$0xf]
  %v101 = vld [vmem:[%s1 + $0x104] sm:$0xf]
  %v102 = vld [vmem:[%s1 + $0x108] sm:$0xf]
  %v103 = vld [vmem:[%s1 + $0x10c] sm:$0xf]
  %v104 = vld [vmem:[%s1 + $0x110] sm:$0xf]
  %v105 = vld [vmem:[%s1 + $0x114] sm:$0xf]
  %v106 = vld [vmem:[%s1 + $0x118] sm:$0xf]
  %v107 = vld [vmem:[%s1 + $0x11c] sm:$0xf]
  %v108 = vld [vmem:[%s1 + $0x120] sm:$0xf]
  %v109 = vld [vmem:[%s1 + $0x124] sm:$0xf]
  %v110 = vld [vmem:[%s1 + $0x128] sm:$0xf]
  %v111 = vld [vmem:[%s1 + $0x12c] sm:$0xf]
  %v112 = vld [vmem:[%s1 + $0x130] sm:$0xf]
  %v113 = vld [vmem:[%s1 + $0x134] sm:$0xf]
  %v114 = vld [vmem:[%s1 + $0x138] sm:$0xf]
  %v115 = vld [vmem:[%s1 + $0x13c] sm:$0xf]
  %v116 = vld [vmem:[%s1 + $0x140] sm:$0xf]
  %v117 = vld [vmem:[%s1 + $0x144] sm:$0xf]
  %v118 = vld [vmem:[%s1 + $0x148] sm:$0xf]
  %v119 = vld [vmem:[%s1 + $0x14c] sm:$0xf]
  %v120 = vld [vmem:[%s1 + $0x150] sm:$0xf]
  %v121 = vld [vmem:[%s1 + $0x154] sm:$0xf]
  %v122 = vld [vmem:[%s1 + $0x158] sm:$0xf]
  %v123 = vld [vmem:[%s1 + $0x15c] sm:$0xf]
  %v124 = vld [vmem:[%s1 + $0x160] sm:$0xf]
  %v125 = vld [vmem:[%s1 + $0x164] sm:$0xf]
  %v126 = vld [vmem:[%s1 + $0x168] sm:$0xf]
  %v127 = vld [vmem:[%s1 + $0x16c] sm:$0xf]
  %v128 = vld [vmem:[%s1 + $0x170] sm:$0xf]
  %v129 = vld [vmem:[%s1 + $0x174] sm:$0xf]
  %v130 = vld [vmem:[%s1 + $0x178] sm:$0xf]
  %v131 = vld [vmem:[%s1 + $0x17c] sm:$0xf]
  %v132 = vld [vmem:[%s1 + $0x180] sm:$0xf]
  %v133 = vld [vmem:[%s1 + $0x184] sm:$0xf]
  %v134 = vld [vmem:[%s1 + $0x188] sm:$0xf]
  %v135 = vld [vmem:[%s1 + $0x18c] sm:$0xf]
  %v136 = vld [vmem:[%s1 + $0x190] sm:$0xf]
  %v137 = vld [vmem:[%s1 + $0x194] sm:$0xf]
  %v138 = vld [vmem:[%s1 + $0x198] sm:$0xf]
  %v139 = vld [vmem:[%s1 + $0x19c] sm:$0xf]
  %v140 = vld [vmem:[%s1 + $0x1a0] sm:$0xf]
  %v141 = vld [vmem:[%s1 + $0x1a4] sm:$0xf]
  %v142 = vld [vmem:[%s1 + $0x1a8] sm:$0xf]
  %v143 = vld [vmem:[%s1 + $0x1ac] sm:$0xf]
  %v144 = vld [vmem:[%s1 + $0x1b0] sm:$0xf]
  %v145 = vld [vmem:[%s1 + $0x1b4] sm:$0xf]
  %v146 = vld [vmem:[%s1 + $0x1b8] sm:$0xf]
  %v147 = vld [vmem:[%s1 + $0x1bc] sm:$0xf]
  %v148 = vld [vmem:[%s1 + $0x1c0] sm:$0xf]
  %v149 = vld [vmem:[%s1 + $0x1c4] sm:$0xf]
  %v150 = vld [vmem:[%s1 + $0x1c8] sm:$0xf]
  %v151 = vld [vmem:[%s1 + $0x1cc] sm:$0xf]
  %v152 = vld [vmem:[%s1 + $0x1d0] sm:$0xf]
  %v153 = vld [vmem:[%s1 + $0x1d4] sm:$0xf]
  %v154 = vld [vmem:[%s1 + $0x1d8] sm:$0xf]
  %v155 = vld [vmem:[%s1 + $0x1dc] sm:$0xf]
  %v156 = vld [vmem:[%s1 + $0x1e0] sm:$0xf]
  %v157 = vld [vmem:[%s1 + $0x1e4] sm:$0xf]
  %v158 = vld [vmem:[%s1 + $0x1e8] sm:$0xf]
  %v159 = vld [vmem:[%s1 + $0x1ec] sm:$0xf]
  %v160 = vld [vmem:[%s1 + $0x1f0] sm:$0xf]
  %v161 = vld [vmem:[%s1 + $0x1f4] sm:$0xf]
  %v162 = vld [vmem:[%s1 + $0x1f8] sm:$0xf]
  %v163 = vld [vmem:[%s1 + $0x1fc] sm:$0xf]
  %v164 = vld [vmem:[%s1 + $0x200] sm:$0xf]
  %v165 = vld [vmem:[%s1 + $0x204] sm:$0xf]
  %v166 = vld [vmem:[%s1 + $0x208] sm:$0xf]
  %v167 = vld [vmem:[%s1 + $0x20c] sm:$0xf]
  %v168 = vld [vmem:[%s1 + $0x210] sm:$0xf]
  %v169 = vld [vmem:[%s1 + $0x214] sm:$0xf]
  %v170 = vld [vmem:[%s1 + $0x218] sm:$0xf]
  %v171 = vld [vmem:[%s1 + $0x21c] sm:$0xf]
  %v172 = vld [vmem:[%s1 + $0x220] sm:$0xf]
  %v173 = vld [vmem:[%s1 + $0x224] sm:$0xf]
  %v174 = vld [vmem:[%s1 + $0x228] sm:$0xf]
  %v175 = vld [vmem:[%s1 + $0x22c] sm:$0xf]
  %v176 = vld [vmem:[%s1 + $0x230] sm:$0xf]
  %v177 = vld [vmem:[%s1 + $0x234] sm:$0xf]
  %v178 = vld [vmem:[%s1 + $0x238] sm:$0xf]
  %v179 = vld [vmem:[%s1 + $0x23c] sm:$0xf]
  %v180 = vld [vmem:[%s1 + $0x240] sm:$0xf]
  %v181 = vld [vmem:[%s1 + $0x244] sm:$0xf]
  %v182 = vld [vmem:[%s1 + $0x248] sm:$0xf]
  %v183 = vld [vmem:[%s1 + $0x24c] sm:$0xf]
  %v184 = vld [vmem:[%s1 + $0x250] sm:$0xf]
  %v185 = vld [vmem:[%s1 + $0x254] sm:$0xf]
  %v186 = vld [vmem:[%s1 + $0x258] sm:$0xf]
  %v187 = vld [vmem:[%s1 + $0x25c] sm:$0xf]
  %v188 = vld [vmem:[%s1 + $0x260] sm:$0xf]
  %v189 = vld [vmem:[%s1 + $0x264] sm:$0xf]
  %v190 = vld [vmem:[%s1 + $0x268] sm:$0xf]
  %v191 = vld [vmem:[%s1 + $0x26c] sm:$0xf]
  %v192 = vld [vmem:[%s1 + $0x270] sm:$0xf]
  %v193 = vld [vmem:[%s1 + $0x274] sm:$0xf]
  %v194 = vld [vmem:[%s1 + $0x278] sm:$0xf]
  %v195 = vld [vmem:[%s1 + $0x27c] sm:$0xf]
  %v196 = vld [vmem:[%s1 + $0x280] sm:$0xf]
  %v197 = vld [vmem:[%s1 + $0x284] sm:$0xf]
  %v198 = vld [vmem:[%s1 + $0x288] sm:$0xf]
  %v199 = vld [vmem:[%s1 + $0x28c] sm:$0xf]
  %v200 = vld [vmem:[%s1 + $0x290] sm:$0xf]
  %v201 = vld [vmem:[%s1 + $0x294] sm:$0xf]
  %v202 = vld [vmem:[%s1 + $0x298] sm:$0xf]
  %v203 = vld [vmem:[%s1 + $0x29c] sm:$0xf]
  %v204 = vld [vmem:[%s1 + $0x2a0] sm:$0xf]
  %v205 = vld [vmem:[%s1 + $0x2a4] sm:$0xf]
  %v206 = vld [vmem:[%s1 + $0x2a8] sm:$0xf]
  %v207 = vld [vmem:[%s1 + $0x2ac] sm:$0xf]
  %v208 = vld [vmem:[%s1 + $0x2b0] sm:$0xf]
  %v209 = vld [vmem:[%s1 + $0x2b4] sm:$0xf]
  %v210 = vld [vmem:[%s1 + $0x2b8] sm:$0xf]
  %v211 = vld [vmem:[%s1 + $0x2bc] sm:$0xf]
  %v212 = vld [vmem:[%s1 + $0x2c0] sm:$0xf]
  %v213 = vld [vmem:[%s1 + $0x2c4] sm:$0xf]
  %v214 = vld [vmem:[%s1 + $0x2c8] sm:$0xf]
  %v215 = vld [vmem:[%s1 + $0x2cc] sm:$0xf]
  %v216 = vld [vmem:[%s1 + $0x2d0] sm:$0xf]
  %v217 = vld [vmem:[%s1 + $0x2d4] sm:$0xf]
  %v218 = vld [vmem:[%s1 + $0x2d8] sm:$0xf]
  %v219 = vld [vmem:[%s1 + $0x2dc] sm:$0xf]
  %v220 = vld [vmem:[%s1 + $0x2e0] sm:$0xf]
  %v221 = vld [vmem:[%s1 + $0x2e4] sm:$0xf]
  %v222 = vld [vmem:[%s1 + $0x2e8] sm:$0xf]
  %v223 = vld [vmem:[%s1 + $0x2ec] sm:$0xf]
  %v224 = vld [vmem:[%s1 + $0x2f0] sm:$0xf]
  %v225 = vld [vmem:[%s1 + $0x2f4] sm:$0xf]
  %v226 = vld [vmem:[%s1 + $0x2f8] sm:$0xf]
  %v227 = vld [vmem:[%s1 + $0x2fc] sm:$0xf]
  %v228 = vld [vmem:[%s1 + $0x300] sm:$0xf]
  %v229 = vld [vmem:[%s1 + $0x304] sm:$0xf]
  %v230 = vld [vmem:[%s1 + $0x308] sm:$0xf]
  %v231 = vld [vmem:[%s1 + $0x30c] sm:$0xf]
  %v232 = vld [vmem:[%s1 + $0x310] sm:$0xf]
  %v233 = vld [vmem:[%s1 + $0x314] sm:$0xf]
  %v234 = vld [vmem:[%s1 + $0x318] sm:$0xf]
  %v235 = vld [vmem:[%s1 + $0x31c] sm:$0xf]
  %v236 = vld [vmem:[%s1 + $0x320] sm:$0xf]
  %v237 = vld [vmem:[%s1 + $0x324] sm:$0xf]
  %v238 = vld [vmem:[%s1 + $0x328] sm:$0xf]
  %v239 = vld [vmem:[%s1 + $0x32c] sm:$0xf]
  %v240 = vld [vmem:[%s1 + $0x330] sm:$0xf]
  %v241 = vld [vmem:[%s1 + $0x334] sm:$0xf]
  %v242 = vld [vmem:[%s1 + $0x338] sm:$0xf]
  %v243 = vld [vmem:[%s1 + $0x33c] sm:$0xf]
  %v244 = vld [vmem:[%s1 + $0x340] sm:$0xf]
  %v245 = vld [vmem:[%s1 + $0x344] sm:$0xf]
  %v246 = vld [vmem:[%s1 + $0x348] sm:$0xf]
  %v247 = vld [vmem:[%s1 + $0x34c] sm:$0xf]
  %v248 = vld [vmem:[%s1 + $0x350] sm:$0xf]
  %v249 = vld [vmem:[%s1 + $0x354] sm:$0xf]
  %v250 = vld [vmem:[%s1 + $0x358] sm:$0xf]
  %v251 = vld [vmem:[%s1 + $0x35c] sm:$0xf]
  %v252 = vld [vmem:[%s1 + $0x360] sm:$0xf]
  %v253 = vld [vmem:[%s1 + $0x364] sm:$0xf]
  %v254 = vld [vmem:[%s1 + $0x368] sm:$0xf]
  %v255 = vld [vmem:[%s1 + $0x36c] sm:$0xf]
  %v256 = vld [vmem:[%s1 + $0x370] sm:$0xf]
  %v257 = vld [vmem:[%s1 + $0x374] sm:$0xf]
  %v258 = vld [vmem:[%s1 + $0x378] sm:$0xf]
  %v259 = vld [vmem:[%s1 + $0x37c] sm:$0xf]
  %v260 = vld [vmem:[%s2] sm:$0x1]
  %v262 = vperm.slane %v260, 0
  %v271 = vunpack.c.l.b16 %v29
  %v272 = vunpack.c.h.b16 %v29
  %v273 = vunpack.c.l.b16 %v30
  %v274 = vunpack.c.h.b16 %v30
  %v275 = vunpack.c.l.b16 %v31
  %v276 = vunpack.c.h.b16 %v31
  %v277 = vunpack.c.l.b16 %v32
  %v278 = vunpack.c.h.b16 %v32
  %v279 = vunpack.c.l.b16 %v33
  %v280 = vunpack.c.h.b16 %v33
  %v281 = vunpack.c.l.b16 %v34
  %v282 = vunpack.c.h.b16 %v34
  %v283 = vunpack.c.l.b16 %v35
  %v284 = vunpack.c.h.b16 %v35
  %v285 = vpack.c.b16 %v271, %v271
  %v286 = vpack.c.b16 %v272, %v272
  %v287 = vpack.c.b16 %v273, %v273
  %v288 = vpack.c.b16 %v274, %v274
  %v289 = vpack.c.b16 %v275, %v275
  %v290 = vpack.c.b16 %v276, %v276
  %v291 = vpack.c.b16 %v277, %v277
  %v292 = vpack.c.b16 %v278, %v278
  %v293 = vpack.c.b16 %v279, %v279
  %v294 = vpack.c.b16 %v280, %v280
  %v295 = vpack.c.b16 %v281, %v281
  %v296 = vpack.c.b16 %v282, %v282
  %v297 = vpack.c.b16 %v283, %v283
  %v298 = vpack.c.b16 %v284, %v284
  %v537 = vunpack.c.l.b16 %v36
  %v538 = vunpack.c.l.b16 %v37
  %v539 = vunpack.c.l.b16 %v38
  %v540 = vunpack.c.l.b16 %v39
  %v541 = vunpack.c.l.b16 %v40
  %v542 = vunpack.c.l.b16 %v41
  %v543 = vunpack.c.l.b16 %v42
  %v544 = vunpack.c.l.b16 %v43
  %v545 = vunpack.c.l.b16 %v44
  %v546 = vunpack.c.l.b16 %v45
  %v547 = vunpack.c.l.b16 %v46
  %v548 = vunpack.c.l.b16 %v47
  %v549 = vunpack.c.l.b16 %v48
  %v550 = vunpack.c.l.b16 %v49
  %v551 = vunpack.c.l.b16 %v50
  %v552 = vunpack.c.l.b16 %v51
  %v553 = vunpack.c.l.b16 %v52
  %v554 = vunpack.c.l.b16 %v53
  %v555 = vunpack.c.l.b16 %v54
  %v556 = vunpack.c.l.b16 %v55
  %v557 = vunpack.c.l.b16 %v56
  %v558 = vunpack.c.l.b16 %v57
  %v559 = vunpack.c.l.b16 %v58
  %v560 = vunpack.c.l.b16 %v59
  %v561 = vunpack.c.l.b16 %v60
  %v562 = vunpack.c.l.b16 %v61
  %v563 = vunpack.c.l.b16 %v62
  %v564 = vunpack.c.l.b16 %v63
  %v565 = vunpack.c.l.b16 %v64
  %v566 = vunpack.c.l.b16 %v65
  %v567 = vunpack.c.l.b16 %v66
  %v568 = vunpack.c.l.b16 %v67
  %v569 = vunpack.c.l.b16 %v68
  %v570 = vunpack.c.l.b16 %v69
  %v571 = vunpack.c.l.b16 %v70
  %v572 = vunpack.c.l.b16 %v71
  %v573 = vunpack.c.l.b16 %v72
  %v574 = vunpack.c.l.b16 %v73
  %v575 = vunpack.c.l.b16 %v74
  %v576 = vunpack.c.l.b16 %v75
  %v577 = vunpack.c.l.b16 %v76
  %v578 = vunpack.c.l.b16 %v77
  %v579 = vunpack.c.l.b16 %v78
  %v580 = vunpack.c.l.b16 %v79
  %v581 = vunpack.c.l.b16 %v80
  %v582 = vunpack.c.l.b16 %v81
  %v583 = vunpack.c.l.b16 %v82
  %v584 = vunpack.c.l.b16 %v83
  %v585 = vunpack.c.l.b16 %v84
  %v586 = vunpack.c.l.b16 %v85
  %v587 = vunpack.c.l.b16 %v86
  %v588 = vunpack.c.l.b16 %v87
  %v589 = vunpack.c.l.b16 %v88
  %v590 = vunpack.c.l.b16 %v89
  %v591 = vunpack.c.l.b16 %v90
  %v592 = vunpack.c.l.b16 %v91
  %v593 = vunpack.c.l.b16 %v92
  %v594 = vunpack.c.l.b16 %v93
  %v595 = vunpack.c.l.b16 %v94
  %v596 = vunpack.c.l.b16 %v95
  %v597 = vunpack.c.l.b16 %v96
  %v598 = vunpack.c.l.b16 %v97
  %v599 = vunpack.c.l.b16 %v98
  %v600 = vunpack.c.l.b16 %v99
  %v601 = vunpack.c.l.b16 %v100
  %v602 = vunpack.c.l.b16 %v101
  %v603 = vunpack.c.l.b16 %v102
  %v604 = vunpack.c.l.b16 %v103
  %v605 = vunpack.c.l.b16 %v104
  %v606 = vunpack.c.l.b16 %v105
  %v607 = vunpack.c.l.b16 %v106
  %v608 = vunpack.c.l.b16 %v107
  %v609 = vunpack.c.l.b16 %v108
  %v610 = vunpack.c.l.b16 %v109
  %v611 = vunpack.c.l.b16 %v110
  %v612 = vunpack.c.l.b16 %v111
  %v613 = vunpack.c.l.b16 %v112
  %v614 = vunpack.c.l.b16 %v113
  %v615 = vunpack.c.l.b16 %v114
  %v616 = vunpack.c.l.b16 %v115
  %v617 = vunpack.c.l.b16 %v116
  %v618 = vunpack.c.l.b16 %v117
  %v619 = vunpack.c.l.b16 %v118
  %v620 = vunpack.c.l.b16 %v119
  %v621 = vunpack.c.l.b16 %v120
  %v622 = vunpack.c.l.b16 %v121
  %v623 = vunpack.c.l.b16 %v122
  %v624 = vunpack.c.l.b16 %v123
  %v625 = vunpack.c.l.b16 %v124
  %v626 = vunpack.c.l.b16 %v125
  %v627 = vunpack.c.l.b16 %v126
  %v628 = vunpack.c.l.b16 %v127
  %v629 = vunpack.c.l.b16 %v128
  %v630 = vunpack.c.l.b16 %v129
  %v631 = vunpack.c.l.b16 %v130
  %v632 = vunpack.c.l.b16 %v131
  %v633 = vunpack.c.l.b16 %v132
  %v634 = vunpack.c.l.b16 %v133
  %v635 = vunpack.c.l.b16 %v134
  %v636 = vunpack.c.l.b16 %v135
  %v637 = vunpack.c.l.b16 %v136
  %v638 = vunpack.c.l.b16 %v137
  %v639 = vunpack.c.l.b16 %v138
  %v640 = vunpack.c.l.b16 %v139
  %v641 = vunpack.c.l.b16 %v140
  %v642 = vunpack.c.l.b16 %v141
  %v643 = vunpack.c.l.b16 %v142
  %v644 = vunpack.c.l.b16 %v143
  %v645 = vunpack.c.l.b16 %v144
  %v646 = vunpack.c.l.b16 %v145
  %v647 = vunpack.c.l.b16 %v146
  %v648 = vunpack.c.l.b16 %v147
  %v649 = vunpack.c.l.b16 %v148
  %v650 = vunpack.c.l.b16 %v149
  %v651 = vunpack.c.l.b16 %v150
  %v652 = vunpack.c.l.b16 %v151
  %v653 = vunpack.c.l.b16 %v152
  %v654 = vunpack.c.l.b16 %v153
  %v655 = vunpack.c.l.b16 %v154
  %v656 = vunpack.c.l.b16 %v155
  %v657 = vunpack.c.l.b16 %v156
  %v658 = vunpack.c.l.b16 %v157
  %v659 = vunpack.c.l.b16 %v158
  %v660 = vunpack.c.l.b16 %v159
  %v661 = vunpack.c.l.b16 %v160
  %v662 = vunpack.c.l.b16 %v161
  %v663 = vunpack.c.l.b16 %v162
  %v664 = vunpack.c.l.b16 %v163
  %v665 = vunpack.c.l.b16 %v164
  %v666 = vunpack.c.l.b16 %v165
  %v667 = vunpack.c.l.b16 %v166
  %v668 = vunpack.c.l.b16 %v167
  %v669 = vunpack.c.l.b16 %v168
  %v670 = vunpack.c.l.b16 %v169
  %v671 = vunpack.c.l.b16 %v170
  %v672 = vunpack.c.l.b16 %v171
  %v673 = vunpack.c.l.b16 %v172
  %v674 = vunpack.c.l.b16 %v173
  %v675 = vunpack.c.l.b16 %v174
  %v676 = vunpack.c.l.b16 %v175
  %v677 = vunpack.c.l.b16 %v176
  %v678 = vunpack.c.l.b16 %v177
  %v679 = vunpack.c.l.b16 %v178
  %v680 = vunpack.c.l.b16 %v179
  %v681 = vunpack.c.l.b16 %v180
  %v682 = vunpack.c.l.b16 %v181
  %v683 = vunpack.c.l.b16 %v182
  %v684 = vunpack.c.l.b16 %v183
  %v685 = vunpack.c.l.b16 %v184
  %v686 = vunpack.c.l.b16 %v185
  %v687 = vunpack.c.l.b16 %v186
  %v688 = vunpack.c.l.b16 %v187
  %v689 = vunpack.c.l.b16 %v188
  %v690 = vunpack.c.l.b16 %v189
  %v691 = vunpack.c.l.b16 %v190
  %v692 = vunpack.c.l.b16 %v191
  %v693 = vunpack.c.l.b16 %v192
  %v694 = vunpack.c.l.b16 %v193
  %v695 = vunpack.c.l.b16 %v194
  %v696 = vunpack.c.l.b16 %v195
  %v697 = vunpack.c.l.b16 %v196
  %v698 = vunpack.c.l.b16 %v197
  %v699 = vunpack.c.l.b16 %v198
  %v700 = vunpack.c.l.b16 %v199
  %v701 = vunpack.c.l.b16 %v200
  %v702 = vunpack.c.l.b16 %v201
  %v703 = vunpack.c.l.b16 %v202
  %v704 = vunpack.c.l.b16 %v203
  %v705 = vunpack.c.l.b16 %v204
  %v706 = vunpack.c.l.b16 %v205
  %v707 = vunpack.c.l.b16 %v206
  %v708 = vunpack.c.l.b16 %v207
  %v709 = vunpack.c.l.b16 %v208
  %v710 = vunpack.c.l.b16 %v209
  %v711 = vunpack.c.l.b16 %v210
  %v712 = vunpack.c.l.b16 %v211
  %v713 = vunpack.c.l.b16 %v212
  %v714 = vunpack.c.l.b16 %v213
  %v715 = vunpack.c.l.b16 %v214
  %v716 = vunpack.c.l.b16 %v215
  %v717 = vunpack.c.l.b16 %v216
  %v718 = vunpack.c.l.b16 %v217
  %v719 = vunpack.c.l.b16 %v218
  %v720 = vunpack.c.l.b16 %v219
  %v721 = vunpack.c.l.b16 %v220
  %v722 = vunpack.c.l.b16 %v221
  %v723 = vunpack.c.l.b16 %v222
  %v724 = vunpack.c.l.b16 %v223
  %v725 = vunpack.c.l.b16 %v224
  %v726 = vunpack.c.l.b16 %v225
  %v727 = vunpack.c.l.b16 %v226
  %v728 = vunpack.c.l.b16 %v227
  %v729 = vunpack.c.l.b16 %v228
  %v730 = vunpack.c.l.b16 %v229
  %v731 = vunpack.c.l.b16 %v230
  %v732 = vunpack.c.l.b16 %v231
  %v733 = vunpack.c.l.b16 %v232
  %v734 = vunpack.c.l.b16 %v233
  %v735 = vunpack.c.l.b16 %v234
  %v736 = vunpack.c.l.b16 %v235
  %v737 = vunpack.c.l.b16 %v236
  %v738 = vunpack.c.l.b16 %v237
  %v739 = vunpack.c.l.b16 %v238
  %v740 = vunpack.c.l.b16 %v239
  %v741 = vunpack.c.l.b16 %v240
  %v742 = vunpack.c.l.b16 %v241
  %v743 = vunpack.c.l.b16 %v242
  %v744 = vunpack.c.l.b16 %v243
  %v745 = vunpack.c.l.b16 %v244
  %v746 = vunpack.c.l.b16 %v245
  %v747 = vunpack.c.l.b16 %v246
  %v748 = vunpack.c.l.b16 %v247
  %v749 = vunpack.c.l.b16 %v248
  %v750 = vunpack.c.l.b16 %v249
  %v751 = vunpack.c.l.b16 %v250
  %v752 = vunpack.c.l.b16 %v251
  %v753 = vunpack.c.l.b16 %v252
  %v754 = vunpack.c.l.b16 %v253
  %v755 = vunpack.c.l.b16 %v254
  %v756 = vunpack.c.l.b16 %v255
  %v757 = vunpack.c.l.b16 %v256
  %v758 = vunpack.c.l.b16 %v257
  %v759 = vunpack.c.l.b16 %v258
  %v760 = vunpack.c.l.b16 %v259
  %v761 = vpack.c.b16 %v538, %v537
  %v762 = vpack.c.b16 %v540, %v539
  %v763 = vpack.c.b16 %v542, %v541
  %v764 = vpack.c.b16 %v544, %v543
  %v765 = vpack.c.b16 %v546, %v545
  %v766 = vpack.c.b16 %v548, %v547
  %v767 = vpack.c.b16 %v550, %v549
  %v768 = vpack.c.b16 %v552, %v551
  %v769 = vpack.c.b16 %v554, %v553
  %v770 = vpack.c.b16 %v556, %v555
  %v771 = vpack.c.b16 %v558, %v557
  %v772 = vpack.c.b16 %v560, %v559
  %v773 = vpack.c.b16 %v562, %v561
  %v774 = vpack.c.b16 %v564, %v563
  %v775 = vpack.c.b16 %v566, %v565
  %v776 = vpack.c.b16 %v568, %v567
  %v777 = vpack.c.b16 %v570, %v569
  %v778 = vpack.c.b16 %v572, %v571
  %v779 = vpack.c.b16 %v574, %v573
  %v780 = vpack.c.b16 %v576, %v575
  %v781 = vpack.c.b16 %v578, %v577
  %v782 = vpack.c.b16 %v580, %v579
  %v783 = vpack.c.b16 %v582, %v581
  %v784 = vpack.c.b16 %v584, %v583
  %v785 = vpack.c.b16 %v586, %v585
  %v786 = vpack.c.b16 %v588, %v587
  %v787 = vpack.c.b16 %v590, %v589
  %v788 = vpack.c.b16 %v592, %v591
  %v789 = vpack.c.b16 %v594, %v593
  %v790 = vpack.c.b16 %v596, %v595
  %v791 = vpack.c.b16 %v598, %v597
  %v792 = vpack.c.b16 %v600, %v599
  %v793 = vpack.c.b16 %v602, %v601
  %v794 = vpack.c.b16 %v604, %v603
  %v795 = vpack.c.b16 %v606, %v605
  %v796 = vpack.c.b16 %v608, %v607
  %v797 = vpack.c.b16 %v610, %v609
  %v798 = vpack.c.b16 %v612, %v611
  %v799 = vpack.c.b16 %v614, %v613
  %v800 = vpack.c.b16 %v616, %v615
  %v801 = vpack.c.b16 %v618, %v617
  %v802 = vpack.c.b16 %v620, %v619
  %v803 = vpack.c.b16 %v622, %v621
  %v804 = vpack.c.b16 %v624, %v623
  %v805 = vpack.c.b16 %v626, %v625
  %v806 = vpack.c.b16 %v628, %v627
  %v807 = vpack.c.b16 %v630, %v629
  %v808 = vpack.c.b16 %v632, %v631
  %v809 = vpack.c.b16 %v634, %v633
  %v810 = vpack.c.b16 %v636, %v635
  %v811 = vpack.c.b16 %v638, %v637
  %v812 = vpack.c.b16 %v640, %v639
  %v813 = vpack.c.b16 %v642, %v641
  %v814 = vpack.c.b16 %v644, %v643
  %v815 = vpack.c.b16 %v646, %v645
  %v816 = vpack.c.b16 %v648, %v647
  %v817 = vpack.c.b16 %v650, %v649
  %v818 = vpack.c.b16 %v652, %v651
  %v819 = vpack.c.b16 %v654, %v653
  %v820 = vpack.c.b16 %v656, %v655
  %v821 = vpack.c.b16 %v658, %v657
  %v822 = vpack.c.b16 %v660, %v659
  %v823 = vpack.c.b16 %v662, %v661
  %v824 = vpack.c.b16 %v664, %v663
  %v825 = vpack.c.b16 %v666, %v665
  %v826 = vpack.c.b16 %v668, %v667
  %v827 = vpack.c.b16 %v670, %v669
  %v828 = vpack.c.b16 %v672, %v671
  %v829 = vpack.c.b16 %v674, %v673
  %v830 = vpack.c.b16 %v676, %v675
  %v831 = vpack.c.b16 %v678, %v677
  %v832 = vpack.c.b16 %v680, %v679
  %v833 = vpack.c.b16 %v682, %v681
  %v834 = vpack.c.b16 %v684, %v683
  %v835 = vpack.c.b16 %v686, %v685
  %v836 = vpack.c.b16 %v688, %v687
  %v837 = vpack.c.b16 %v690, %v689
  %v838 = vpack.c.b16 %v692, %v691
  %v839 = vpack.c.b16 %v694, %v693
  %v840 = vpack.c.b16 %v696, %v695
  %v841 = vpack.c.b16 %v698, %v697
  %v842 = vpack.c.b16 %v700, %v699
  %v843 = vpack.c.b16 %v702, %v701
  %v844 = vpack.c.b16 %v704, %v703
  %v845 = vpack.c.b16 %v706, %v705
  %v846 = vpack.c.b16 %v708, %v707
  %v847 = vpack.c.b16 %v710, %v709
  %v848 = vpack.c.b16 %v712, %v711
  %v849 = vpack.c.b16 %v714, %v713
  %v850 = vpack.c.b16 %v716, %v715
  %v851 = vpack.c.b16 %v718, %v717
  %v852 = vpack.c.b16 %v720, %v719
  %v853 = vpack.c.b16 %v722, %v721
  %v854 = vpack.c.b16 %v724, %v723
  %v855 = vpack.c.b16 %v726, %v725
  %v856 = vpack.c.b16 %v728, %v727
  %v857 = vpack.c.b16 %v730, %v729
  %v858 = vpack.c.b16 %v732, %v731
  %v859 = vpack.c.b16 %v734, %v733
  %v860 = vpack.c.b16 %v736, %v735
  %v861 = vpack.c.b16 %v738, %v737
  %v862 = vpack.c.b16 %v740, %v739
  %v863 = vpack.c.b16 %v742, %v741
  %v864 = vpack.c.b16 %v744, %v743
  %v865 = vpack.c.b16 %v746, %v745
  %v866 = vpack.c.b16 %v748, %v747
  %v867 = vpack.c.b16 %v750, %v749
  %v868 = vpack.c.b16 %v752, %v751
  %v869 = vpack.c.b16 %v754, %v753
  %v870 = vpack.c.b16 %v756, %v755
  %v871 = vpack.c.b16 %v758, %v757
  %v872 = vpack.c.b16 %v760, %v759
  %985 = vmatpush.bf16.msra.mxu0 %v768
  %986 = vmatpush.bf16.msra.mxu0 %v767
  %987 = vmatpush.bf16.msra.mxu0 %v766
  %988 = vmatpush.bf16.msra.mxu0 %v765
  %989 = vmatpush.bf16.msra.mxu0 %v764
  %990 = vmatpush.bf16.msra.mxu0 %v763
  %991 = vmatpush.bf16.msra.mxu0 %v762
  %992 = vmatpush.bf16.msra.mxu0 %v761
  %993 = vmatmul.bf16.gmra.mxu0 %v285
  %v994 = vpop.f32.mrf.mxu0
  %v995 = vadd.f32 %v262, %v994
  %v996 = vpop.f32.mrf.mxu0
  %997 = vdwg.mxu0
  %998 = vmatpush.bf16.msra.mxu0 %v776
  %999 = vmatpush.bf16.msra.mxu0 %v775
  %1000 = vmatpush.bf16.msra.mxu0 %v774
  %1001 = vmatpush.bf16.msra.mxu0 %v773
  %1002 = vmatpush.bf16.msra.mxu0 %v772
  %1003 = vmatpush.bf16.msra.mxu0 %v771
  %1004 = vmatpush.bf16.msra.mxu0 %v770
  %1005 = vmatpush.bf16.msra.mxu0 %v769
  %1006 = vmatmul.bf16.gmra.mxu0 %v286
  %v1007 = vpop.f32.mrf.mxu0
  %v1008 = vadd.f32 %v995, %v1007
  %v1009 = vpop.f32.mrf.mxu0
  %1010 = vdwg.mxu0
  %1011 = vmatpush.bf16.msra.mxu0 %v784
  %1012 = vmatpush.bf16.msra.mxu0 %v783
  %1013 = vmatpush.bf16.msra.mxu0 %v782
  %1014 = vmatpush.bf16.msra.mxu0 %v781
  %1015 = vmatpush.bf16.msra.mxu0 %v780
  %1016 = vmatpush.bf16.msra.mxu0 %v779
  %1017 = vmatpush.bf16.msra.mxu0 %v778
  %1018 = vmatpush.bf16.msra.mxu0 %v777
  %1019 = vmatmul.bf16.gmra.mxu0 %v287
  %v1020 = vpop.f32.mrf.mxu0
  %v1021 = vadd.f32 %v1008, %v1020
  %v1022 = vpop.f32.mrf.mxu0
  %1023 = vdwg.mxu0
  %1024 = vmatpush.bf16.msra.mxu0 %v792
  %1025 = vmatpush.bf16.msra.mxu0 %v791
  %1026 = vmatpush.bf16.msra.mxu0 %v790
  %1027 = vmatpush.bf16.msra.mxu0 %v789
  %1028 = vmatpush.bf16.msra.mxu0 %v788
  %1029 = vmatpush.bf16.msra.mxu0 %v787
  %1030 = vmatpush.bf16.msra.mxu0 %v786
  %1031 = vmatpush.bf16.msra.mxu0 %v785
  %1032 = vmatmul.bf16.gmra.mxu0 %v288
  %v1033 = vpop.f32.mrf.mxu0
  %v1034 = vadd.f32 %v1021, %v1033
  %v1035 = vpop.f32.mrf.mxu0
  %1036 = vdwg.mxu0
  %1037 = vmatpush.bf16.msra.mxu0 %v800
  %1038 = vmatpush.bf16.msra.mxu0 %v799
  %1039 = vmatpush.bf16.msra.mxu0 %v798
  %1040 = vmatpush.bf16.msra.mxu0 %v797
  %1041 = vmatpush.bf16.msra.mxu0 %v796
  %1042 = vmatpush.bf16.msra.mxu0 %v795
  %1043 = vmatpush.bf16.msra.mxu0 %v794
  %1044 = vmatpush.bf16.msra.mxu0 %v793
  %1045 = vmatmul.bf16.gmra.mxu0 %v289
  %v1046 = vpop.f32.mrf.mxu0
  %v1047 = vadd.f32 %v1034, %v1046
  %v1048 = vpop.f32.mrf.mxu0
  %1049 = vdwg.mxu0
  %1050 = vmatpush.bf16.msra.mxu0 %v808
  %1051 = vmatpush.bf16.msra.mxu0 %v807
  %1052 = vmatpush.bf16.msra.mxu0 %v806
  %1053 = vmatpush.bf16.msra.mxu0 %v805
  %1054 = vmatpush.bf16.msra.mxu0 %v804
  %1055 = vmatpush.bf16.msra.mxu0 %v803
  %1056 = vmatpush.bf16.msra.mxu0 %v802
  %1057 = vmatpush.bf16.msra.mxu0 %v801
  %1058 = vmatmul.bf16.gmra.mxu0 %v290
  %v1059 = vpop.f32.mrf.mxu0
  %v1060 = vadd.f32 %v1047, %v1059
  %v1061 = vpop.f32.mrf.mxu0
  %1062 = vdwg.mxu0
  %1063 = vmatpush.bf16.msra.mxu0 %v816
  %1064 = vmatpush.bf16.msra.mxu0 %v815
  %1065 = vmatpush.bf16.msra.mxu0 %v814
  %1066 = vmatpush.bf16.msra.mxu0 %v813
  %1067 = vmatpush.bf16.msra.mxu0 %v812
  %1068 = vmatpush.bf16.msra.mxu0 %v811
  %1069 = vmatpush.bf16.msra.mxu0 %v810
  %1070 = vmatpush.bf16.msra.mxu0 %v809
  %1071 = vmatmul.bf16.gmra.mxu0 %v291
  %v1072 = vpop.f32.mrf.mxu0
  %v1073 = vadd.f32 %v1060, %v1072
  %v1074 = vpop.f32.mrf.mxu0
  %1075 = vdwg.mxu0
  %1076 = vmatpush.bf16.msra.mxu0 %v824
  %1077 = vmatpush.bf16.msra.mxu0 %v823
  %1078 = vmatpush.bf16.msra.mxu0 %v822
  %1079 = vmatpush.bf16.msra.mxu0 %v821
  %1080 = vmatpush.bf16.msra.mxu0 %v820
  %1081 = vmatpush.bf16.msra.mxu0 %v819
  %1082 = vmatpush.bf16.msra.mxu0 %v818
  %1083 = vmatpush.bf16.msra.mxu0 %v817
  %1084 = vmatmul.bf16.gmra.mxu0 %v292
  %v1085 = vpop.f32.mrf.mxu0
  %v1086 = vadd.f32 %v1073, %v1085
  %v1087 = vpop.f32.mrf.mxu0
  %1088 = vdwg.mxu0
  %1089 = vmatpush.bf16.msra.mxu0 %v832
  %1090 = vmatpush.bf16.msra.mxu0 %v831
  %1091 = vmatpush.bf16.msra.mxu0 %v830
  %1092 = vmatpush.bf16.msra.mxu0 %v829
  %1093 = vmatpush.bf16.msra.mxu0 %v828
  %1094 = vmatpush.bf16.msra.mxu0 %v827
  %1095 = vmatpush.bf16.msra.mxu0 %v826
  %1096 = vmatpush.bf16.msra.mxu0 %v825
  %1097 = vmatmul.bf16.gmra.mxu0 %v293
  %v1098 = vpop.f32.mrf.mxu0
  %v1099 = vadd.f32 %v1086, %v1098
  %v1100 = vpop.f32.mrf.mxu0
  %1101 = vdwg.mxu0
  %1102 = vmatpush.bf16.msra.mxu0 %v840
  %1103 = vmatpush.bf16.msra.mxu0 %v839
  %1104 = vmatpush.bf16.msra.mxu0 %v838
  %1105 = vmatpush.bf16.msra.mxu0 %v837
  %1106 = vmatpush.bf16.msra.mxu0 %v836
  %1107 = vmatpush.bf16.msra.mxu0 %v835
  %1108 = vmatpush.bf16.msra.mxu0 %v834
  %1109 = vmatpush.bf16.msra.mxu0 %v833
  %1110 = vmatmul.bf16.gmra.mxu0 %v294
  %v1111 = vpop.f32.mrf.mxu0
  %v1112 = vadd.f32 %v1099, %v1111
  %v1113 = vpop.f32.mrf.mxu0
  %1114 = vdwg.mxu0
  %1115 = vmatpush.bf16.msra.mxu0 %v848
  %1116 = vmatpush.bf16.msra.mxu0 %v847
  %1117 = vmatpush.bf16.msra.mxu0 %v846
  %1118 = vmatpush.bf16.msra.mxu0 %v845
  %1119 = vmatpush.bf16.msra.mxu0 %v844
  %1120 = vmatpush.bf16.msra.mxu0 %v843
  %1121 = vmatpush.bf16.msra.mxu0 %v842
  %1122 = vmatpush.bf16.msra.mxu0 %v841
  %1123 = vmatmul.bf16.gmra.mxu0 %v295
  %v1124 = vpop.f32.mrf.mxu0
  %v1125 = vadd.f32 %v1112, %v1124
  %v1126 = vpop.f32.mrf.mxu0
  %1127 = vdwg.mxu0
  %1128 = vmatpush.bf16.msra.mxu0 %v856
  %1129 = vmatpush.bf16.msra.mxu0 %v855
  %1130 = vmatpush.bf16.msra.mxu0 %v854
  %1131 = vmatpush.bf16.msra.mxu0 %v853
  %1132 = vmatpush.bf16.msra.mxu0 %v852
  %1133 = vmatpush.bf16.msra.mxu0 %v851
  %1134 = vmatpush.bf16.msra.mxu0 %v850
  %1135 = vmatpush.bf16.msra.mxu0 %v849
  %1136 = vmatmul.bf16.gmra.mxu0 %v296
  %v1137 = vpop.f32.mrf.mxu0
  %v1138 = vadd.f32 %v1125, %v1137
  %v1139 = vpop.f32.mrf.mxu0
  %1140 = vdwg.mxu0
  %1141 = vmatpush.bf16.msra.mxu0 %v864
  %1142 = vmatpush.bf16.msra.mxu0 %v863
  %1143 = vmatpush.bf16.msra.mxu0 %v862
  %1144 = vmatpush.bf16.msra.mxu0 %v861
  %1145 = vmatpush.bf16.msra.mxu0 %v860
  %1146 = vmatpush.bf16.msra.mxu0 %v859
  %1147 = vmatpush.bf16.msra.mxu0 %v858
  %1148 = vmatpush.bf16.msra.mxu0 %v857
  %1149 = vmatmul.bf16.gmra.mxu0 %v297
  %v1150 = vpop.f32.mrf.mxu0
  %v1151 = vadd.f32 %v1138, %v1150
  %v1152 = vpop.f32.mrf.mxu0
  %1153 = vdwg.mxu0
  %1154 = vmatpush.bf16.msra.mxu0 %v872
  %1155 = vmatpush.bf16.msra.mxu0 %v871
  %1156 = vmatpush.bf16.msra.mxu0 %v870
  %1157 = vmatpush.bf16.msra.mxu0 %v869
  %1158 = vmatpush.bf16.msra.mxu0 %v868
  %1159 = vmatpush.bf16.msra.mxu0 %v867
  %1160 = vmatpush.bf16.msra.mxu0 %v866
  %1161 = vmatpush.bf16.msra.mxu0 %v865
  %1162 = vmatmul.bf16.gmra.mxu0 %v298
  %v1163 = vpop.f32.mrf.mxu0
  %v1164 = vadd.f32 %v1151, %v1163
  %v1165 = vpop.f32.mrf.mxu0
  %1166 = vdwg.mxu0
  %v1167 = vmax.f32 %v1164, 0.0
  %v1168 = vld [vmem:[%s5] sm:$0x1]
  %v1170 = vperm.slane %v1168, 0
  %v1172 = vadd.f32 %v1167, %v1170
  %v1173 = vpack.c.bf16 %v1172, %v1172
  %v1174 = vld [vmem:[%s3] sm:$0xf]
  %v1175 = vld [vmem:[%s3 + $0x4] sm:$0xf]
  %v1176 = vld [vmem:[%s3 + $0x8] sm:$0xf]
  %v1177 = vld [vmem:[%s3 + $0xc] sm:$0xf]
  %v1178 = vld [vmem:[%s3 + $0x10] sm:$0xf]
  %v1179 = vld [vmem:[%s3 + $0x14] sm:$0xf]
  %v1180 = vld [vmem:[%s3 + $0x18] sm:$0xf]
  %v1181 = vld [vmem:[%s3 + $0x1c] sm:$0xf]
  %v1182 = vld [vmem:[%s3 + $0x20] sm:$0xf]
  %v1183 = vld [vmem:[%s3 + $0x24] sm:$0xf]
  %v1184 = vld [vmem:[%s3 + $0x28] sm:$0xf]
  %v1185 = vld [vmem:[%s3 + $0x2c] sm:$0xf]
  %v1186 = vld [vmem:[%s3 + $0x30] sm:$0xf]
  %v1187 = vld [vmem:[%s3 + $0x34] sm:$0xf]
  %v1188 = vld [vmem:[%s3 + $0x38] sm:$0xf]
  %v1189 = vld [vmem:[%s3 + $0x3c] sm:$0xf]
  %v1190 = vld [vmem:[%s4] sm:$0x1]
  %v1192 = vperm.slane %v1190, 0
  %v1210 = vunpack.c.l.b16 %v1174
  %v1211 = vunpack.c.l.b16 %v1175
  %v1212 = vunpack.c.l.b16 %v1176
  %v1213 = vunpack.c.l.b16 %v1177
  %v1214 = vunpack.c.l.b16 %v1178
  %v1215 = vunpack.c.l.b16 %v1179
  %v1216 = vunpack.c.l.b16 %v1180
  %v1217 = vunpack.c.l.b16 %v1181
  %v1218 = vunpack.c.l.b16 %v1182
  %v1219 = vunpack.c.l.b16 %v1183
  %v1220 = vunpack.c.l.b16 %v1184
  %v1221 = vunpack.c.l.b16 %v1185
  %v1222 = vunpack.c.l.b16 %v1186
  %v1223 = vunpack.c.l.b16 %v1187
  %v1224 = vunpack.c.l.b16 %v1188
  %v1225 = vunpack.c.l.b16 %v1189
  %v1226 = vpack.c.b16 %v1211, %v1210
  %v1227 = vpack.c.b16 %v1213, %v1212
  %v1228 = vpack.c.b16 %v1215, %v1214
  %v1229 = vpack.c.b16 %v1217, %v1216
  %v1230 = vpack.c.b16 %v1219, %v1218
  %v1231 = vpack.c.b16 %v1221, %v1220
  %v1232 = vpack.c.b16 %v1223, %v1222
  %v1233 = vpack.c.b16 %v1225, %v1224
  %1242 = vmatpush.bf16.msra.mxu0 %v1233
  %1243 = vmatpush.bf16.msra.mxu0 %v1232
  %1244 = vmatpush.bf16.msra.mxu0 %v1231
  %1245 = vmatpush.bf16.msra.mxu0 %v1230
  %1246 = vmatpush.bf16.msra.mxu0 %v1229
  %1247 = vmatpush.bf16.msra.mxu0 %v1228
  %1248 = vmatpush.bf16.msra.mxu0 %v1227
  %1249 = vmatpush.bf16.msra.mxu0 %v1226
  %1250 = vmatmul.bf16.gmra.mxu0 %v1173
  %v1251 = vpop.f32.mrf.mxu0
  %v1252 = vadd.f32 %v1192, %v1251
  %v1253 = vpop.f32.mrf.mxu0
  %1254 = vdwg.mxu0
  %v1255 = vmax.f32 %v1252, 0.0
  %v1256 = vadd.f32 %v1255, %v1170
  %v1257 = vpack.c.bf16 %v1256, %v1256
  %v1258 = vld [vmem:[%s6] sm:$0xf]
  %v1259 = vld [vmem:[%s6 + $0x4] sm:$0xf]
  %v1260 = vld [vmem:[%s6 + $0x8] sm:$0xf]
  %v1261 = vld [vmem:[%s6 + $0xc] sm:$0xf]
  %v1262 = vld [vmem:[%s6 + $0x10] sm:$0xf]
  %v1263 = vld [vmem:[%s6 + $0x14] sm:$0xf]
  %v1264 = vld [vmem:[%s6 + $0x18] sm:$0xf]
  %v1265 = vld [vmem:[%s6 + $0x1c] sm:$0xf]
  %v1266 = vld [vmem:[%s6 + $0x20] sm:$0xf]
  %v1267 = vld [vmem:[%s6 + $0x24] sm:$0xf]
  %v1268 = vld [vmem:[%s6 + $0x28] sm:$0xf]
  %v1269 = vld [vmem:[%s6 + $0x2c] sm:$0xf]
  %v1270 = vld [vmem:[%s6 + $0x30] sm:$0xf]
  %v1271 = vld [vmem:[%s6 + $0x34] sm:$0xf]
  %v1272 = vld [vmem:[%s6 + $0x38] sm:$0xf]
  %v1273 = vld [vmem:[%s6 + $0x3c] sm:$0xf]
  %v1274 = vld [vmem:[%s7] sm:$0x1]
  %v1276 = vperm.slane %v1274, 0
  %v1294 = vunpack.c.l.b16 %v1258
  %v1295 = vunpack.c.l.b16 %v1259
  %v1296 = vunpack.c.l.b16 %v1260
  %v1297 = vunpack.c.l.b16 %v1261
  %v1298 = vunpack.c.l.b16 %v1262
  %v1299 = vunpack.c.l.b16 %v1263
  %v1300 = vunpack.c.l.b16 %v1264
  %v1301 = vunpack.c.l.b16 %v1265
  %v1302 = vunpack.c.l.b16 %v1266
  %v1303 = vunpack.c.l.b16 %v1267
  %v1304 = vunpack.c.l.b16 %v1268
  %v1305 = vunpack.c.l.b16 %v1269
  %v1306 = vunpack.c.l.b16 %v1270
  %v1307 = vunpack.c.l.b16 %v1271
  %v1308 = vunpack.c.l.b16 %v1272
  %v1309 = vunpack.c.l.b16 %v1273
  %v1310 = vpack.c.b16 %v1295, %v1294
  %v1311 = vpack.c.b16 %v1297, %v1296
  %v1312 = vpack.c.b16 %v1299, %v1298
  %v1313 = vpack.c.b16 %v1301, %v1300
  %v1314 = vpack.c.b16 %v1303, %v1302
  %v1315 = vpack.c.b16 %v1305, %v1304
  %v1316 = vpack.c.b16 %v1307, %v1306
  %v1317 = vpack.c.b16 %v1309, %v1308
  %1326 = vmatpush.bf16.msra.mxu0 %v1317
  %1327 = vmatpush.bf16.msra.mxu0 %v1316
  %1328 = vmatpush.bf16.msra.mxu0 %v1315
  %1329 = vmatpush.bf16.msra.mxu0 %v1314
  %1330 = vmatpush.bf16.msra.mxu0 %v1313
  %1331 = vmatpush.bf16.msra.mxu0 %v1312
  %1332 = vmatpush.bf16.msra.mxu0 %v1311
  %1333 = vmatpush.bf16.msra.mxu0 %v1310
  %1334 = vmatmul.bf16.gmra.mxu0 %v1257
  %v1335 = vpop.f32.mrf.mxu0
  %v1336 = vadd.f32 %v1276, %v1335
  %v1337 = vpop.f32.mrf.mxu0
  %1338 = vdwg.mxu0
  %1339 = vst [vmem:[%s8] sm:$0xff] %v1336
  // Predicated region
  $region34: #{cnn_model_2_forward.5} parent=0 // pred_check
    _
  $region35: #{cnn_model_2_forward.5} parent=0 // pred_check_branch
    %1341 = sbr.rel (0) target = $region37
  $region36: #{cnn_model_2_forward.5} parent=0 // pred_region
    _
  $region37: #{cnn_model_2_forward.5} parent=0 // pred_fallthru
    _
  // Predicated region
  $region38: #{cnn_model_2_forward.5} parent=0 // pred_check
    _
  $region39: #{cnn_model_2_forward.5} parent=0 // pred_check_branch
    %1343 = sbr.rel (0) target = $region41
  $region40: #{cnn_model_2_forward.5} parent=0 // pred_region
    _
  $region41: #{cnn_model_2_forward.5} parent=0 // pred_fallthru
    _

</llo_original>
